<compile_context>
chip_gen: v6e
topology: v6e:2x2x1
jax: 0.10.0
libtpu: 0.0.40
codegen_flags: <defaults>
</compile_context>

<pallas_src>
import functools

import jax
import jax.numpy as jnp
from jax.experimental import pallas as pl
from jax.experimental.pallas import tpu as pltpu


# ----------------------------------------------------------------------------
# Fused kernel: 3x3 conv (single im2col dot) + bias + ReLU + fused 1x1 heads.
# One grid step == NB images; all intermediates stay in VMEM / vregs.
# ----------------------------------------------------------------------------
def _shell_fused_kernel(xp_ref, wb_ref, bb_ref, wh_ref, bh_ref, o_ref, cols_ref,
                        *, NB, H, W, C_in, C_mid):
    # xp_ref  : (NB, H+2, W+2, C_in) bf16  padded NHWC images (cast once in wrapper)
    # wb_ref  : (9*C_in, C_mid)      bf16  base conv weight, rows ordered (dy, dx, c)
    # bb_ref  : (1, C_mid)           f32   base bias
    # wh_ref  : (C_mid, C_pad)       bf16  concatenated 1x1 head weights, zero-padded to 128 lanes
    # bh_ref  : (1, C_pad)           f32   concatenated head biases, zero-padded
    # o_ref   : (NB*H*W, C_pad)      f32   concatenated (padded) head outputs
    # cols_ref: VMEM scratch (NB, H, W, 9*C_in) bf16 -- im2col operand, never in HBM
    xp = xp_ref[...]

    # In-kernel im2col: one lane-slice store per 3x3 tap (no per-tap matmul).
    # TODO(synk): for large H*W use the flattened (H+2,(W+2)*C_in) layout so dx
    # shifts become pltpu.roll / lane slices instead of sublane-offset slices.
    for dy in range(3):
        for dx in range(3):
            t = dy * 3 + dx
            cols_ref[:, :, :, t * C_in:(t + 1) * C_in] = xp[:, dy:dy + H, dx:dx + W, :]

    # Single K=9*C_in MXU dot, f32 accumulation (replaces 9 K=C_in dots + 8 VPU adds).
    cols = cols_ref[...].reshape(NB * H * W, 9 * C_in)
    acc = jnp.dot(cols, wb_ref[...], preferred_element_type=jnp.float32)

    # Bias + ReLU in f32 (VPU-native on v5e as well); no feat scratch round trip.
    feat = jnp.maximum(acc + bb_ref[...], 0.0)

    # Fused heads: one (M, C_mid) x (C_mid, C_pad) dot; lane-dense unmasked store.
    heads = jnp.dot(feat.astype(jnp.bfloat16), wh_ref[...],
                    preferred_element_type=jnp.float32) + bh_ref[...]
    o_ref[...] = heads.astype(o_ref.dtype)


# ----------------------------------------------------------------------------
# Shell forward: one fused Pallas call, then cheap slicing back to per-head NCHW.
# ----------------------------------------------------------------------------
def shell_forward(x_nchw, params, *, rows_per_step=1024):
    n, c_in, h, w = x_nchw.shape
    base_w = params["base_w"]                           # (C_mid, C_in, 3, 3) -- PyTorch layout
    c_mid = base_w.shape[0]
    head_cs = [int(hw.shape[0]) for hw, _ in params["heads"]]
    c_heads = sum(head_cs)
    c_pad = ((c_heads + 127) // 128) * 128              # lane-dense output width (>= 128)

    # Batch block: amortize the ~0.35us per-grid-step overhead by processing
    # several images (the whole batch at this size) per step.
    target = max(1, rows_per_step // (h * w))
    nb = 1
    for cand in range(1, n + 1):
        if n % cand == 0 and cand <= target:
            nb = cand

    # ---- layout plumbing (tiny XLA ops) -------------------------------------
    # TODO(synk): at scale, fold the SAME pad + NCHW->NHWC into the kernel load
    # path (zero-init VMEM tile + DMA interior) to avoid extra HBM round trips.
    x_nhwc = jnp.transpose(x_nchw, (0, 2, 3, 1)).astype(jnp.bfloat16)   # cast ONCE, not per tap
    xp = jnp.pad(x_nhwc, ((0, 0), (1, 1), (1, 1), (0, 0)))              # SAME padding for 3x3

    # PyTorch Conv2d (C_out, C_in, kH, kW) -> im2col weight (9*C_in, C_mid), rows = (dy, dx, c).
    wb = jnp.transpose(base_w, (2, 3, 1, 0)).reshape(9 * c_in, c_mid).astype(jnp.bfloat16)
    bb = params["base_b"].reshape(1, c_mid).astype(jnp.float32)
    # Concatenate the 1x1 heads into one weight and zero-pad to a full 128-lane store.
    wh = jnp.concatenate(
        [jnp.transpose(hw.reshape(hw.shape[0], c_mid), (1, 0)) for hw, _ in params["heads"]],
        axis=1)                                                          # (C_mid, C_heads)
    wh = jnp.pad(wh, ((0, 0), (0, c_pad - c_heads))).astype(jnp.bfloat16)
    bh = jnp.concatenate([b for _, b in params["heads"]])
    bh = jnp.pad(bh, (0, c_pad - c_heads)).reshape(1, c_pad).astype(jnp.float32)

    kernel = functools.partial(_shell_fused_kernel, NB=nb, H=h, W=w, C_in=c_in, C_mid=c_mid)
    # TODO(synk): for large H*W, add a row-tile grid axis (1-row halo via pl.Element)
    # marked "parallel" so both v7x TensorCores get work, and set vmem_limit_bytes.
    out = pl.pallas_call(
        kernel,
        out_shape=jax.ShapeDtypeStruct((n * h * w, c_pad), jnp.float32),
        grid_spec=pltpu.PrefetchScalarGridSpec(
            num_scalar_prefetch=0,
            grid=(n // nb,),                            # NB images per step
            in_specs=[
                pl.BlockSpec((nb, h + 2, w + 2, c_in), lambda b: (b, 0, 0, 0)),
                # Constant-index weight operands (fetched once by the pipeline).
                # TODO(synk): pipeline_mode=pl.Buffered(1) to drop their second VMEM buffer.
                pl.BlockSpec((9 * c_in, c_mid), lambda b: (0, 0)),
                pl.BlockSpec((1, c_mid), lambda b: (0, 0)),
                pl.BlockSpec((c_mid, c_pad), lambda b: (0, 0)),
                pl.BlockSpec((1, c_pad), lambda b: (0, 0)),
            ],
            out_specs=pl.BlockSpec((nb * h * w, c_pad), lambda b: (b, 0)),
            scratch_shapes=[pltpu.VMEM((nb, h, w, 9 * c_in), jnp.bfloat16)],
        ),
        compiler_params=pltpu.CompilerParams(dimension_semantics=("parallel",)),
    )(xp, wb, bb, wh, bh)

    # Slice the padded channel lanes back to per-head NCHW outputs (tiny tensors).
    y_nhwc = out.reshape(n, h, w, c_pad)
    head_outputs, start = [], 0
    for c_out in head_cs:
        head_outputs.append(jnp.transpose(y_nhwc[..., start:start + c_out], (0, 3, 1, 2)))
        start += c_out
    return head_outputs


# ----------------------------------------------------------------------------
# Deterministic synthetic parameters (PyTorch Conv2d weight layouts).
# ----------------------------------------------------------------------------
def make_params(c_in=4, c_mid=32, head_channels=(8, 16)):
    key = jax.random.PRNGKey(0)
    k_base, k_heads = jax.random.split(key)
    base_w = 0.05 * jax.random.normal(k_base, (c_mid, c_in, 3, 3), jnp.float32)
    base_b = 0.01 * jnp.arange(c_mid, dtype=jnp.float32)
    heads = []
    for i, c_out in enumerate(head_channels):
        kw = jax.random.fold_in(k_heads, i)
        hw = 0.05 * jax.random.normal(kw, (c_out, c_mid, 1, 1), jnp.float32)
        hb = 0.01 * jnp.arange(c_out, dtype=jnp.float32)
        heads.append((hw, hb))
    return {"base_w": base_w, "base_b": base_b, "heads": heads}


# ----------------------------------------------------------------------------
# Pure-JAX reference (f32) for a tolerance check against the bf16-MXU kernel.
# ----------------------------------------------------------------------------
def reference_forward(x_nchw, params):
    x = jnp.transpose(x_nchw, (0, 2, 3, 1))
    n, h, w, _ = x.shape
    xp = jnp.pad(x, ((0, 0), (1, 1), (1, 1), (0, 0)))
    wb = jnp.transpose(params["base_w"], (2, 3, 1, 0))        # (3,3,C_in,C_mid)
    feat = jnp.zeros((n, h, w, wb.shape[-1]), jnp.float32)
    for dy in range(3):
        for dx in range(3):
            feat = feat + jnp.einsum("nhwc,co->nhwo",
                                     xp[:, dy:dy + h, dx:dx + w, :], wb[dy, dx])
    feat = jnp.maximum(feat + params["base_b"], 0.0)
    outs = []
    for hw_, hb_ in params["heads"]:
        wm = jnp.transpose(hw_.reshape(hw_.shape[0], hw_.shape[1]), (1, 0))
        y = jnp.einsum("nhwc,co->nhwo", feat, wm) + hb_
        outs.append(jnp.transpose(y, (0, 3, 1, 2)))
    return outs


if __name__ == "__main__":
    key = jax.random.PRNGKey(0)
    x = jax.random.normal(key, (2, 4, 16, 16), jnp.float32)    # NCHW, like PyTorch
    params = make_params(c_in=4, c_mid=32, head_channels=(8, 16))

    outs = jax.jit(shell_forward)(x, params)
    outs = [jax.block_until_ready(o) for o in outs]

    assert outs[0].shape == (2, 8, 16, 16), outs[0].shape
    assert outs[1].shape == (2, 16, 16, 16), outs[1].shape
    assert all(bool(jnp.all(jnp.isfinite(o))) for o in outs)

    refs = reference_forward(x, params)
    for o, r in zip(outs, refs):
        err = float(jnp.max(jnp.abs(o - r)))
        assert err < 5e-2, f"max |err| = {err}"

    print("KERNEL_OK")
</pallas_src>

<mosaic_0001>
module attributes {stable_mosaic.version = 11 : i64} {
  func.func @_shell_fused_kernel(%arg0: i32, %arg1: memref<2x18x18x4xbf16, #tpu.memory_space<vmem>>, %arg2: memref<36x32xbf16, #tpu.memory_space<vmem>>, %arg3: memref<1x32xf32, #tpu.memory_space<vmem>>, %arg4: memref<32x128xbf16, #tpu.memory_space<vmem>>, %arg5: memref<1x128xf32, #tpu.memory_space<vmem>>, %arg6: memref<512x128xf32, #tpu.memory_space<vmem>>, %arg7: memref<2x16x16x36xbf16, #tpu.memory_space<vmem>>) attributes {dimension_semantics = [#tpu.dimension_semantics<parallel>], iteration_bounds = array<i64: 1>, scalar_prefetch = 0 : i64, scratch_operands = 1 : i64, tpu.core_type = #tpu.core_type<tc>, window_params = [{transform_indices = @transform_0, window_bounds = array<i64: 2, 18, 18, 4>}, {pipeline_mode = #tpu.pipeline_mode<synchronous>, transform_indices = @transform_1, window_bounds = array<i64: 36, 32>}, {pipeline_mode = #tpu.pipeline_mode<synchronous>, transform_indices = @transform_2, window_bounds = array<i64: 1, 32>}, {pipeline_mode = #tpu.pipeline_mode<synchronous>, transform_indices = @transform_3, window_bounds = array<i64: 32, 128>}, {pipeline_mode = #tpu.pipeline_mode<synchronous>, transform_indices = @transform_4, window_bounds = array<i64: 1, 128>}, {transform_indices = @transform_5, window_bounds = array<i64: 512, 128>}]} {
    %c0 = arith.constant 0 : index
    %c0_0 = arith.constant 0 : index
    %c0_1 = arith.constant 0 : index
    %c0_2 = arith.constant 0 : index
    %0 = vector.load %arg1[%c0, %c0_0, %c0_1, %c0_2] : memref<2x18x18x4xbf16, #tpu.memory_space<vmem>>, vector<2x18x18x4xbf16>
    %1 = vector.extract_strided_slice %0 {offsets = [0, 0, 0, 0], sizes = [2, 16, 16, 4], strides = [1, 1, 1, 1]} : vector<2x18x18x4xbf16> to vector<2x16x16x4xbf16>
    %c0_3 = arith.constant 0 : index
    %c0_4 = arith.constant 0 : index
    %c0_5 = arith.constant 0 : index
    %c0_6 = arith.constant 0 : index
    %2 = vector.load %arg7[%c0_3, %c0_4, %c0_5, %c0_6] : memref<2x16x16x36xbf16, #tpu.memory_space<vmem>>, vector<2x16x16x4xbf16>
    tpu.vector_store %arg7[%c0_3, %c0_4, %c0_5, %c0_6], %1 {strides = array<i32>} : memref<2x16x16x36xbf16, #tpu.memory_space<vmem>>, vector<2x16x16x4xbf16>,
    %3 = vector.extract_strided_slice %0 {offsets = [0, 0, 1, 0], sizes = [2, 16, 16, 4], strides = [1, 1, 1, 1]} : vector<2x18x18x4xbf16> to vector<2x16x16x4xbf16>
    %c0_7 = arith.constant 0 : index
    %c0_8 = arith.constant 0 : index
    %c0_9 = arith.constant 0 : index
    %c4 = arith.constant 4 : index
    %4 = vector.load %arg7[%c0_7, %c0_8, %c0_9, %c4] : memref<2x16x16x36xbf16, #tpu.memory_space<vmem>>, vector<2x16x16x4xbf16>
    tpu.vector_store %arg7[%c0_7, %c0_8, %c0_9, %c4], %3 {strides = array<i32>} : memref<2x16x16x36xbf16, #tpu.memory_space<vmem>>, vector<2x16x16x4xbf16>,
    %5 = vector.extract_strided_slice %0 {offsets = [0, 0, 2, 0], sizes = [2, 16, 16, 4], strides = [1, 1, 1, 1]} : vector<2x18x18x4xbf16> to vector<2x16x16x4xbf16>
    %c0_10 = arith.constant 0 : index
    %c0_11 = arith.constant 0 : index
    %c0_12 = arith.constant 0 : index
    %c8 = arith.constant 8 : index
    %6 = vector.load %arg7[%c0_10, %c0_11, %c0_12, %c8] : memref<2x16x16x36xbf16, #tpu.memory_space<vmem>>, vector<2x16x16x4xbf16>
    tpu.vector_store %arg7[%c0_10, %c0_11, %c0_12, %c8], %5 {strides = array<i32>} : memref<2x16x16x36xbf16, #tpu.memory_space<vmem>>, vector<2x16x16x4xbf16>,
    %7 = vector.extract_strided_slice %0 {offsets = [0, 1, 0, 0], sizes = [2, 16, 16, 4], strides = [1, 1, 1, 1]} : vector<2x18x18x4xbf16> to vector<2x16x16x4xbf16>
    %c0_13 = arith.constant 0 : index
    %c0_14 = arith.constant 0 : index
    %c0_15 = arith.constant 0 : index
    %c12 = arith.constant 12 : index
    %8 = vector.load %arg7[%c0_13, %c0_14, %c0_15, %c12] : memref<2x16x16x36xbf16, #tpu.memory_space<vmem>>, vector<2x16x16x4xbf16>
    tpu.vector_store %arg7[%c0_13, %c0_14, %c0_15, %c12], %7 {strides = array<i32>} : memref<2x16x16x36xbf16, #tpu.memory_space<vmem>>, vector<2x16x16x4xbf16>,
    %9 = vector.extract_strided_slice %0 {offsets = [0, 1, 1, 0], sizes = [2, 16, 16, 4], strides = [1, 1, 1, 1]} : vector<2x18x18x4xbf16> to vector<2x16x16x4xbf16>
    %c0_16 = arith.constant 0 : index
    %c0_17 = arith.constant 0 : index
    %c0_18 = arith.constant 0 : index
    %c16 = arith.constant 16 : index
    %10 = vector.load %arg7[%c0_16, %c0_17, %c0_18, %c16] : memref<2x16x16x36xbf16, #tpu.memory_space<vmem>>, vector<2x16x16x4xbf16>
    tpu.vector_store %arg7[%c0_16, %c0_17, %c0_18, %c16], %9 {strides = array<i32>} : memref<2x16x16x36xbf16, #tpu.memory_space<vmem>>, vector<2x16x16x4xbf16>,
    %11 = vector.extract_strided_slice %0 {offsets = [0, 1, 2, 0], sizes = [2, 16, 16, 4], strides = [1, 1, 1, 1]} : vector<2x18x18x4xbf16> to vector<2x16x16x4xbf16>
    %c0_19 = arith.constant 0 : index
    %c0_20 = arith.constant 0 : index
    %c0_21 = arith.constant 0 : index
    %c20 = arith.constant 20 : index
    %12 = vector.load %arg7[%c0_19, %c0_20, %c0_21, %c20] : memref<2x16x16x36xbf16, #tpu.memory_space<vmem>>, vector<2x16x16x4xbf16>
    tpu.vector_store %arg7[%c0_19, %c0_20, %c0_21, %c20], %11 {strides = array<i32>} : memref<2x16x16x36xbf16, #tpu.memory_space<vmem>>, vector<2x16x16x4xbf16>,
    %13 = vector.extract_strided_slice %0 {offsets = [0, 2, 0, 0], sizes = [2, 16, 16, 4], strides = [1, 1, 1, 1]} : vector<2x18x18x4xbf16> to vector<2x16x16x4xbf16>
    %c0_22 = arith.constant 0 : index
    %c0_23 = arith.constant 0 : index
    %c0_24 = arith.constant 0 : index
    %c24 = arith.constant 24 : index
    %14 = vector.load %arg7[%c0_22, %c0_23, %c0_24, %c24] : memref<2x16x16x36xbf16, #tpu.memory_space<vmem>>, vector<2x16x16x4xbf16>
    tpu.vector_store %arg7[%c0_22, %c0_23, %c0_24, %c24], %13 {strides = array<i32>} : memref<2x16x16x36xbf16, #tpu.memory_space<vmem>>, vector<2x16x16x4xbf16>,
    %15 = vector.extract_strided_slice %0 {offsets = [0, 2, 1, 0], sizes = [2, 16, 16, 4], strides = [1, 1, 1, 1]} : vector<2x18x18x4xbf16> to vector<2x16x16x4xbf16>
    %c0_25 = arith.constant 0 : index
    %c0_26 = arith.constant 0 : index
    %c0_27 = arith.constant 0 : index
    %c28 = arith.constant 28 : index
    %16 = vector.load %arg7[%c0_25, %c0_26, %c0_27, %c28] : memref<2x16x16x36xbf16, #tpu.memory_space<vmem>>, vector<2x16x16x4xbf16>
    tpu.vector_store %arg7[%c0_25, %c0_26, %c0_27, %c28], %15 {strides = array<i32>} : memref<2x16x16x36xbf16, #tpu.memory_space<vmem>>, vector<2x16x16x4xbf16>,
    %17 = vector.extract_strided_slice %0 {offsets = [0, 2, 2, 0], sizes = [2, 16, 16, 4], strides = [1, 1, 1, 1]} : vector<2x18x18x4xbf16> to vector<2x16x16x4xbf16>
    %c0_28 = arith.constant 0 : index
    %c0_29 = arith.constant 0 : index
    %c0_30 = arith.constant 0 : index
    %c32 = arith.constant 32 : index
    %18 = vector.load %arg7[%c0_28, %c0_29, %c0_30, %c32] : memref<2x16x16x36xbf16, #tpu.memory_space<vmem>>, vector<2x16x16x4xbf16>
    tpu.vector_store %arg7[%c0_28, %c0_29, %c0_30, %c32], %17 {strides = array<i32>} : memref<2x16x16x36xbf16, #tpu.memory_space<vmem>>, vector<2x16x16x4xbf16>,
    %c0_31 = arith.constant 0 : index
    %c0_32 = arith.constant 0 : index
    %c0_33 = arith.constant 0 : index
    %c0_34 = arith.constant 0 : index
    %19 = vector.load %arg7[%c0_31, %c0_32, %c0_33, %c0_34] : memref<2x16x16x36xbf16, #tpu.memory_space<vmem>>, vector<2x16x16x36xbf16>
    %20 = vector.shape_cast %19 : vector<2x16x16x36xbf16> to vector<512x36xbf16>
    %c0_35 = arith.constant 0 : index
    %c0_36 = arith.constant 0 : index
    %21 = vector.load %arg2[%c0_35, %c0_36] : memref<36x32xbf16, #tpu.memory_space<vmem>>, vector<36x32xbf16>
    %cst = arith.constant dense<0.000000e+00> : vector<512x32xf32>
    %22 = tpu.matmul %20, %21, %cst {dimension_numbers = #tpu.dot_dimension_numbers<[1], [0], [0], [1], [0, 0, 1, 1], [], []>} : vector<512x36xbf16>, vector<36x32xbf16>, vector<512x32xf32> -> vector<512x32xf32>
    %c0_37 = arith.constant 0 : index
    %c0_38 = arith.constant 0 : index
    %23 = vector.load %arg3[%c0_37, %c0_38] : memref<1x32xf32, #tpu.memory_space<vmem>>, vector<1x32xf32>
    %24 = vector.broadcast %23 : vector<1x32xf32> to vector<512x32xf32>
    %25 = arith.addf %22, %24 : vector<512x32xf32>
    %cst_39 = arith.constant 0.000000e+00 : f32
    %26 = vector.broadcast %cst_39 : f32 to vector<512x32xf32>
    %27 = arith.maximumf %25, %26 : vector<512x32xf32>
    %28 = arith.truncf %27 : vector<512x32xf32> to vector<512x32xbf16>
    %c0_40 = arith.constant 0 : index
    %c0_41 = arith.constant 0 : index
    %29 = vector.load %arg4[%c0_40, %c0_41] : memref<32x128xbf16, #tpu.memory_space<vmem>>, vector<32x128xbf16>
    %cst_42 = arith.constant dense<0.000000e+00> : vector<512x128xf32>
    %30 = tpu.matmul %28, %29, %cst_42 {dimension_numbers = #tpu.dot_dimension_numbers<[1], [0], [0], [1], [0, 0, 1, 1], [], []>} : vector<512x32xbf16>, vector<32x128xbf16>, vector<512x128xf32> -> vector<512x128xf32>
    %c0_43 = arith.constant 0 : index
    %c0_44 = arith.constant 0 : index
    %31 = vector.load %arg5[%c0_43, %c0_44] : memref<1x128xf32, #tpu.memory_space<vmem>>, vector<1x128xf32>
    %32 = vector.broadcast %31 : vector<1x128xf32> to vector<512x128xf32>
    %33 = arith.addf %30, %32 : vector<512x128xf32>
    %c0_45 = arith.constant 0 : index
    %c0_46 = arith.constant 0 : index
    %34 = vector.load %arg6[%c0_45, %c0_46] : memref<512x128xf32, #tpu.memory_space<vmem>>, vector<512x128xf32>
    tpu.vector_store %arg6[%c0_45, %c0_46], %33 {strides = array<i32>} : memref<512x128xf32, #tpu.memory_space<vmem>>, vector<512x128xf32>,
    return
  }
  func.func @transform_0(%arg0: i32) -> (i32, i32, i32, i32) {
    %c0_i32 = arith.constant 0 : i32
    %c0_i32_0 = arith.constant 0 : i32
    %c0_i32_1 = arith.constant 0 : i32
    %c0_i32_2 = arith.constant 0 : i32
    return %arg0, %c0_i32, %c0_i32_0, %c0_i32_1 : i32, i32, i32, i32
  }
  func.func @transform_1(%arg0: i32) -> (i32, i32) {
    %c0_i32 = arith.constant 0 : i32
    %c0_i32_0 = arith.constant 0 : i32
    %c0_i32_1 = arith.constant 0 : i32
    return %c0_i32, %c0_i32_0 : i32, i32
  }
  func.func @transform_2(%arg0: i32) -> (i32, i32) {
    %c0_i32 = arith.constant 0 : i32
    %c0_i32_0 = arith.constant 0 : i32
    %c0_i32_1 = arith.constant 0 : i32
    return %c0_i32, %c0_i32_0 : i32, i32
  }
  func.func @transform_3(%arg0: i32) -> (i32, i32) {
    %c0_i32 = arith.constant 0 : i32
    %c0_i32_0 = arith.constant 0 : i32
    %c0_i32_1 = arith.constant 0 : i32
    return %c0_i32, %c0_i32_0 : i32, i32
  }
  func.func @transform_4(%arg0: i32) -> (i32, i32) {
    %c0_i32 = arith.constant 0 : i32
    %c0_i32_0 = arith.constant 0 : i32
    %c0_i32_1 = arith.constant 0 : i32
    return %c0_i32, %c0_i32_0 : i32, i32
  }
  func.func @transform_5(%arg0: i32) -> (i32, i32) {
    %c0_i32 = arith.constant 0 : i32
    %c0_i32_0 = arith.constant 0 : i32
    return %arg0, %c0_i32 : i32, i32
  }
}

</mosaic_0001>

<llo_original>
// kernel: shell_forward.1
$region0: #{shell_forward.1}
  #allocation0 [shape = 'u32[]', space=smem, size = 0x4, offset = 0x4, fixed_abs, tag = 'smem constant byte address 0x4 - core index']
  #allocation1 [shape = 'u32[144,128]{1,0:T(1,128)}', space=vmem, size = 0x12000, scoped, tag = 'internal scratch']
  #allocation2 [shape = 'bf16[2,16,16,36]{3,2,1,0:T(8,128)(2,1)}', space=vmem, size = 0x20000, scoped, tag = 'scratch operand']
  %s0 = inlined_call_operand.vmem [shape: bf16[2,18,18,4], index: 0, kind: input, shape index: {}]
  %s1 = inlined_call_operand.vmem [shape: bf16[36,32], index: 1, kind: input, shape index: {}]
  %s2 = inlined_call_operand.vmem [shape: f32[1,32], index: 2, kind: input, shape index: {}]
  %s3 = inlined_call_operand.vmem [shape: bf16[32,128], index: 3, kind: input, shape index: {}]
  %s4 = inlined_call_operand.vmem [shape: f32[1,128], index: 4, kind: input, shape index: {}]
  %s5 = inlined_call_operand.vmem [shape: f32[512,128], index: 5, kind: output, shape index: {}]
  %s6 = sld [smem:[#allocation0]]
  $region30: #{shell_forward.1} parent=0
    _
  %s8 = ssub.s32 1, %s6
  %s9 = scalar_select 0, %s8, %s6
  // Predicated region
  $region2: #{shell_forward.1} parent=0 // pred_check
    _
  $region3: #{shell_forward.1} parent=0 // pred_check_branch
    %11 = sbr.rel (0) target = $region5
  $region4: #{shell_forward.1} parent=0 // pred_region
    _
  $region5: #{shell_forward.1} parent=0 // pred_fallthru
    _
  // Predicated region
  $region6: #{shell_forward.1} parent=0 // pred_check
    _
  $region7: #{shell_forward.1} parent=0 // pred_check_branch
    %13 = sbr.rel (0) target = $region9
  $region8: #{shell_forward.1} parent=0 // pred_region
    _
  $region9: #{shell_forward.1} parent=0 // pred_fallthru
    _
  // Predicated region
  $region10: #{shell_forward.1} parent=0 // pred_check
    _
  $region11: #{shell_forward.1} parent=0 // pred_check_branch
    %15 = sbr.rel (0) target = $region13
  $region12: #{shell_forward.1} parent=0 // pred_region
    _
  $region13: #{shell_forward.1} parent=0 // pred_fallthru
    _
  // Predicated region
  $region14: #{shell_forward.1} parent=0 // pred_check
    _
  $region15: #{shell_forward.1} parent=0 // pred_check_branch
    %17 = sbr.rel (0) target = $region17
  $region16: #{shell_forward.1} parent=0 // pred_region
    _
  $region17: #{shell_forward.1} parent=0 // pred_fallthru
    _
  // Predicated region
  $region18: #{shell_forward.1} parent=0 // pred_check
    _
  $region19: #{shell_forward.1} parent=0 // pred_check_branch
    %19 = sbr.rel (0) target = $region21
  $region20: #{shell_forward.1} parent=0 // pred_region
    _
  $region21: #{shell_forward.1} parent=0 // pred_fallthru
    _
  %v21 = vld [vmem:[%s0] sm:$0xf]
  %v22 = vld [vmem:[%s0 + $0x4] sm:$0xf]
  %v23 = vld [vmem:[%s0 + $0x8] sm:$0x1]
  %v24 = vld [vmem:[%s0 + $0xc] sm:$0xf]
  %v25 = vld [vmem:[%s0 + $0x10] sm:$0xf]
  %v26 = vld [vmem:[%s0 + $0x14] sm:$0x1]
  %v27 = vld [vmem:[%s0 + $0x18] sm:$0xf]
  %v28 = vld [vmem:[%s0 + $0x1c] sm:$0xf]
  %v29 = vld [vmem:[%s0 + $0x20] sm:$0x1]
  %v30 = vld [vmem:[%s0 + $0x24] sm:$0xf]
  %v31 = vld [vmem:[%s0 + $0x28] sm:$0xf]
  %v32 = vld [vmem:[%s0 + $0x2c] sm:$0x1]
  %v33 = vld [vmem:[%s0 + $0x30] sm:$0xf]
  %v34 = vld [vmem:[%s0 + $0x34] sm:$0xf]
  %v35 = vld [vmem:[%s0 + $0x38] sm:$0x1]
  %v36 = vld [vmem:[%s0 + $0x3c] sm:$0xf]
  %v37 = vld [vmem:[%s0 + $0x40] sm:$0xf]
  %v38 = vld [vmem:[%s0 + $0x44] sm:$0x1]
  %v39 = vld [vmem:[%s0 + $0x48] sm:$0xf]
  %v40 = vld [vmem:[%s0 + $0x4c] sm:$0xf]
  %v41 = vld [vmem:[%s0 + $0x50] sm:$0x1]
  %v42 = vld [vmem:[%s0 + $0x54] sm:$0xf]
  %v43 = vld [vmem:[%s0 + $0x58] sm:$0xf]
  %v44 = vld [vmem:[%s0 + $0x5c] sm:$0x1]
  %v45 = vld [vmem:[%s0 + $0x60] sm:$0xf]
  %v46 = vld [vmem:[%s0 + $0x64] sm:$0xf]
  %v47 = vld [vmem:[%s0 + $0x68] sm:$0x1]
  %v48 = vld [vmem:[%s0 + $0x6c] sm:$0xf]
  %v49 = vld [vmem:[%s0 + $0x70] sm:$0xf]
  %v50 = vld [vmem:[%s0 + $0x74] sm:$0x1]
  %v51 = vld [vmem:[%s0 + $0x78] sm:$0xf]
  %v52 = vld [vmem:[%s0 + $0x7c] sm:$0xf]
  %v53 = vld [vmem:[%s0 + $0x80] sm:$0x1]
  %v54 = vld [vmem:[%s0 + $0x84] sm:$0xf]
  %v55 = vld [vmem:[%s0 + $0x88] sm:$0xf]
  %v56 = vld [vmem:[%s0 + $0x8c] sm:$0x1]
  %v57 = vld [vmem:[%s0 + $0x90] sm:$0xf]
  %v58 = vld [vmem:[%s0 + $0x94] sm:$0xf]
  %v59 = vld [vmem:[%s0 + $0x98] sm:$0x1]
  %v60 = vld [vmem:[%s0 + $0x9c] sm:$0xf]
  %v61 = vld [vmem:[%s0 + $0xa0] sm:$0xf]
  %v62 = vld [vmem:[%s0 + $0xa4] sm:$0x1]
  %v63 = vld [vmem:[%s0 + $0xa8] sm:$0xf]
  %v64 = vld [vmem:[%s0 + $0xac] sm:$0xf]
  %v65 = vld [vmem:[%s0 + $0xb0] sm:$0x1]
  %v66 = vld [vmem:[%s0 + $0xb4] sm:$0xf]
  %v67 = vld [vmem:[%s0 + $0xb8] sm:$0xf]
  %v68 = vld [vmem:[%s0 + $0xbc] sm:$0x1]
  %v69 = vld [vmem:[%s0 + $0xc0] sm:$0xf]
  %v70 = vld [vmem:[%s0 + $0xc4] sm:$0xf]
  %v71 = vld [vmem:[%s0 + $0xc8] sm:$0x1]
  %v72 = vld [vmem:[%s0 + $0xcc] sm:$0xf]
  %v73 = vld [vmem:[%s0 + $0xd0] sm:$0xf]
  %v74 = vld [vmem:[%s0 + $0xd4] sm:$0x1]
  %v75 = vld [vmem:[%s0 + $0xd8] sm:$0xf]
  %v76 = vld [vmem:[%s0 + $0xdc] sm:$0xf]
  %v77 = vld [vmem:[%s0 + $0xe0] sm:$0x1]
  %v78 = vld [vmem:[%s0 + $0xe4] sm:$0xf]
  %v79 = vld [vmem:[%s0 + $0xe8] sm:$0xf]
  %v80 = vld [vmem:[%s0 + $0xec] sm:$0x1]
  %v81 = vld [vmem:[%s0 + $0xf0] sm:$0xf]
  %v82 = vld [vmem:[%s0 + $0xf4] sm:$0xf]
  %v83 = vld [vmem:[%s0 + $0xf8] sm:$0x1]
  %v84 = vld [vmem:[%s0 + $0xfc] sm:$0xf]
  %v85 = vld [vmem:[%s0 + $0x100] sm:$0xf]
  %v86 = vld [vmem:[%s0 + $0x104] sm:$0x1]
  %v87 = vld [vmem:[%s0 + $0x108] sm:$0xf]
  %v88 = vld [vmem:[%s0 + $0x10c] sm:$0xf]
  %v89 = vld [vmem:[%s0 + $0x110] sm:$0x1]
  %v90 = vld [vmem:[%s0 + $0x114] sm:$0xf]
  %v91 = vld [vmem:[%s0 + $0x118] sm:$0xf]
  %v92 = vld [vmem:[%s0 + $0x11c] sm:$0x1]
  %v93 = vld [vmem:[%s0 + $0x120] sm:$0xf]
  %v94 = vld [vmem:[%s0 + $0x124] sm:$0xf]
  %v95 = vld [vmem:[%s0 + $0x128] sm:$0x1]
  %v96 = vld [vmem:[%s0 + $0x12c] sm:$0xf]
  %v97 = vld [vmem:[%s0 + $0x130] sm:$0xf]
  %v98 = vld [vmem:[%s0 + $0x134] sm:$0x1]
  %v99 = vld [vmem:[%s0 + $0x138] sm:$0xf]
  %v100 = vld [vmem:[%s0 + $0x13c] sm:$0xf]
  %v101 = vld [vmem:[%s0 + $0x140] sm:$0x1]
  %v102 = vld [vmem:[%s0 + $0x144] sm:$0xf]
  %v103 = vld [vmem:[%s0 + $0x148] sm:$0xf]
  %v104 = vld [vmem:[%s0 + $0x14c] sm:$0x1]
  %v105 = vld [vmem:[%s0 + $0x150] sm:$0xf]
  %v106 = vld [vmem:[%s0 + $0x154] sm:$0xf]
  %v107 = vld [vmem:[%s0 + $0x158] sm:$0x1]
  %v108 = vld [vmem:[%s0 + $0x15c] sm:$0xf]
  %v109 = vld [vmem:[%s0 + $0x160] sm:$0xf]
  %v110 = vld [vmem:[%s0 + $0x164] sm:$0x1]
  %v111 = vld [vmem:[%s0 + $0x168] sm:$0xf]
  %v112 = vld [vmem:[%s0 + $0x16c] sm:$0xf]
  %v113 = vld [vmem:[%s0 + $0x170] sm:$0x1]
  %v114 = vld [vmem:[%s0 + $0x174] sm:$0xf]
  %v115 = vld [vmem:[%s0 + $0x178] sm:$0xf]
  %v116 = vld [vmem:[%s0 + $0x17c] sm:$0x1]
  %v117 = vld [vmem:[%s0 + $0x180] sm:$0xf]
  %v118 = vld [vmem:[%s0 + $0x184] sm:$0xf]
  %v119 = vld [vmem:[%s0 + $0x188] sm:$0x1]
  %v120 = vld [vmem:[%s0 + $0x18c] sm:$0xf]
  %v121 = vld [vmem:[%s0 + $0x190] sm:$0xf]
  %v122 = vld [vmem:[%s0 + $0x194] sm:$0x1]
  %v123 = vld [vmem:[%s0 + $0x198] sm:$0xf]
  %v124 = vld [vmem:[%s0 + $0x19c] sm:$0xf]
  %v125 = vld [vmem:[%s0 + $0x1a0] sm:$0x1]
  %v126 = vld [vmem:[%s0 + $0x1a4] sm:$0xf]
  %v127 = vld [vmem:[%s0 + $0x1a8] sm:$0xf]
  %v128 = vld [vmem:[%s0 + $0x1ac] sm:$0x1]
  %vm129 = vcmask 27648
  %130 = vst.msk [vmem:[#allocation2] sm:$0xf] %vm129, %v21
  %131 = vst.msk [vmem:[#allocation2 + $0x4] sm:$0xf] %vm129, %v22
  %132 = vst.msk [vmem:[#allocation2 + $0x8] sm:$0xf] %vm129, %v24
  %133 = vst.msk [vmem:[#allocation2 + $0xc] sm:$0xf] %vm129, %v25
  %134 = vst.msk [vmem:[#allocation2 + $0x10] sm:$0xf] %vm129, %v27
  %135 = vst.msk [vmem:[#allocation2 + $0x14] sm:$0xf] %vm129, %v28
  %136 = vst.msk [vmem:[#allocation2 + $0x18] sm:$0xf] %vm129, %v30
  %137 = vst.msk [vmem:[#allocation2 + $0x1c] sm:$0xf] %vm129, %v31
  %138 = vst.msk [vmem:[#allocation2 + $0x20] sm:$0xf] %vm129, %v33
  %139 = vst.msk [vmem:[#allocation2 + $0x24] sm:$0xf] %vm129, %v34
  %140 = vst.msk [vmem:[#allocation2 + $0x28] sm:$0xf] %vm129, %v36
  %141 = vst.msk [vmem:[#allocation2 + $0x2c] sm:$0xf] %vm129, %v37
  %142 = vst.msk [vmem:[#allocation2 + $0x30] sm:$0xf] %vm129, %v39
  %143 = vst.msk [vmem:[#allocation2 + $0x34] sm:$0xf] %vm129, %v40
  %144 = vst.msk [vmem:[#allocation2 + $0x38] sm:$0xf] %vm129, %v42
  %145 = vst.msk [vmem:[#allocation2 + $0x3c] sm:$0xf] %vm129, %v43
  %146 = vst.msk [vmem:[#allocation2 + $0x40] sm:$0xf] %vm129, %v45
  %147 = vst.msk [vmem:[#allocation2 + $0x44] sm:$0xf] %vm129, %v46
  %148 = vst.msk [vmem:[#allocation2 + $0x48] sm:$0xf] %vm129, %v48
  %149 = vst.msk [vmem:[#allocation2 + $0x4c] sm:$0xf] %vm129, %v49
  %150 = vst.msk [vmem:[#allocation2 + $0x50] sm:$0xf] %vm129, %v51
  %151 = vst.msk [vmem:[#allocation2 + $0x54] sm:$0xf] %vm129, %v52
  %152 = vst.msk [vmem:[#allocation2 + $0x58] sm:$0xf] %vm129, %v54
  %153 = vst.msk [vmem:[#allocation2 + $0x5c] sm:$0xf] %vm129, %v55
  %154 = vst.msk [vmem:[#allocation2 + $0x60] sm:$0xf] %vm129, %v57
  %155 = vst.msk [vmem:[#allocation2 + $0x64] sm:$0xf] %vm129, %v58
  %156 = vst.msk [vmem:[#allocation2 + $0x68] sm:$0xf] %vm129, %v60
  %157 = vst.msk [vmem:[#allocation2 + $0x6c] sm:$0xf] %vm129, %v61
  %158 = vst.msk [vmem:[#allocation2 + $0x70] sm:$0xf] %vm129, %v63
  %159 = vst.msk [vmem:[#allocation2 + $0x74] sm:$0xf] %vm129, %v64
  %160 = vst.msk [vmem:[#allocation2 + $0x78] sm:$0xf] %vm129, %v66
  %161 = vst.msk [vmem:[#allocation2 + $0x7c] sm:$0xf] %vm129, %v67
  %162 = vst.msk [vmem:[#allocation2 + $0x80] sm:$0xf] %vm129, %v75
  %163 = vst.msk [vmem:[#allocation2 + $0x84] sm:$0xf] %vm129, %v76
  %164 = vst.msk [vmem:[#allocation2 + $0x88] sm:$0xf] %vm129, %v78
  %165 = vst.msk [vmem:[#allocation2 + $0x8c] sm:$0xf] %vm129, %v79
  %166 = vst.msk [vmem:[#allocation2 + $0x90] sm:$0xf] %vm129, %v81
  %167 = vst.msk [vmem:[#allocation2 + $0x94] sm:$0xf] %vm129, %v82
  %168 = vst.msk [vmem:[#allocation2 + $0x98] sm:$0xf] %vm129, %v84
  %169 = vst.msk [vmem:[#allocation2 + $0x9c] sm:$0xf] %vm129, %v85
  %170 = vst.msk [vmem:[#allocation2 + $0xa0] sm:$0xf] %vm129, %v87
  %171 = vst.msk [vmem:[#allocation2 + $0xa4] sm:$0xf] %vm129, %v88
  %172 = vst.msk [vmem:[#allocation2 + $0xa8] sm:$0xf] %vm129, %v90
  %173 = vst.msk [vmem:[#allocation2 + $0xac] sm:$0xf] %vm129, %v91
  %174 = vst.msk [vmem:[#allocation2 + $0xb0] sm:$0xf] %vm129, %v93
  %175 = vst.msk [vmem:[#allocation2 + $0xb4] sm:$0xf] %vm129, %v94
  %176 = vst.msk [vmem:[#allocation2 + $0xb8] sm:$0xf] %vm129, %v96
  %177 = vst.msk [vmem:[#allocation2 + $0xbc] sm:$0xf] %vm129, %v97
  %178 = vst.msk [vmem:[#allocation2 + $0xc0] sm:$0xf] %vm129, %v99
  %179 = vst.msk [vmem:[#allocation2 + $0xc4] sm:$0xf] %vm129, %v100
  %180 = vst.msk [vmem:[#allocation2 + $0xc8] sm:$0xf] %vm129, %v102
  %181 = vst.msk [vmem:[#allocation2 + $0xcc] sm:$0xf] %vm129, %v103
  %182 = vst.msk [vmem:[#allocation2 + $0xd0] sm:$0xf] %vm129, %v105
  %183 = vst.msk [vmem:[#allocation2 + $0xd4] sm:$0xf] %vm129, %v106
  %184 = vst.msk [vmem:[#allocation2 + $0xd8] sm:$0xf] %vm129, %v108
  %185 = vst.msk [vmem:[#allocation2 + $0xdc] sm:$0xf] %vm129, %v109
  %186 = vst.msk [vmem:[#allocation2 + $0xe0] sm:$0xf] %vm129, %v111
  %187 = vst.msk [vmem:[#allocation2 + $0xe4] sm:$0xf] %vm129, %v112
  %188 = vst.msk [vmem:[#allocation2 + $0xe8] sm:$0xf] %vm129, %v114
  %189 = vst.msk [vmem:[#allocation2 + $0xec] sm:$0xf] %vm129, %v115
  %190 = vst.msk [vmem:[#allocation2 + $0xf0] sm:$0xf] %vm129, %v117
  %191 = vst.msk [vmem:[#allocation2 + $0xf4] sm:$0xf] %vm129, %v118
  %192 = vst.msk [vmem:[#allocation2 + $0xf8] sm:$0xf] %vm129, %v120
  %193 = vst.msk [vmem:[#allocation2 + $0xfc] sm:$0xf] %vm129, %v121
  %vm194 = vsmask.f32 3328
  %vm195 = vsmask.f32 7440
  %vm196 = vmor %vm194, %vm195
  %v198 = vshrl.u32 %v21, 16
  %v200 = vrot.slane %v198, 4
  %v201 = vshll.u32 %v21, 16
  %v203 = vrot.slane %v201, 5
  %v204 = vor.u32 %v200, %v203
  %v205 = vrot.slane %v204, 4
  %v207 = vshll.u32 %v22, 16
  %v209 = vrot.slane %v207, 5
  %v210 = vsel %vm196, %v205, %v209
  %v211 = vshrl.u32 %v22, 16
  %v213 = vrot.slane %v211, 4
  %v214 = vor.u32 %v213, %v209
  %v215 = vrot.slane %v214, 4
  %v217 = vshll.u32 %v23, 16
  %v219 = vrot.slane %v217, 5
  %v220 = vsel %vm196, %v215, %v219
  %v222 = vshrl.u32 %v24, 16
  %v224 = vrot.slane %v222, 4
  %v225 = vshll.u32 %v24, 16
  %v227 = vrot.slane %v225, 5
  %v228 = vor.u32 %v224, %v227
  %v229 = vrot.slane %v228, 4
  %v231 = vshll.u32 %v25, 16
  %v233 = vrot.slane %v231, 5
  %v234 = vsel %vm196, %v229, %v233
  %v235 = vshrl.u32 %v25, 16
  %v237 = vrot.slane %v235, 4
  %v238 = vor.u32 %v237, %v233
  %v239 = vrot.slane %v238, 4
  %v241 = vshll.u32 %v26, 16
  %v243 = vrot.slane %v241, 5
  %v244 = vsel %vm196, %v239, %v243
  %v246 = vshrl.u32 %v27, 16
  %v248 = vrot.slane %v246, 4
  %v249 = vshll.u32 %v27, 16
  %v251 = vrot.slane %v249, 5
  %v252 = vor.u32 %v248, %v251
  %v253 = vrot.slane %v252, 4
  %v255 = vshll.u32 %v28, 16
  %v257 = vrot.slane %v255, 5
  %v258 = vsel %vm196, %v253, %v257
  %v259 = vshrl.u32 %v28, 16
  %v261 = vrot.slane %v259, 4
  %v262 = vor.u32 %v261, %v257
  %v263 = vrot.slane %v262, 4
  %v265 = vshll.u32 %v29, 16
  %v267 = vrot.slane %v265, 5
  %v268 = vsel %vm196, %v263, %v267
  %v270 = vshrl.u32 %v30, 16
  %v272 = vrot.slane %v270, 4
  %v273 = vshll.u32 %v30, 16
  %v275 = vrot.slane %v273, 5
  %v276 = vor.u32 %v272, %v275
  %v277 = vrot.slane %v276, 4
  %v279 = vshll.u32 %v31, 16
  %v281 = vrot.slane %v279, 5
  %v282 = vsel %vm196, %v277, %v281
  %v283 = vshrl.u32 %v31, 16
  %v285 = vrot.slane %v283, 4
  %v286 = vor.u32 %v285, %v281
  %v287 = vrot.slane %v286, 4
  %v289 = vshll.u32 %v32, 16
  %v291 = vrot.slane %v289, 5
  %v292 = vsel %vm196, %v287, %v291
  %v294 = vshrl.u32 %v33, 16
  %v296 = vrot.slane %v294, 4
  %v297 = vshll.u32 %v33, 16
  %v299 = vrot.slane %v297, 5
  %v300 = vor.u32 %v296, %v299
  %v301 = vrot.slane %v300, 4
  %v303 = vshll.u32 %v34, 16
  %v305 = vrot.slane %v303, 5
  %v306 = vsel %vm196, %v301, %v305
  %v307 = vshrl.u32 %v34, 16
  %v309 = vrot.slane %v307, 4
  %v310 = vor.u32 %v309, %v305
  %v311 = vrot.slane %v310, 4
  %v313 = vshll.u32 %v35, 16
  %v315 = vrot.slane %v313, 5
  %v316 = vsel %vm196, %v311, %v315
  %v318 = vshrl.u32 %v36, 16
  %v320 = vrot.slane %v318, 4
  %v321 = vshll.u32 %v36, 16
  %v323 = vrot.slane %v321, 5
  %v324 = vor.u32 %v320, %v323
  %v325 = vrot.slane %v324, 4
  %v327 = vshll.u32 %v37, 16
  %v329 = vrot.slane %v327, 5
  %v330 = vsel %vm196, %v325, %v329
  %v331 = vshrl.u32 %v37, 16
  %v333 = vrot.slane %v331, 4
  %v334 = vor.u32 %v333, %v329
  %v335 = vrot.slane %v334, 4
  %v337 = vshll.u32 %v38, 16
  %v339 = vrot.slane %v337, 5
  %v340 = vsel %vm196, %v335, %v339
  %v342 = vshrl.u32 %v39, 16
  %v344 = vrot.slane %v342, 4
  %v345 = vshll.u32 %v39, 16
  %v347 = vrot.slane %v345, 5
  %v348 = vor.u32 %v344, %v347
  %v349 = vrot.slane %v348, 4
  %v351 = vshll.u32 %v40, 16
  %v353 = vrot.slane %v351, 5
  %v354 = vsel %vm196, %v349, %v353
  %v355 = vshrl.u32 %v40, 16
  %v357 = vrot.slane %v355, 4
  %v358 = vor.u32 %v357, %v353
  %v359 = vrot.slane %v358, 4
  %v361 = vshll.u32 %v41, 16
  %v363 = vrot.slane %v361, 5
  %v364 = vsel %vm196, %v359, %v363
  %v366 = vshrl.u32 %v42, 16
  %v368 = vrot.slane %v366, 4
  %v369 = vshll.u32 %v42, 16
  %v371 = vrot.slane %v369, 5
  %v372 = vor.u32 %v368, %v371
  %v373 = vrot.slane %v372, 4
  %v375 = vshll.u32 %v43, 16
  %v377 = vrot.slane %v375, 5
  %v378 = vsel %vm196, %v373, %v377
  %v379 = vshrl.u32 %v43, 16
  %v381 = vrot.slane %v379, 4
  %v382 = vor.u32 %v381, %v377
  %v383 = vrot.slane %v382, 4
  %v385 = vshll.u32 %v44, 16
  %v387 = vrot.slane %v385, 5
  %v388 = vsel %vm196, %v383, %v387
  %v390 = vshrl.u32 %v45, 16
  %v392 = vrot.slane %v390, 4
  %v393 = vshll.u32 %v45, 16
  %v395 = vrot.slane %v393, 5
  %v396 = vor.u32 %v392, %v395
  %v397 = vrot.slane %v396, 4
  %v399 = vshll.u32 %v46, 16
  %v401 = vrot.slane %v399, 5
  %v402 = vsel %vm196, %v397, %v401
  %v403 = vshrl.u32 %v46, 16
  %v405 = vrot.slane %v403, 4
  %v406 = vor.u32 %v405, %v401
  %v407 = vrot.slane %v406, 4
  %v409 = vshll.u32 %v47, 16
  %v411 = vrot.slane %v409, 5
  %v412 = vsel %vm196, %v407, %v411
  %v414 = vshrl.u32 %v48, 16
  %v416 = vrot.slane %v414, 4
  %v417 = vshll.u32 %v48, 16
  %v419 = vrot.slane %v417, 5
  %v420 = vor.u32 %v416, %v419
  %v421 = vrot.slane %v420, 4
  %v423 = vshll.u32 %v49, 16
  %v425 = vrot.slane %v423, 5
  %v426 = vsel %vm196, %v421, %v425
  %v427 = vshrl.u32 %v49, 16
  %v429 = vrot.slane %v427, 4
  %v430 = vor.u32 %v429, %v425
  %v431 = vrot.slane %v430, 4
  %v433 = vshll.u32 %v50, 16
  %v435 = vrot.slane %v433, 5
  %v436 = vsel %vm196, %v431, %v435
  %v438 = vshrl.u32 %v51, 16
  %v440 = vrot.slane %v438, 4
  %v441 = vshll.u32 %v51, 16
  %v443 = vrot.slane %v441, 5
  %v444 = vor.u32 %v440, %v443
  %v445 = vrot.slane %v444, 4
  %v447 = vshll.u32 %v52, 16
  %v449 = vrot.slane %v447, 5
  %v450 = vsel %vm196, %v445, %v449
  %v451 = vshrl.u32 %v52, 16
  %v453 = vrot.slane %v451, 4
  %v454 = vor.u32 %v453, %v449
  %v455 = vrot.slane %v454, 4
  %v457 = vshll.u32 %v53, 16
  %v459 = vrot.slane %v457, 5
  %v460 = vsel %vm196, %v455, %v459
  %v462 = vshrl.u32 %v54, 16
  %v464 = vrot.slane %v462, 4
  %v465 = vshll.u32 %v54, 16
  %v467 = vrot.slane %v465, 5
  %v468 = vor.u32 %v464, %v467
  %v469 = vrot.slane %v468, 4
  %v471 = vshll.u32 %v55, 16
  %v473 = vrot.slane %v471, 5
  %v474 = vsel %vm196, %v469, %v473
  %v475 = vshrl.u32 %v55, 16
  %v477 = vrot.slane %v475, 4
  %v478 = vor.u32 %v477, %v473
  %v479 = vrot.slane %v478, 4
  %v481 = vshll.u32 %v56, 16
  %v483 = vrot.slane %v481, 5
  %v484 = vsel %vm196, %v479, %v483
  %v486 = vshrl.u32 %v57, 16
  %v488 = vrot.slane %v486, 4
  %v489 = vshll.u32 %v57, 16
  %v491 = vrot.slane %v489, 5
  %v492 = vor.u32 %v488, %v491
  %v493 = vrot.slane %v492, 4
  %v495 = vshll.u32 %v58, 16
  %v497 = vrot.slane %v495, 5
  %v498 = vsel %vm196, %v493, %v497
  %v499 = vshrl.u32 %v58, 16
  %v501 = vrot.slane %v499, 4
  %v502 = vor.u32 %v501, %v497
  %v503 = vrot.slane %v502, 4
  %v505 = vshll.u32 %v59, 16
  %v507 = vrot.slane %v505, 5
  %v508 = vsel %vm196, %v503, %v507
  %v510 = vshrl.u32 %v60, 16
  %v512 = vrot.slane %v510, 4
  %v513 = vshll.u32 %v60, 16
  %v515 = vrot.slane %v513, 5
  %v516 = vor.u32 %v512, %v515
  %v517 = vrot.slane %v516, 4
  %v519 = vshll.u32 %v61, 16
  %v521 = vrot.slane %v519, 5
  %v522 = vsel %vm196, %v517, %v521
  %v523 = vshrl.u32 %v61, 16
  %v525 = vrot.slane %v523, 4
  %v526 = vor.u32 %v525, %v521
  %v527 = vrot.slane %v526, 4
  %v529 = vshll.u32 %v62, 16
  %v531 = vrot.slane %v529, 5
  %v532 = vsel %vm196, %v527, %v531
  %v534 = vshrl.u32 %v63, 16
  %v536 = vrot.slane %v534, 4
  %v537 = vshll.u32 %v63, 16
  %v539 = vrot.slane %v537, 5
  %v540 = vor.u32 %v536, %v539
  %v541 = vrot.slane %v540, 4
  %v543 = vshll.u32 %v64, 16
  %v545 = vrot.slane %v543, 5
  %v546 = vsel %vm196, %v541, %v545
  %v547 = vshrl.u32 %v64, 16
  %v549 = vrot.slane %v547, 4
  %v550 = vor.u32 %v549, %v545
  %v551 = vrot.slane %v550, 4
  %v553 = vshll.u32 %v65, 16
  %v555 = vrot.slane %v553, 5
  %v556 = vsel %vm196, %v551, %v555
  %v558 = vshrl.u32 %v66, 16
  %v560 = vrot.slane %v558, 4
  %v561 = vshll.u32 %v66, 16
  %v563 = vrot.slane %v561, 5
  %v564 = vor.u32 %v560, %v563
  %v565 = vrot.slane %v564, 4
  %v567 = vshll.u32 %v67, 16
  %v569 = vrot.slane %v567, 5
  %v570 = vsel %vm196, %v565, %v569
  %v571 = vshrl.u32 %v67, 16
  %v573 = vrot.slane %v571, 4
  %v574 = vor.u32 %v573, %v569
  %v575 = vrot.slane %v574, 4
  %v577 = vshll.u32 %v68, 16
  %v579 = vrot.slane %v577, 5
  %v580 = vsel %vm196, %v575, %v579
  %v582 = vshrl.u32 %v75, 16
  %v584 = vrot.slane %v582, 4
  %v585 = vshll.u32 %v75, 16
  %v587 = vrot.slane %v585, 5
  %v588 = vor.u32 %v584, %v587
  %v589 = vrot.slane %v588, 4
  %v591 = vshll.u32 %v76, 16
  %v593 = vrot.slane %v591, 5
  %v594 = vsel %vm196, %v589, %v593
  %v595 = vshrl.u32 %v76, 16
  %v597 = vrot.slane %v595, 4
  %v598 = vor.u32 %v597, %v593
  %v599 = vrot.slane %v598, 4
  %v601 = vshll.u32 %v77, 16
  %v603 = vrot.slane %v601, 5
  %v604 = vsel %vm196, %v599, %v603
  %v606 = vshrl.u32 %v78, 16
  %v608 = vrot.slane %v606, 4
  %v609 = vshll.u32 %v78, 16
  %v611 = vrot.slane %v609, 5
  %v612 = vor.u32 %v608, %v611
  %v613 = vrot.slane %v612, 4
  %v615 = vshll.u32 %v79, 16
  %v617 = vrot.slane %v615, 5
  %v618 = vsel %vm196, %v613, %v617
  %v619 = vshrl.u32 %v79, 16
  %v621 = vrot.slane %v619, 4
  %v622 = vor.u32 %v621, %v617
  %v623 = vrot.slane %v622, 4
  %v625 = vshll.u32 %v80, 16
  %v627 = vrot.slane %v625, 5
  %v628 = vsel %vm196, %v623, %v627
  %v630 = vshrl.u32 %v81, 16
  %v632 = vrot.slane %v630, 4
  %v633 = vshll.u32 %v81, 16
  %v635 = vrot.slane %v633, 5
  %v636 = vor.u32 %v632, %v635
  %v637 = vrot.slane %v636, 4
  %v639 = vshll.u32 %v82, 16
  %v641 = vrot.slane %v639, 5
  %v642 = vsel %vm196, %v637, %v641
  %v643 = vshrl.u32 %v82, 16
  %v645 = vrot.slane %v643, 4
  %v646 = vor.u32 %v645, %v641
  %v647 = vrot.slane %v646, 4
  %v649 = vshll.u32 %v83, 16
  %v651 = vrot.slane %v649, 5
  %v652 = vsel %vm196, %v647, %v651
  %v654 = vshrl.u32 %v84, 16
  %v656 = vrot.slane %v654, 4
  %v657 = vshll.u32 %v84, 16
  %v659 = vrot.slane %v657, 5
  %v660 = vor.u32 %v656, %v659
  %v661 = vrot.slane %v660, 4
  %v663 = vshll.u32 %v85, 16
  %v665 = vrot.slane %v663, 5
  %v666 = vsel %vm196, %v661, %v665
  %v667 = vshrl.u32 %v85, 16
  %v669 = vrot.slane %v667, 4
  %v670 = vor.u32 %v669, %v665
  %v671 = vrot.slane %v670, 4
  %v673 = vshll.u32 %v86, 16
  %v675 = vrot.slane %v673, 5
  %v676 = vsel %vm196, %v671, %v675
  %v678 = vshrl.u32 %v87, 16
  %v680 = vrot.slane %v678, 4
  %v681 = vshll.u32 %v87, 16
  %v683 = vrot.slane %v681, 5
  %v684 = vor.u32 %v680, %v683
  %v685 = vrot.slane %v684, 4
  %v687 = vshll.u32 %v88, 16
  %v689 = vrot.slane %v687, 5
  %v690 = vsel %vm196, %v685, %v689
  %v691 = vshrl.u32 %v88, 16
  %v693 = vrot.slane %v691, 4
  %v694 = vor.u32 %v693, %v689
  %v695 = vrot.slane %v694, 4
  %v697 = vshll.u32 %v89, 16
  %v699 = vrot.slane %v697, 5
  %v700 = vsel %vm196, %v695, %v699
  %v702 = vshrl.u32 %v90, 16
  %v704 = vrot.slane %v702, 4
  %v705 = vshll.u32 %v90, 16
  %v707 = vrot.slane %v705, 5
  %v708 = vor.u32 %v704, %v707
  %v709 = vrot.slane %v708, 4
  %v711 = vshll.u32 %v91, 16
  %v713 = vrot.slane %v711, 5
  %v714 = vsel %vm196, %v709, %v713
  %v715 = vshrl.u32 %v91, 16
  %v717 = vrot.slane %v715, 4
  %v718 = vor.u32 %v717, %v713
  %v719 = vrot.slane %v718, 4
  %v721 = vshll.u32 %v92, 16
  %v723 = vrot.slane %v721, 5
  %v724 = vsel %vm196, %v719, %v723
  %v726 = vshrl.u32 %v93, 16
  %v728 = vrot.slane %v726, 4
  %v729 = vshll.u32 %v93, 16
  %v731 = vrot.slane %v729, 5
  %v732 = vor.u32 %v728, %v731
  %v733 = vrot.slane %v732, 4
  %v735 = vshll.u32 %v94, 16
  %v737 = vrot.slane %v735, 5
  %v738 = vsel %vm196, %v733, %v737
  %v739 = vshrl.u32 %v94, 16
  %v741 = vrot.slane %v739, 4
  %v742 = vor.u32 %v741, %v737
  %v743 = vrot.slane %v742, 4
  %v745 = vshll.u32 %v95, 16
  %v747 = vrot.slane %v745, 5
  %v748 = vsel %vm196, %v743, %v747
  %v750 = vshrl.u32 %v96, 16
  %v752 = vrot.slane %v750, 4
  %v753 = vshll.u32 %v96, 16
  %v755 = vrot.slane %v753, 5
  %v756 = vor.u32 %v752, %v755
  %v757 = vrot.slane %v756, 4
  %v759 = vshll.u32 %v97, 16
  %v761 = vrot.slane %v759, 5
  %v762 = vsel %vm196, %v757, %v761
  %v763 = vshrl.u32 %v97, 16
  %v765 = vrot.slane %v763, 4
  %v766 = vor.u32 %v765, %v761
  %v767 = vrot.slane %v766, 4
  %v769 = vshll.u32 %v98, 16
  %v771 = vrot.slane %v769, 5
  %v772 = vsel %vm196, %v767, %v771
  %v774 = vshrl.u32 %v99, 16
  %v776 = vrot.slane %v774, 4
  %v777 = vshll.u32 %v99, 16
  %v779 = vrot.slane %v777, 5
  %v780 = vor.u32 %v776, %v779
  %v781 = vrot.slane %v780, 4
  %v783 = vshll.u32 %v100, 16
  %v785 = vrot.slane %v783, 5
  %v786 = vsel %vm196, %v781, %v785
  %v787 = vshrl.u32 %v100, 16
  %v789 = vrot.slane %v787, 4
  %v790 = vor.u32 %v789, %v785
  %v791 = vrot.slane %v790, 4
  %v793 = vshll.u32 %v101, 16
  %v795 = vrot.slane %v793, 5
  %v796 = vsel %vm196, %v791, %v795
  %v798 = vshrl.u32 %v102, 16
  %v800 = vrot.slane %v798, 4
  %v801 = vshll.u32 %v102, 16
  %v803 = vrot.slane %v801, 5
  %v804 = vor.u32 %v800, %v803
  %v805 = vrot.slane %v804, 4
  %v807 = vshll.u32 %v103, 16
  %v809 = vrot.slane %v807, 5
  %v810 = vsel %vm196, %v805, %v809
  %v811 = vshrl.u32 %v103, 16
  %v813 = vrot.slane %v811, 4
  %v814 = vor.u32 %v813, %v809
  %v815 = vrot.slane %v814, 4
  %v817 = vshll.u32 %v104, 16
  %v819 = vrot.slane %v817, 5
  %v820 = vsel %vm196, %v815, %v819
  %v822 = vshrl.u32 %v105, 16
  %v824 = vrot.slane %v822, 4
  %v825 = vshll.u32 %v105, 16
  %v827 = vrot.slane %v825, 5
  %v828 = vor.u32 %v824, %v827
  %v829 = vrot.slane %v828, 4
  %v831 = vshll.u32 %v106, 16
  %v833 = vrot.slane %v831, 5
  %v834 = vsel %vm196, %v829, %v833
  %v835 = vshrl.u32 %v106, 16
  %v837 = vrot.slane %v835, 4
  %v838 = vor.u32 %v837, %v833
  %v839 = vrot.slane %v838, 4
  %v841 = vshll.u32 %v107, 16
  %v843 = vrot.slane %v841, 5
  %v844 = vsel %vm196, %v839, %v843
  %v846 = vshrl.u32 %v108, 16
  %v848 = vrot.slane %v846, 4
  %v849 = vshll.u32 %v108, 16
  %v851 = vrot.slane %v849, 5
  %v852 = vor.u32 %v848, %v851
  %v853 = vrot.slane %v852, 4
  %v855 = vshll.u32 %v109, 16
  %v857 = vrot.slane %v855, 5
  %v858 = vsel %vm196, %v853, %v857
  %v859 = vshrl.u32 %v109, 16
  %v861 = vrot.slane %v859, 4
  %v862 = vor.u32 %v861, %v857
  %v863 = vrot.slane %v862, 4
  %v865 = vshll.u32 %v110, 16
  %v867 = vrot.slane %v865, 5
  %v868 = vsel %vm196, %v863, %v867
  %v870 = vshrl.u32 %v111, 16
  %v872 = vrot.slane %v870, 4
  %v873 = vshll.u32 %v111, 16
  %v875 = vrot.slane %v873, 5
  %v876 = vor.u32 %v872, %v875
  %v877 = vrot.slane %v876, 4
  %v879 = vshll.u32 %v112, 16
  %v881 = vrot.slane %v879, 5
  %v882 = vsel %vm196, %v877, %v881
  %v883 = vshrl.u32 %v112, 16
  %v885 = vrot.slane %v883, 4
  %v886 = vor.u32 %v885, %v881
  %v887 = vrot.slane %v886, 4
  %v889 = vshll.u32 %v113, 16
  %v891 = vrot.slane %v889, 5
  %v892 = vsel %vm196, %v887, %v891
  %v894 = vshrl.u32 %v114, 16
  %v896 = vrot.slane %v894, 4
  %v897 = vshll.u32 %v114, 16
  %v899 = vrot.slane %v897, 5
  %v900 = vor.u32 %v896, %v899
  %v901 = vrot.slane %v900, 4
  %v903 = vshll.u32 %v115, 16
  %v905 = vrot.slane %v903, 5
  %v906 = vsel %vm196, %v901, %v905
  %v907 = vshrl.u32 %v115, 16
  %v909 = vrot.slane %v907, 4
  %v910 = vor.u32 %v909, %v905
  %v911 = vrot.slane %v910, 4
  %v913 = vshll.u32 %v116, 16
  %v915 = vrot.slane %v913, 5
  %v916 = vsel %vm196, %v911, %v915
  %v918 = vshrl.u32 %v117, 16
  %v920 = vrot.slane %v918, 4
  %v921 = vshll.u32 %v117, 16
  %v923 = vrot.slane %v921, 5
  %v924 = vor.u32 %v920, %v923
  %v925 = vrot.slane %v924, 4
  %v927 = vshll.u32 %v118, 16
  %v929 = vrot.slane %v927, 5
  %v930 = vsel %vm196, %v925, %v929
  %v931 = vshrl.u32 %v118, 16
  %v933 = vrot.slane %v931, 4
  %v934 = vor.u32 %v933, %v929
  %v935 = vrot.slane %v934, 4
  %v937 = vshll.u32 %v119, 16
  %v939 = vrot.slane %v937, 5
  %v940 = vsel %vm196, %v935, %v939
  %v942 = vshrl.u32 %v120, 16
  %v944 = vrot.slane %v942, 4
  %v945 = vshll.u32 %v120, 16
  %v947 = vrot.slane %v945, 5
  %v948 = vor.u32 %v944, %v947
  %v949 = vrot.slane %v948, 4
  %v951 = vshll.u32 %v121, 16
  %v953 = vrot.slane %v951, 5
  %v954 = vsel %vm196, %v949, %v953
  %v955 = vshrl.u32 %v121, 16
  %v957 = vrot.slane %v955, 4
  %v958 = vor.u32 %v957, %v953
  %v959 = vrot.slane %v958, 4
  %v961 = vshll.u32 %v122, 16
  %v963 = vrot.slane %v961, 5
  %v964 = vsel %vm196, %v959, %v963
  %965 = vrot.lane.b32.xlu0 %v210, 4
  %v966 = vpop.permute.xlu0 %965
  %967 = vrot.lane.b32.xlu0 %v220, 4
  %v968 = vpop.permute.xlu0 %967
  %969 = vrot.lane.b32.xlu0 %v234, 4
  %v970 = vpop.permute.xlu0 %969
  %971 = vrot.lane.b32.xlu0 %v244, 4
  %v972 = vpop.permute.xlu0 %971
  %973 = vrot.lane.b32.xlu0 %v258, 4
  %v974 = vpop.permute.xlu0 %973
  %975 = vrot.lane.b32.xlu0 %v268, 4
  %v976 = vpop.permute.xlu0 %975
  %977 = vrot.lane.b32.xlu0 %v282, 4
  %v978 = vpop.permute.xlu0 %977
  %979 = vrot.lane.b32.xlu0 %v292, 4
  %v980 = vpop.permute.xlu0 %979
  %981 = vrot.lane.b32.xlu0 %v306, 4
  %v982 = vpop.permute.xlu0 %981
  %983 = vrot.lane.b32.xlu0 %v316, 4
  %v984 = vpop.permute.xlu0 %983
  %985 = vrot.lane.b32.xlu0 %v330, 4
  %v986 = vpop.permute.xlu0 %985
  %987 = vrot.lane.b32.xlu0 %v340, 4
  %v988 = vpop.permute.xlu0 %987
  %989 = vrot.lane.b32.xlu0 %v354, 4
  %v990 = vpop.permute.xlu0 %989
  %991 = vrot.lane.b32.xlu0 %v364, 4
  %v992 = vpop.permute.xlu0 %991
  %993 = vrot.lane.b32.xlu0 %v378, 4
  %v994 = vpop.permute.xlu0 %993
  %995 = vrot.lane.b32.xlu0 %v388, 4
  %v996 = vpop.permute.xlu0 %995
  %997 = vrot.lane.b32.xlu0 %v402, 4
  %v998 = vpop.permute.xlu0 %997
  %999 = vrot.lane.b32.xlu0 %v412, 4
  %v1000 = vpop.permute.xlu0 %999
  %1001 = vrot.lane.b32.xlu0 %v426, 4
  %v1002 = vpop.permute.xlu0 %1001
  %1003 = vrot.lane.b32.xlu0 %v436, 4
  %v1004 = vpop.permute.xlu0 %1003
  %1005 = vrot.lane.b32.xlu0 %v450, 4
  %v1006 = vpop.permute.xlu0 %1005
  %1007 = vrot.lane.b32.xlu0 %v460, 4
  %v1008 = vpop.permute.xlu0 %1007
  %1009 = vrot.lane.b32.xlu0 %v474, 4
  %v1010 = vpop.permute.xlu0 %1009
  %1011 = vrot.lane.b32.xlu0 %v484, 4
  %v1012 = vpop.permute.xlu0 %1011
  %1013 = vrot.lane.b32.xlu0 %v498, 4
  %v1014 = vpop.permute.xlu0 %1013
  %1015 = vrot.lane.b32.xlu0 %v508, 4
  %v1016 = vpop.permute.xlu0 %1015
  %1017 = vrot.lane.b32.xlu0 %v522, 4
  %v1018 = vpop.permute.xlu0 %1017
  %1019 = vrot.lane.b32.xlu0 %v532, 4
  %v1020 = vpop.permute.xlu0 %1019
  %1021 = vrot.lane.b32.xlu0 %v546, 4
  %v1022 = vpop.permute.xlu0 %1021
  %1023 = vrot.lane.b32.xlu0 %v556, 4
  %v1024 = vpop.permute.xlu0 %1023
  %1025 = vrot.lane.b32.xlu0 %v570, 4
  %v1026 = vpop.permute.xlu0 %1025
  %1027 = vrot.lane.b32.xlu0 %v580, 4
  %v1028 = vpop.permute.xlu0 %1027
  %1029 = vrot.lane.b32.xlu0 %v594, 4
  %v1030 = vpop.permute.xlu0 %1029
  %1031 = vrot.lane.b32.xlu0 %v604, 4
  %v1032 = vpop.permute.xlu0 %1031
  %1033 = vrot.lane.b32.xlu0 %v618, 4
  %v1034 = vpop.permute.xlu0 %1033
  %1035 = vrot.lane.b32.xlu0 %v628, 4
  %v1036 = vpop.permute.xlu0 %1035
  %1037 = vrot.lane.b32.xlu0 %v642, 4
  %v1038 = vpop.permute.xlu0 %1037
  %1039 = vrot.lane.b32.xlu0 %v652, 4
  %v1040 = vpop.permute.xlu0 %1039
  %1041 = vrot.lane.b32.xlu0 %v666, 4
  %v1042 = vpop.permute.xlu0 %1041
  %1043 = vrot.lane.b32.xlu0 %v676, 4
  %v1044 = vpop.permute.xlu0 %1043
  %1045 = vrot.lane.b32.xlu0 %v690, 4
  %v1046 = vpop.permute.xlu0 %1045
  %1047 = vrot.lane.b32.xlu0 %v700, 4
  %v1048 = vpop.permute.xlu0 %1047
  %1049 = vrot.lane.b32.xlu0 %v714, 4
  %v1050 = vpop.permute.xlu0 %1049
  %1051 = vrot.lane.b32.xlu0 %v724, 4
  %v1052 = vpop.permute.xlu0 %1051
  %1053 = vrot.lane.b32.xlu0 %v738, 4
  %v1054 = vpop.permute.xlu0 %1053
  %1055 = vrot.lane.b32.xlu0 %v748, 4
  %v1056 = vpop.permute.xlu0 %1055
  %1057 = vrot.lane.b32.xlu0 %v762, 4
  %v1058 = vpop.permute.xlu0 %1057
  %1059 = vrot.lane.b32.xlu0 %v772, 4
  %v1060 = vpop.permute.xlu0 %1059
  %1061 = vrot.lane.b32.xlu0 %v786, 4
  %v1062 = vpop.permute.xlu0 %1061
  %1063 = vrot.lane.b32.xlu0 %v796, 4
  %v1064 = vpop.permute.xlu0 %1063
  %1065 = vrot.lane.b32.xlu0 %v810, 4
  %v1066 = vpop.permute.xlu0 %1065
  %1067 = vrot.lane.b32.xlu0 %v820, 4
  %v1068 = vpop.permute.xlu0 %1067
  %1069 = vrot.lane.b32.xlu0 %v834, 4
  %v1070 = vpop.permute.xlu0 %1069
  %1071 = vrot.lane.b32.xlu0 %v844, 4
  %v1072 = vpop.permute.xlu0 %1071
  %1073 = vrot.lane.b32.xlu0 %v858, 4
  %v1074 = vpop.permute.xlu0 %1073
  %1075 = vrot.lane.b32.xlu0 %v868, 4
  %v1076 = vpop.permute.xlu0 %1075
  %1077 = vrot.lane.b32.xlu0 %v882, 4
  %v1078 = vpop.permute.xlu0 %1077
  %1079 = vrot.lane.b32.xlu0 %v892, 4
  %v1080 = vpop.permute.xlu0 %1079
  %1081 = vrot.lane.b32.xlu0 %v906, 4
  %v1082 = vpop.permute.xlu0 %1081
  %1083 = vrot.lane.b32.xlu0 %v916, 4
  %v1084 = vpop.permute.xlu0 %1083
  %1085 = vrot.lane.b32.xlu0 %v930, 4
  %v1086 = vpop.permute.xlu0 %1085
  %1087 = vrot.lane.b32.xlu0 %v940, 4
  %v1088 = vpop.permute.xlu0 %1087
  %1089 = vrot.lane.b32.xlu0 %v954, 4
  %v1090 = vpop.permute.xlu0 %1089
  %1091 = vrot.lane.b32.xlu0 %v964, 4
  %v1092 = vpop.permute.xlu0 %1091
  %vm1157 = vcmask 60448
  %1158 = vst.msk [vmem:[#allocation2] sm:$0xf] %vm1157, %v966
  %1159 = vst.msk [vmem:[#allocation2 + $0x4] sm:$0xf] %vm1157, %v968
  %1160 = vst.msk [vmem:[#allocation2 + $0x8] sm:$0xf] %vm1157, %v970
  %1161 = vst.msk [vmem:[#allocation2 + $0xc] sm:$0xf] %vm1157, %v972
  %1162 = vst.msk [vmem:[#allocation2 + $0x10] sm:$0xf] %vm1157, %v974
  %1163 = vst.msk [vmem:[#allocation2 + $0x14] sm:$0xf] %vm1157, %v976
  %1164 = vst.msk [vmem:[#allocation2 + $0x18] sm:$0xf] %vm1157, %v978
  %1165 = vst.msk [vmem:[#allocation2 + $0x1c] sm:$0xf] %vm1157, %v980
  %1166 = vst.msk [vmem:[#allocation2 + $0x20] sm:$0xf] %vm1157, %v982
  %1167 = vst.msk [vmem:[#allocation2 + $0x24] sm:$0xf] %vm1157, %v984
  %1168 = vst.msk [vmem:[#allocation2 + $0x28] sm:$0xf] %vm1157, %v986
  %1169 = vst.msk [vmem:[#allocation2 + $0x2c] sm:$0xf] %vm1157, %v988
  %1170 = vst.msk [vmem:[#allocation2 + $0x30] sm:$0xf] %vm1157, %v990
  %1171 = vst.msk [vmem:[#allocation2 + $0x34] sm:$0xf] %vm1157, %v992
  %1172 = vst.msk [vmem:[#allocation2 + $0x38] sm:$0xf] %vm1157, %v994
  %1173 = vst.msk [vmem:[#allocation2 + $0x3c] sm:$0xf] %vm1157, %v996
  %1174 = vst.msk [vmem:[#allocation2 + $0x40] sm:$0xf] %vm1157, %v998
  %1175 = vst.msk [vmem:[#allocation2 + $0x44] sm:$0xf] %vm1157, %v1000
  %1176 = vst.msk [vmem:[#allocation2 + $0x48] sm:$0xf] %vm1157, %v1002
  %1177 = vst.msk [vmem:[#allocation2 + $0x4c] sm:$0xf] %vm1157, %v1004
  %1178 = vst.msk [vmem:[#allocation2 + $0x50] sm:$0xf] %vm1157, %v1006
  %1179 = vst.msk [vmem:[#allocation2 + $0x54] sm:$0xf] %vm1157, %v1008
  %1180 = vst.msk [vmem:[#allocation2 + $0x58] sm:$0xf] %vm1157, %v1010
  %1181 = vst.msk [vmem:[#allocation2 + $0x5c] sm:$0xf] %vm1157, %v1012
  %1182 = vst.msk [vmem:[#allocation2 + $0x60] sm:$0xf] %vm1157, %v1014
  %1183 = vst.msk [vmem:[#allocation2 + $0x64] sm:$0xf] %vm1157, %v1016
  %1184 = vst.msk [vmem:[#allocation2 + $0x68] sm:$0xf] %vm1157, %v1018
  %1185 = vst.msk [vmem:[#allocation2 + $0x6c] sm:$0xf] %vm1157, %v1020
  %1186 = vst.msk [vmem:[#allocation2 + $0x70] sm:$0xf] %vm1157, %v1022
  %1187 = vst.msk [vmem:[#allocation2 + $0x74] sm:$0xf] %vm1157, %v1024
  %1188 = vst.msk [vmem:[#allocation2 + $0x78] sm:$0xf] %vm1157, %v1026
  %1189 = vst.msk [vmem:[#allocation2 + $0x7c] sm:$0xf] %vm1157, %v1028
  %1190 = vst.msk [vmem:[#allocation2 + $0x80] sm:$0xf] %vm1157, %v1030
  %1191 = vst.msk [vmem:[#allocation2 + $0x84] sm:$0xf] %vm1157, %v1032
  %1192 = vst.msk [vmem:[#allocation2 + $0x88] sm:$0xf] %vm1157, %v1034
  %1193 = vst.msk [vmem:[#allocation2 + $0x8c] sm:$0xf] %vm1157, %v1036
  %1194 = vst.msk [vmem:[#allocation2 + $0x90] sm:$0xf] %vm1157, %v1038
  %1195 = vst.msk [vmem:[#allocation2 + $0x94] sm:$0xf] %vm1157, %v1040
  %1196 = vst.msk [vmem:[#allocation2 + $0x98] sm:$0xf] %vm1157, %v1042
  %1197 = vst.msk [vmem:[#allocation2 + $0x9c] sm:$0xf] %vm1157, %v1044
  %1198 = vst.msk [vmem:[#allocation2 + $0xa0] sm:$0xf] %vm1157, %v1046
  %1199 = vst.msk [vmem:[#allocation2 + $0xa4] sm:$0xf] %vm1157, %v1048
  %1200 = vst.msk [vmem:[#allocation2 + $0xa8] sm:$0xf] %vm1157, %v1050
  %1201 = vst.msk [vmem:[#allocation2 + $0xac] sm:$0xf] %vm1157, %v1052
  %1202 = vst.msk [vmem:[#allocation2 + $0xb0] sm:$0xf] %vm1157, %v1054
  %1203 = vst.msk [vmem:[#allocation2 + $0xb4] sm:$0xf] %vm1157, %v1056
  %1204 = vst.msk [vmem:[#allocation2 + $0xb8] sm:$0xf] %vm1157, %v1058
  %1205 = vst.msk [vmem:[#allocation2 + $0xbc] sm:$0xf] %vm1157, %v1060
  %1206 = vst.msk [vmem:[#allocation2 + $0xc0] sm:$0xf] %vm1157, %v1062
  %1207 = vst.msk [vmem:[#allocation2 + $0xc4] sm:$0xf] %vm1157, %v1064
  %1208 = vst.msk [vmem:[#allocation2 + $0xc8] sm:$0xf] %vm1157, %v1066
  %1209 = vst.msk [vmem:[#allocation2 + $0xcc] sm:$0xf] %vm1157, %v1068
  %1210 = vst.msk [vmem:[#allocation2 + $0xd0] sm:$0xf] %vm1157, %v1070
  %1211 = vst.msk [vmem:[#allocation2 + $0xd4] sm:$0xf] %vm1157, %v1072
  %1212 = vst.msk [vmem:[#allocation2 + $0xd8] sm:$0xf] %vm1157, %v1074
  %1213 = vst.msk [vmem:[#allocation2 + $0xdc] sm:$0xf] %vm1157, %v1076
  %1214 = vst.msk [vmem:[#allocation2 + $0xe0] sm:$0xf] %vm1157, %v1078
  %1215 = vst.msk [vmem:[#allocation2 + $0xe4] sm:$0xf] %vm1157, %v1080
  %1216 = vst.msk [vmem:[#allocation2 + $0xe8] sm:$0xf] %vm1157, %v1082
  %1217 = vst.msk [vmem:[#allocation2 + $0xec] sm:$0xf] %vm1157, %v1084
  %1218 = vst.msk [vmem:[#allocation2 + $0xf0] sm:$0xf] %vm1157, %v1086
  %1219 = vst.msk [vmem:[#allocation2 + $0xf4] sm:$0xf] %vm1157, %v1088
  %1220 = vst.msk [vmem:[#allocation2 + $0xf8] sm:$0xf] %vm1157, %v1090
  %1221 = vst.msk [vmem:[#allocation2 + $0xfc] sm:$0xf] %vm1157, %v1092
  %vm1318 = vcmask 1042432
  %vm1319 = vcmask 1046532
  %vm1320 = vmor %vm1318, %vm1319
  %v1321 = vrot.slane %v21, 5
  %v1322 = vrot.slane %v1321, 4
  %v1323 = vrot.slane %v22, 5
  %v1324 = vsel %vm1320, %v1322, %v1323
  %v1325 = vrot.slane %v1323, 4
  %v1326 = vrot.slane %v23, 5
  %v1327 = vsel %vm1320, %v1325, %v1326
  %v1328 = vrot.slane %v24, 5
  %v1329 = vrot.slane %v1328, 4
  %v1330 = vrot.slane %v25, 5
  %v1331 = vsel %vm1320, %v1329, %v1330
  %v1332 = vrot.slane %v1330, 4
  %v1333 = vrot.slane %v26, 5
  %v1334 = vsel %vm1320, %v1332, %v1333
  %v1335 = vrot.slane %v27, 5
  %v1336 = vrot.slane %v1335, 4
  %v1337 = vrot.slane %v28, 5
  %v1338 = vsel %vm1320, %v1336, %v1337
  %v1339 = vrot.slane %v1337, 4
  %v1340 = vrot.slane %v29, 5
  %v1341 = vsel %vm1320, %v1339, %v1340
  %v1342 = vrot.slane %v30, 5
  %v1343 = vrot.slane %v1342, 4
  %v1344 = vrot.slane %v31, 5
  %v1345 = vsel %vm1320, %v1343, %v1344
  %v1346 = vrot.slane %v1344, 4
  %v1347 = vrot.slane %v32, 5
  %v1348 = vsel %vm1320, %v1346, %v1347
  %v1349 = vrot.slane %v33, 5
  %v1350 = vrot.slane %v1349, 4
  %v1351 = vrot.slane %v34, 5
  %v1352 = vsel %vm1320, %v1350, %v1351
  %v1353 = vrot.slane %v1351, 4
  %v1354 = vrot.slane %v35, 5
  %v1355 = vsel %vm1320, %v1353, %v1354
  %v1356 = vrot.slane %v36, 5
  %v1357 = vrot.slane %v1356, 4
  %v1358 = vrot.slane %v37, 5
  %v1359 = vsel %vm1320, %v1357, %v1358
  %v1360 = vrot.slane %v1358, 4
  %v1361 = vrot.slane %v38, 5
  %v1362 = vsel %vm1320, %v1360, %v1361
  %v1363 = vrot.slane %v39, 5
  %v1364 = vrot.slane %v1363, 4
  %v1365 = vrot.slane %v40, 5
  %v1366 = vsel %vm1320, %v1364, %v1365
  %v1367 = vrot.slane %v1365, 4
  %v1368 = vrot.slane %v41, 5
  %v1369 = vsel %vm1320, %v1367, %v1368
  %v1370 = vrot.slane %v42, 5
  %v1371 = vrot.slane %v1370, 4
  %v1372 = vrot.slane %v43, 5
  %v1373 = vsel %vm1320, %v1371, %v1372
  %v1374 = vrot.slane %v1372, 4
  %v1375 = vrot.slane %v44, 5
  %v1376 = vsel %vm1320, %v1374, %v1375
  %v1377 = vrot.slane %v45, 5
  %v1378 = vrot.slane %v1377, 4
  %v1379 = vrot.slane %v46, 5
  %v1380 = vsel %vm1320, %v1378, %v1379
  %v1381 = vrot.slane %v1379, 4
  %v1382 = vrot.slane %v47, 5
  %v1383 = vsel %vm1320, %v1381, %v1382
  %v1384 = vrot.slane %v48, 5
  %v1385 = vrot.slane %v1384, 4
  %v1386 = vrot.slane %v49, 5
  %v1387 = vsel %vm1320, %v1385, %v1386
  %v1388 = vrot.slane %v1386, 4
  %v1389 = vrot.slane %v50, 5
  %v1390 = vsel %vm1320, %v1388, %v1389
  %v1391 = vrot.slane %v51, 5
  %v1392 = vrot.slane %v1391, 4
  %v1393 = vrot.slane %v52, 5
  %v1394 = vsel %vm1320, %v1392, %v1393
  %v1395 = vrot.slane %v1393, 4
  %v1396 = vrot.slane %v53, 5
  %v1397 = vsel %vm1320, %v1395, %v1396
  %v1398 = vrot.slane %v54, 5
  %v1399 = vrot.slane %v1398, 4
  %v1400 = vrot.slane %v55, 5
  %v1401 = vsel %vm1320, %v1399, %v1400
  %v1402 = vrot.slane %v1400, 4
  %v1403 = vrot.slane %v56, 5
  %v1404 = vsel %vm1320, %v1402, %v1403
  %v1405 = vrot.slane %v57, 5
  %v1406 = vrot.slane %v1405, 4
  %v1407 = vrot.slane %v58, 5
  %v1408 = vsel %vm1320, %v1406, %v1407
  %v1409 = vrot.slane %v1407, 4
  %v1410 = vrot.slane %v59, 5
  %v1411 = vsel %vm1320, %v1409, %v1410
  %v1412 = vrot.slane %v60, 5
  %v1413 = vrot.slane %v1412, 4
  %v1414 = vrot.slane %v61, 5
  %v1415 = vsel %vm1320, %v1413, %v1414
  %v1416 = vrot.slane %v1414, 4
  %v1417 = vrot.slane %v62, 5
  %v1418 = vsel %vm1320, %v1416, %v1417
  %v1419 = vrot.slane %v63, 5
  %v1420 = vrot.slane %v1419, 4
  %v1421 = vrot.slane %v64, 5
  %v1422 = vsel %vm1320, %v1420, %v1421
  %v1423 = vrot.slane %v1421, 4
  %v1424 = vrot.slane %v65, 5
  %v1425 = vsel %vm1320, %v1423, %v1424
  %v1426 = vrot.slane %v66, 5
  %v1427 = vrot.slane %v1426, 4
  %v1428 = vrot.slane %v67, 5
  %v1429 = vsel %vm1320, %v1427, %v1428
  %v1430 = vrot.slane %v1428, 4
  %v1431 = vrot.slane %v68, 5
  %v1432 = vsel %vm1320, %v1430, %v1431
  %v1433 = vrot.slane %v75, 5
  %v1434 = vrot.slane %v1433, 4
  %v1435 = vrot.slane %v76, 5
  %v1436 = vsel %vm1320, %v1434, %v1435
  %v1437 = vrot.slane %v1435, 4
  %v1438 = vrot.slane %v77, 5
  %v1439 = vsel %vm1320, %v1437, %v1438
  %v1440 = vrot.slane %v78, 5
  %v1441 = vrot.slane %v1440, 4
  %v1442 = vrot.slane %v79, 5
  %v1443 = vsel %vm1320, %v1441, %v1442
  %v1444 = vrot.slane %v1442, 4
  %v1445 = vrot.slane %v80, 5
  %v1446 = vsel %vm1320, %v1444, %v1445
  %v1447 = vrot.slane %v81, 5
  %v1448 = vrot.slane %v1447, 4
  %v1449 = vrot.slane %v82, 5
  %v1450 = vsel %vm1320, %v1448, %v1449
  %v1451 = vrot.slane %v1449, 4
  %v1452 = vrot.slane %v83, 5
  %v1453 = vsel %vm1320, %v1451, %v1452
  %v1454 = vrot.slane %v84, 5
  %v1455 = vrot.slane %v1454, 4
  %v1456 = vrot.slane %v85, 5
  %v1457 = vsel %vm1320, %v1455, %v1456
  %v1458 = vrot.slane %v1456, 4
  %v1459 = vrot.slane %v86, 5
  %v1460 = vsel %vm1320, %v1458, %v1459
  %v1461 = vrot.slane %v87, 5
  %v1462 = vrot.slane %v1461, 4
  %v1463 = vrot.slane %v88, 5
  %v1464 = vsel %vm1320, %v1462, %v1463
  %v1465 = vrot.slane %v1463, 4
  %v1466 = vrot.slane %v89, 5
  %v1467 = vsel %vm1320, %v1465, %v1466
  %v1468 = vrot.slane %v90, 5
  %v1469 = vrot.slane %v1468, 4
  %v1470 = vrot.slane %v91, 5
  %v1471 = vsel %vm1320, %v1469, %v1470
  %v1472 = vrot.slane %v1470, 4
  %v1473 = vrot.slane %v92, 5
  %v1474 = vsel %vm1320, %v1472, %v1473
  %v1475 = vrot.slane %v93, 5
  %v1476 = vrot.slane %v1475, 4
  %v1477 = vrot.slane %v94, 5
  %v1478 = vsel %vm1320, %v1476, %v1477
  %v1479 = vrot.slane %v1477, 4
  %v1480 = vrot.slane %v95, 5
  %v1481 = vsel %vm1320, %v1479, %v1480
  %v1482 = vrot.slane %v96, 5
  %v1483 = vrot.slane %v1482, 4
  %v1484 = vrot.slane %v97, 5
  %v1485 = vsel %vm1320, %v1483, %v1484
  %v1486 = vrot.slane %v1484, 4
  %v1487 = vrot.slane %v98, 5
  %v1488 = vsel %vm1320, %v1486, %v1487
  %v1489 = vrot.slane %v99, 5
  %v1490 = vrot.slane %v1489, 4
  %v1491 = vrot.slane %v100, 5
  %v1492 = vsel %vm1320, %v1490, %v1491
  %v1493 = vrot.slane %v1491, 4
  %v1494 = vrot.slane %v101, 5
  %v1495 = vsel %vm1320, %v1493, %v1494
  %v1496 = vrot.slane %v102, 5
  %v1497 = vrot.slane %v1496, 4
  %v1498 = vrot.slane %v103, 5
  %v1499 = vsel %vm1320, %v1497, %v1498
  %v1500 = vrot.slane %v1498, 4
  %v1501 = vrot.slane %v104, 5
  %v1502 = vsel %vm1320, %v1500, %v1501
  %v1503 = vrot.slane %v105, 5
  %v1504 = vrot.slane %v1503, 4
  %v1505 = vrot.slane %v106, 5
  %v1506 = vsel %vm1320, %v1504, %v1505
  %v1507 = vrot.slane %v1505, 4
  %v1508 = vrot.slane %v107, 5
  %v1509 = vsel %vm1320, %v1507, %v1508
  %v1510 = vrot.slane %v108, 5
  %v1511 = vrot.slane %v1510, 4
  %v1512 = vrot.slane %v109, 5
  %v1513 = vsel %vm1320, %v1511, %v1512
  %v1514 = vrot.slane %v1512, 4
  %v1515 = vrot.slane %v110, 5
  %v1516 = vsel %vm1320, %v1514, %v1515
  %v1517 = vrot.slane %v111, 5
  %v1518 = vrot.slane %v1517, 4
  %v1519 = vrot.slane %v112, 5
  %v1520 = vsel %vm1320, %v1518, %v1519
  %v1521 = vrot.slane %v1519, 4
  %v1522 = vrot.slane %v113, 5
  %v1523 = vsel %vm1320, %v1521, %v1522
  %v1524 = vrot.slane %v114, 5
  %v1525 = vrot.slane %v1524, 4
  %v1526 = vrot.slane %v115, 5
  %v1527 = vsel %vm1320, %v1525, %v1526
  %v1528 = vrot.slane %v1526, 4
  %v1529 = vrot.slane %v116, 5
  %v1530 = vsel %vm1320, %v1528, %v1529
  %v1531 = vrot.slane %v117, 5
  %v1532 = vrot.slane %v1531, 4
  %v1533 = vrot.slane %v118, 5
  %v1534 = vsel %vm1320, %v1532, %v1533
  %v1535 = vrot.slane %v1533, 4
  %v1536 = vrot.slane %v119, 5
  %v1537 = vsel %vm1320, %v1535, %v1536
  %v1538 = vrot.slane %v120, 5
  %v1539 = vrot.slane %v1538, 4
  %v1540 = vrot.slane %v121, 5
  %v1541 = vsel %vm1320, %v1539, %v1540
  %v1542 = vrot.slane %v1540, 4
  %v1543 = vrot.slane %v122, 5
  %v1544 = vsel %vm1320, %v1542, %v1543
  %1545 = vrot.lane.b32.xlu0 %v1324, 8
  %v1546 = vpop.permute.xlu0 %1545
  %1547 = vrot.lane.b32.xlu0 %v1327, 8
  %v1548 = vpop.permute.xlu0 %1547
  %1549 = vrot.lane.b32.xlu0 %v1331, 8
  %v1550 = vpop.permute.xlu0 %1549
  %1551 = vrot.lane.b32.xlu0 %v1334, 8
  %v1552 = vpop.permute.xlu0 %1551
  %1553 = vrot.lane.b32.xlu0 %v1338, 8
  %v1554 = vpop.permute.xlu0 %1553
  %1555 = vrot.lane.b32.xlu0 %v1341, 8
  %v1556 = vpop.permute.xlu0 %1555
  %1557 = vrot.lane.b32.xlu0 %v1345, 8
  %v1558 = vpop.permute.xlu0 %1557
  %1559 = vrot.lane.b32.xlu0 %v1348, 8
  %v1560 = vpop.permute.xlu0 %1559
  %1561 = vrot.lane.b32.xlu0 %v1352, 8
  %v1562 = vpop.permute.xlu0 %1561
  %1563 = vrot.lane.b32.xlu0 %v1355, 8
  %v1564 = vpop.permute.xlu0 %1563
  %1565 = vrot.lane.b32.xlu0 %v1359, 8
  %v1566 = vpop.permute.xlu0 %1565
  %1567 = vrot.lane.b32.xlu0 %v1362, 8
  %v1568 = vpop.permute.xlu0 %1567
  %1569 = vrot.lane.b32.xlu0 %v1366, 8
  %v1570 = vpop.permute.xlu0 %1569
  %1571 = vrot.lane.b32.xlu0 %v1369, 8
  %v1572 = vpop.permute.xlu0 %1571
  %1573 = vrot.lane.b32.xlu0 %v1373, 8
  %v1574 = vpop.permute.xlu0 %1573
  %1575 = vrot.lane.b32.xlu0 %v1376, 8
  %v1576 = vpop.permute.xlu0 %1575
  %1577 = vrot.lane.b32.xlu0 %v1380, 8
  %v1578 = vpop.permute.xlu0 %1577
  %1579 = vrot.lane.b32.xlu0 %v1383, 8
  %v1580 = vpop.permute.xlu0 %1579
  %1581 = vrot.lane.b32.xlu0 %v1387, 8
  %v1582 = vpop.permute.xlu0 %1581
  %1583 = vrot.lane.b32.xlu0 %v1390, 8
  %v1584 = vpop.permute.xlu0 %1583
  %1585 = vrot.lane.b32.xlu0 %v1394, 8
  %v1586 = vpop.permute.xlu0 %1585
  %1587 = vrot.lane.b32.xlu0 %v1397, 8
  %v1588 = vpop.permute.xlu0 %1587
  %1589 = vrot.lane.b32.xlu0 %v1401, 8
  %v1590 = vpop.permute.xlu0 %1589
  %1591 = vrot.lane.b32.xlu0 %v1404, 8
  %v1592 = vpop.permute.xlu0 %1591
  %1593 = vrot.lane.b32.xlu0 %v1408, 8
  %v1594 = vpop.permute.xlu0 %1593
  %1595 = vrot.lane.b32.xlu0 %v1411, 8
  %v1596 = vpop.permute.xlu0 %1595
  %1597 = vrot.lane.b32.xlu0 %v1415, 8
  %v1598 = vpop.permute.xlu0 %1597
  %1599 = vrot.lane.b32.xlu0 %v1418, 8
  %v1600 = vpop.permute.xlu0 %1599
  %1601 = vrot.lane.b32.xlu0 %v1422, 8
  %v1602 = vpop.permute.xlu0 %1601
  %1603 = vrot.lane.b32.xlu0 %v1425, 8
  %v1604 = vpop.permute.xlu0 %1603
  %1605 = vrot.lane.b32.xlu0 %v1429, 8
  %v1606 = vpop.permute.xlu0 %1605
  %1607 = vrot.lane.b32.xlu0 %v1432, 8
  %v1608 = vpop.permute.xlu0 %1607
  %1609 = vrot.lane.b32.xlu0 %v1436, 8
  %v1610 = vpop.permute.xlu0 %1609
  %1611 = vrot.lane.b32.xlu0 %v1439, 8
  %v1612 = vpop.permute.xlu0 %1611
  %1613 = vrot.lane.b32.xlu0 %v1443, 8
  %v1614 = vpop.permute.xlu0 %1613
  %1615 = vrot.lane.b32.xlu0 %v1446, 8
  %v1616 = vpop.permute.xlu0 %1615
  %1617 = vrot.lane.b32.xlu0 %v1450, 8
  %v1618 = vpop.permute.xlu0 %1617
  %1619 = vrot.lane.b32.xlu0 %v1453, 8
  %v1620 = vpop.permute.xlu0 %1619
  %1621 = vrot.lane.b32.xlu0 %v1457, 8
  %v1622 = vpop.permute.xlu0 %1621
  %1623 = vrot.lane.b32.xlu0 %v1460, 8
  %v1624 = vpop.permute.xlu0 %1623
  %1625 = vrot.lane.b32.xlu0 %v1464, 8
  %v1626 = vpop.permute.xlu0 %1625
  %1627 = vrot.lane.b32.xlu0 %v1467, 8
  %v1628 = vpop.permute.xlu0 %1627
  %1629 = vrot.lane.b32.xlu0 %v1471, 8
  %v1630 = vpop.permute.xlu0 %1629
  %1631 = vrot.lane.b32.xlu0 %v1474, 8
  %v1632 = vpop.permute.xlu0 %1631
  %1633 = vrot.lane.b32.xlu0 %v1478, 8
  %v1634 = vpop.permute.xlu0 %1633
  %1635 = vrot.lane.b32.xlu0 %v1481, 8
  %v1636 = vpop.permute.xlu0 %1635
  %1637 = vrot.lane.b32.xlu0 %v1485, 8
  %v1638 = vpop.permute.xlu0 %1637
  %1639 = vrot.lane.b32.xlu0 %v1488, 8
  %v1640 = vpop.permute.xlu0 %1639
  %1641 = vrot.lane.b32.xlu0 %v1492, 8
  %v1642 = vpop.permute.xlu0 %1641
  %1643 = vrot.lane.b32.xlu0 %v1495, 8
  %v1644 = vpop.permute.xlu0 %1643
  %1645 = vrot.lane.b32.xlu0 %v1499, 8
  %v1646 = vpop.permute.xlu0 %1645
  %1647 = vrot.lane.b32.xlu0 %v1502, 8
  %v1648 = vpop.permute.xlu0 %1647
  %1649 = vrot.lane.b32.xlu0 %v1506, 8
  %v1650 = vpop.permute.xlu0 %1649
  %1651 = vrot.lane.b32.xlu0 %v1509, 8
  %v1652 = vpop.permute.xlu0 %1651
  %1653 = vrot.lane.b32.xlu0 %v1513, 8
  %v1654 = vpop.permute.xlu0 %1653
  %1655 = vrot.lane.b32.xlu0 %v1516, 8
  %v1656 = vpop.permute.xlu0 %1655
  %1657 = vrot.lane.b32.xlu0 %v1520, 8
  %v1658 = vpop.permute.xlu0 %1657
  %1659 = vrot.lane.b32.xlu0 %v1523, 8
  %v1660 = vpop.permute.xlu0 %1659
  %1661 = vrot.lane.b32.xlu0 %v1527, 8
  %v1662 = vpop.permute.xlu0 %1661
  %1663 = vrot.lane.b32.xlu0 %v1530, 8
  %v1664 = vpop.permute.xlu0 %1663
  %1665 = vrot.lane.b32.xlu0 %v1534, 8
  %v1666 = vpop.permute.xlu0 %1665
  %1667 = vrot.lane.b32.xlu0 %v1537, 8
  %v1668 = vpop.permute.xlu0 %1667
  %1669 = vrot.lane.b32.xlu0 %v1541, 8
  %v1670 = vpop.permute.xlu0 %1669
  %1671 = vrot.lane.b32.xlu0 %v1544, 8
  %v1672 = vpop.permute.xlu0 %1671
  %vm1737 = vcmask 93248
  %1738 = vst.msk [vmem:[#allocation2] sm:$0xf] %vm1737, %v1546
  %1739 = vst.msk [vmem:[#allocation2 + $0x4] sm:$0xf] %vm1737, %v1548
  %1740 = vst.msk [vmem:[#allocation2 + $0x8] sm:$0xf] %vm1737, %v1550
  %1741 = vst.msk [vmem:[#allocation2 + $0xc] sm:$0xf] %vm1737, %v1552
  %1742 = vst.msk [vmem:[#allocation2 + $0x10] sm:$0xf] %vm1737, %v1554
  %1743 = vst.msk [vmem:[#allocation2 + $0x14] sm:$0xf] %vm1737, %v1556
  %1744 = vst.msk [vmem:[#allocation2 + $0x18] sm:$0xf] %vm1737, %v1558
  %1745 = vst.msk [vmem:[#allocation2 + $0x1c] sm:$0xf] %vm1737, %v1560
  %1746 = vst.msk [vmem:[#allocation2 + $0x20] sm:$0xf] %vm1737, %v1562
  %1747 = vst.msk [vmem:[#allocation2 + $0x24] sm:$0xf] %vm1737, %v1564
  %1748 = vst.msk [vmem:[#allocation2 + $0x28] sm:$0xf] %vm1737, %v1566
  %1749 = vst.msk [vmem:[#allocation2 + $0x2c] sm:$0xf] %vm1737, %v1568
  %1750 = vst.msk [vmem:[#allocation2 + $0x30] sm:$0xf] %vm1737, %v1570
  %1751 = vst.msk [vmem:[#allocation2 + $0x34] sm:$0xf] %vm1737, %v1572
  %1752 = vst.msk [vmem:[#allocation2 + $0x38] sm:$0xf] %vm1737, %v1574
  %1753 = vst.msk [vmem:[#allocation2 + $0x3c] sm:$0xf] %vm1737, %v1576
  %1754 = vst.msk [vmem:[#allocation2 + $0x40] sm:$0xf] %vm1737, %v1578
  %1755 = vst.msk [vmem:[#allocation2 + $0x44] sm:$0xf] %vm1737, %v1580
  %1756 = vst.msk [vmem:[#allocation2 + $0x48] sm:$0xf] %vm1737, %v1582
  %1757 = vst.msk [vmem:[#allocation2 + $0x4c] sm:$0xf] %vm1737, %v1584
  %1758 = vst.msk [vmem:[#allocation2 + $0x50] sm:$0xf] %vm1737, %v1586
  %1759 = vst.msk [vmem:[#allocation2 + $0x54] sm:$0xf] %vm1737, %v1588
  %1760 = vst.msk [vmem:[#allocation2 + $0x58] sm:$0xf] %vm1737, %v1590
  %1761 = vst.msk [vmem:[#allocation2 + $0x5c] sm:$0xf] %vm1737, %v1592
  %1762 = vst.msk [vmem:[#allocation2 + $0x60] sm:$0xf] %vm1737, %v1594
  %1763 = vst.msk [vmem:[#allocation2 + $0x64] sm:$0xf] %vm1737, %v1596
  %1764 = vst.msk [vmem:[#allocation2 + $0x68] sm:$0xf] %vm1737, %v1598
  %1765 = vst.msk [vmem:[#allocation2 + $0x6c] sm:$0xf] %vm1737, %v1600
  %1766 = vst.msk [vmem:[#allocation2 + $0x70] sm:$0xf] %vm1737, %v1602
  %1767 = vst.msk [vmem:[#allocation2 + $0x74] sm:$0xf] %vm1737, %v1604
  %1768 = vst.msk [vmem:[#allocation2 + $0x78] sm:$0xf] %vm1737, %v1606
  %1769 = vst.msk [vmem:[#allocation2 + $0x7c] sm:$0xf] %vm1737, %v1608
  %1770 = vst.msk [vmem:[#allocation2 + $0x80] sm:$0xf] %vm1737, %v1610
  %1771 = vst.msk [vmem:[#allocation2 + $0x84] sm:$0xf] %vm1737, %v1612
  %1772 = vst.msk [vmem:[#allocation2 + $0x88] sm:$0xf] %vm1737, %v1614
  %1773 = vst.msk [vmem:[#allocation2 + $0x8c] sm:$0xf] %vm1737, %v1616
  %1774 = vst.msk [vmem:[#allocation2 + $0x90] sm:$0xf] %vm1737, %v1618
  %1775 = vst.msk [vmem:[#allocation2 + $0x94] sm:$0xf] %vm1737, %v1620
  %1776 = vst.msk [vmem:[#allocation2 + $0x98] sm:$0xf] %vm1737, %v1622
  %1777 = vst.msk [vmem:[#allocation2 + $0x9c] sm:$0xf] %vm1737, %v1624
  %1778 = vst.msk [vmem:[#allocation2 + $0xa0] sm:$0xf] %vm1737, %v1626
  %1779 = vst.msk [vmem:[#allocation2 + $0xa4] sm:$0xf] %vm1737, %v1628
  %1780 = vst.msk [vmem:[#allocation2 + $0xa8] sm:$0xf] %vm1737, %v1630
  %1781 = vst.msk [vmem:[#allocation2 + $0xac] sm:$0xf] %vm1737, %v1632
  %1782 = vst.msk [vmem:[#allocation2 + $0xb0] sm:$0xf] %vm1737, %v1634
  %1783 = vst.msk [vmem:[#allocation2 + $0xb4] sm:$0xf] %vm1737, %v1636
  %1784 = vst.msk [vmem:[#allocation2 + $0xb8] sm:$0xf] %vm1737, %v1638
  %1785 = vst.msk [vmem:[#allocation2 + $0xbc] sm:$0xf] %vm1737, %v1640
  %1786 = vst.msk [vmem:[#allocation2 + $0xc0] sm:$0xf] %vm1737, %v1642
  %1787 = vst.msk [vmem:[#allocation2 + $0xc4] sm:$0xf] %vm1737, %v1644
  %1788 = vst.msk [vmem:[#allocation2 + $0xc8] sm:$0xf] %vm1737, %v1646
  %1789 = vst.msk [vmem:[#allocation2 + $0xcc] sm:$0xf] %vm1737, %v1648
  %1790 = vst.msk [vmem:[#allocation2 + $0xd0] sm:$0xf] %vm1737, %v1650
  %1791 = vst.msk [vmem:[#allocation2 + $0xd4] sm:$0xf] %vm1737, %v1652
  %1792 = vst.msk [vmem:[#allocation2 + $0xd8] sm:$0xf] %vm1737, %v1654
  %1793 = vst.msk [vmem:[#allocation2 + $0xdc] sm:$0xf] %vm1737, %v1656
  %1794 = vst.msk [vmem:[#allocation2 + $0xe0] sm:$0xf] %vm1737, %v1658
  %1795 = vst.msk [vmem:[#allocation2 + $0xe4] sm:$0xf] %vm1737, %v1660
  %1796 = vst.msk [vmem:[#allocation2 + $0xe8] sm:$0xf] %vm1737, %v1662
  %1797 = vst.msk [vmem:[#allocation2 + $0xec] sm:$0xf] %vm1737, %v1664
  %1798 = vst.msk [vmem:[#allocation2 + $0xf0] sm:$0xf] %vm1737, %v1666
  %1799 = vst.msk [vmem:[#allocation2 + $0xf4] sm:$0xf] %vm1737, %v1668
  %1800 = vst.msk [vmem:[#allocation2 + $0xf8] sm:$0xf] %vm1737, %v1670
  %1801 = vst.msk [vmem:[#allocation2 + $0xfc] sm:$0xf] %vm1737, %v1672
  %1806 = vrot.lane.b32.xlu0 %v24, 12
  %v1807 = vpop.permute.xlu0 %1806
  %1808 = vrot.lane.b32.xlu0 %v25, 12
  %v1809 = vpop.permute.xlu0 %1808
  %1810 = vrot.lane.b32.xlu0 %v27, 12
  %v1811 = vpop.permute.xlu0 %1810
  %1812 = vrot.lane.b32.xlu0 %v28, 12
  %v1813 = vpop.permute.xlu0 %1812
  %1814 = vrot.lane.b32.xlu0 %v30, 12
  %v1815 = vpop.permute.xlu0 %1814
  %1816 = vrot.lane.b32.xlu0 %v31, 12
  %v1817 = vpop.permute.xlu0 %1816
  %1818 = vrot.lane.b32.xlu0 %v33, 12
  %v1819 = vpop.permute.xlu0 %1818
  %1820 = vrot.lane.b32.xlu0 %v34, 12
  %v1821 = vpop.permute.xlu0 %1820
  %1822 = vrot.lane.b32.xlu0 %v36, 12
  %v1823 = vpop.permute.xlu0 %1822
  %1824 = vrot.lane.b32.xlu0 %v37, 12
  %v1825 = vpop.permute.xlu0 %1824
  %1826 = vrot.lane.b32.xlu0 %v39, 12
  %v1827 = vpop.permute.xlu0 %1826
  %1828 = vrot.lane.b32.xlu0 %v40, 12
  %v1829 = vpop.permute.xlu0 %1828
  %1830 = vrot.lane.b32.xlu0 %v42, 12
  %v1831 = vpop.permute.xlu0 %1830
  %1832 = vrot.lane.b32.xlu0 %v43, 12
  %v1833 = vpop.permute.xlu0 %1832
  %1834 = vrot.lane.b32.xlu0 %v45, 12
  %v1835 = vpop.permute.xlu0 %1834
  %1836 = vrot.lane.b32.xlu0 %v46, 12
  %v1837 = vpop.permute.xlu0 %1836
  %1838 = vrot.lane.b32.xlu0 %v48, 12
  %v1839 = vpop.permute.xlu0 %1838
  %1840 = vrot.lane.b32.xlu0 %v49, 12
  %v1841 = vpop.permute.xlu0 %1840
  %1842 = vrot.lane.b32.xlu0 %v51, 12
  %v1843 = vpop.permute.xlu0 %1842
  %1844 = vrot.lane.b32.xlu0 %v52, 12
  %v1845 = vpop.permute.xlu0 %1844
  %1846 = vrot.lane.b32.xlu0 %v54, 12
  %v1847 = vpop.permute.xlu0 %1846
  %1848 = vrot.lane.b32.xlu0 %v55, 12
  %v1849 = vpop.permute.xlu0 %1848
  %1850 = vrot.lane.b32.xlu0 %v57, 12
  %v1851 = vpop.permute.xlu0 %1850
  %1852 = vrot.lane.b32.xlu0 %v58, 12
  %v1853 = vpop.permute.xlu0 %1852
  %1854 = vrot.lane.b32.xlu0 %v60, 12
  %v1855 = vpop.permute.xlu0 %1854
  %1856 = vrot.lane.b32.xlu0 %v61, 12
  %v1857 = vpop.permute.xlu0 %1856
  %1858 = vrot.lane.b32.xlu0 %v63, 12
  %v1859 = vpop.permute.xlu0 %1858
  %1860 = vrot.lane.b32.xlu0 %v64, 12
  %v1861 = vpop.permute.xlu0 %1860
  %1862 = vrot.lane.b32.xlu0 %v66, 12
  %v1863 = vpop.permute.xlu0 %1862
  %1864 = vrot.lane.b32.xlu0 %v67, 12
  %v1865 = vpop.permute.xlu0 %1864
  %1866 = vrot.lane.b32.xlu0 %v69, 12
  %v1867 = vpop.permute.xlu0 %1866
  %1868 = vrot.lane.b32.xlu0 %v70, 12
  %v1869 = vpop.permute.xlu0 %1868
  %1870 = vrot.lane.b32.xlu0 %v78, 12
  %v1871 = vpop.permute.xlu0 %1870
  %1872 = vrot.lane.b32.xlu0 %v79, 12
  %v1873 = vpop.permute.xlu0 %1872
  %1874 = vrot.lane.b32.xlu0 %v81, 12
  %v1875 = vpop.permute.xlu0 %1874
  %1876 = vrot.lane.b32.xlu0 %v82, 12
  %v1877 = vpop.permute.xlu0 %1876
  %1878 = vrot.lane.b32.xlu0 %v84, 12
  %v1879 = vpop.permute.xlu0 %1878
  %1880 = vrot.lane.b32.xlu0 %v85, 12
  %v1881 = vpop.permute.xlu0 %1880
  %1882 = vrot.lane.b32.xlu0 %v87, 12
  %v1883 = vpop.permute.xlu0 %1882
  %1884 = vrot.lane.b32.xlu0 %v88, 12
  %v1885 = vpop.permute.xlu0 %1884
  %1886 = vrot.lane.b32.xlu0 %v90, 12
  %v1887 = vpop.permute.xlu0 %1886
  %1888 = vrot.lane.b32.xlu0 %v91, 12
  %v1889 = vpop.permute.xlu0 %1888
  %1890 = vrot.lane.b32.xlu0 %v93, 12
  %v1891 = vpop.permute.xlu0 %1890
  %1892 = vrot.lane.b32.xlu0 %v94, 12
  %v1893 = vpop.permute.xlu0 %1892
  %1894 = vrot.lane.b32.xlu0 %v96, 12
  %v1895 = vpop.permute.xlu0 %1894
  %1896 = vrot.lane.b32.xlu0 %v97, 12
  %v1897 = vpop.permute.xlu0 %1896
  %1898 = vrot.lane.b32.xlu0 %v99, 12
  %v1899 = vpop.permute.xlu0 %1898
  %1900 = vrot.lane.b32.xlu0 %v100, 12
  %v1901 = vpop.permute.xlu0 %1900
  %1902 = vrot.lane.b32.xlu0 %v102, 12
  %v1903 = vpop.permute.xlu0 %1902
  %1904 = vrot.lane.b32.xlu0 %v103, 12
  %v1905 = vpop.permute.xlu0 %1904
  %1906 = vrot.lane.b32.xlu0 %v105, 12
  %v1907 = vpop.permute.xlu0 %1906
  %1908 = vrot.lane.b32.xlu0 %v106, 12
  %v1909 = vpop.permute.xlu0 %1908
  %1910 = vrot.lane.b32.xlu0 %v108, 12
  %v1911 = vpop.permute.xlu0 %1910
  %1912 = vrot.lane.b32.xlu0 %v109, 12
  %v1913 = vpop.permute.xlu0 %1912
  %1914 = vrot.lane.b32.xlu0 %v111, 12
  %v1915 = vpop.permute.xlu0 %1914
  %1916 = vrot.lane.b32.xlu0 %v112, 12
  %v1917 = vpop.permute.xlu0 %1916
  %1918 = vrot.lane.b32.xlu0 %v114, 12
  %v1919 = vpop.permute.xlu0 %1918
  %1920 = vrot.lane.b32.xlu0 %v115, 12
  %v1921 = vpop.permute.xlu0 %1920
  %1922 = vrot.lane.b32.xlu0 %v117, 12
  %v1923 = vpop.permute.xlu0 %1922
  %1924 = vrot.lane.b32.xlu0 %v118, 12
  %v1925 = vpop.permute.xlu0 %1924
  %1926 = vrot.lane.b32.xlu0 %v120, 12
  %v1927 = vpop.permute.xlu0 %1926
  %1928 = vrot.lane.b32.xlu0 %v121, 12
  %v1929 = vpop.permute.xlu0 %1928
  %1930 = vrot.lane.b32.xlu0 %v123, 12
  %v1931 = vpop.permute.xlu0 %1930
  %1932 = vrot.lane.b32.xlu0 %v124, 12
  %v1933 = vpop.permute.xlu0 %1932
  %vm1998 = vcmask 126048
  %1999 = vst.msk [vmem:[#allocation2] sm:$0xf] %vm1998, %v1807
  %2000 = vst.msk [vmem:[#allocation2 + $0x4] sm:$0xf] %vm1998, %v1809
  %2001 = vst.msk [vmem:[#allocation2 + $0x8] sm:$0xf] %vm1998, %v1811
  %2002 = vst.msk [vmem:[#allocation2 + $0xc] sm:$0xf] %vm1998, %v1813
  %2003 = vst.msk [vmem:[#allocation2 + $0x10] sm:$0xf] %vm1998, %v1815
  %2004 = vst.msk [vmem:[#allocation2 + $0x14] sm:$0xf] %vm1998, %v1817
  %2005 = vst.msk [vmem:[#allocation2 + $0x18] sm:$0xf] %vm1998, %v1819
  %2006 = vst.msk [vmem:[#allocation2 + $0x1c] sm:$0xf] %vm1998, %v1821
  %2007 = vst.msk [vmem:[#allocation2 + $0x20] sm:$0xf] %vm1998, %v1823
  %2008 = vst.msk [vmem:[#allocation2 + $0x24] sm:$0xf] %vm1998, %v1825
  %2009 = vst.msk [vmem:[#allocation2 + $0x28] sm:$0xf] %vm1998, %v1827
  %2010 = vst.msk [vmem:[#allocation2 + $0x2c] sm:$0xf] %vm1998, %v1829
  %2011 = vst.msk [vmem:[#allocation2 + $0x30] sm:$0xf] %vm1998, %v1831
  %2012 = vst.msk [vmem:[#allocation2 + $0x34] sm:$0xf] %vm1998, %v1833
  %2013 = vst.msk [vmem:[#allocation2 + $0x38] sm:$0xf] %vm1998, %v1835
  %2014 = vst.msk [vmem:[#allocation2 + $0x3c] sm:$0xf] %vm1998, %v1837
  %2015 = vst.msk [vmem:[#allocation2 + $0x40] sm:$0xf] %vm1998, %v1839
  %2016 = vst.msk [vmem:[#allocation2 + $0x44] sm:$0xf] %vm1998, %v1841
  %2017 = vst.msk [vmem:[#allocation2 + $0x48] sm:$0xf] %vm1998, %v1843
  %2018 = vst.msk [vmem:[#allocation2 + $0x4c] sm:$0xf] %vm1998, %v1845
  %2019 = vst.msk [vmem:[#allocation2 + $0x50] sm:$0xf] %vm1998, %v1847
  %2020 = vst.msk [vmem:[#allocation2 + $0x54] sm:$0xf] %vm1998, %v1849
  %2021 = vst.msk [vmem:[#allocation2 + $0x58] sm:$0xf] %vm1998, %v1851
  %2022 = vst.msk [vmem:[#allocation2 + $0x5c] sm:$0xf] %vm1998, %v1853
  %2023 = vst.msk [vmem:[#allocation2 + $0x60] sm:$0xf] %vm1998, %v1855
  %2024 = vst.msk [vmem:[#allocation2 + $0x64] sm:$0xf] %vm1998, %v1857
  %2025 = vst.msk [vmem:[#allocation2 + $0x68] sm:$0xf] %vm1998, %v1859
  %2026 = vst.msk [vmem:[#allocation2 + $0x6c] sm:$0xf] %vm1998, %v1861
  %2027 = vst.msk [vmem:[#allocation2 + $0x70] sm:$0xf] %vm1998, %v1863
  %2028 = vst.msk [vmem:[#allocation2 + $0x74] sm:$0xf] %vm1998, %v1865
  %2029 = vst.msk [vmem:[#allocation2 + $0x78] sm:$0xf] %vm1998, %v1867
  %2030 = vst.msk [vmem:[#allocation2 + $0x7c] sm:$0xf] %vm1998, %v1869
  %2031 = vst.msk [vmem:[#allocation2 + $0x80] sm:$0xf] %vm1998, %v1871
  %2032 = vst.msk [vmem:[#allocation2 + $0x84] sm:$0xf] %vm1998, %v1873
  %2033 = vst.msk [vmem:[#allocation2 + $0x88] sm:$0xf] %vm1998, %v1875
  %2034 = vst.msk [vmem:[#allocation2 + $0x8c] sm:$0xf] %vm1998, %v1877
  %2035 = vst.msk [vmem:[#allocation2 + $0x90] sm:$0xf] %vm1998, %v1879
  %2036 = vst.msk [vmem:[#allocation2 + $0x94] sm:$0xf] %vm1998, %v1881
  %2037 = vst.msk [vmem:[#allocation2 + $0x98] sm:$0xf] %vm1998, %v1883
  %2038 = vst.msk [vmem:[#allocation2 + $0x9c] sm:$0xf] %vm1998, %v1885
  %2039 = vst.msk [vmem:[#allocation2 + $0xa0] sm:$0xf] %vm1998, %v1887
  %2040 = vst.msk [vmem:[#allocation2 + $0xa4] sm:$0xf] %vm1998, %v1889
  %2041 = vst.msk [vmem:[#allocation2 + $0xa8] sm:$0xf] %vm1998, %v1891
  %2042 = vst.msk [vmem:[#allocation2 + $0xac] sm:$0xf] %vm1998, %v1893
  %2043 = vst.msk [vmem:[#allocation2 + $0xb0] sm:$0xf] %vm1998, %v1895
  %2044 = vst.msk [vmem:[#allocation2 + $0xb4] sm:$0xf] %vm1998, %v1897
  %2045 = vst.msk [vmem:[#allocation2 + $0xb8] sm:$0xf] %vm1998, %v1899
  %2046 = vst.msk [vmem:[#allocation2 + $0xbc] sm:$0xf] %vm1998, %v1901
  %2047 = vst.msk [vmem:[#allocation2 + $0xc0] sm:$0xf] %vm1998, %v1903
  %2048 = vst.msk [vmem:[#allocation2 + $0xc4] sm:$0xf] %vm1998, %v1905
  %2049 = vst.msk [vmem:[#allocation2 + $0xc8] sm:$0xf] %vm1998, %v1907
  %2050 = vst.msk [vmem:[#allocation2 + $0xcc] sm:$0xf] %vm1998, %v1909
  %2051 = vst.msk [vmem:[#allocation2 + $0xd0] sm:$0xf] %vm1998, %v1911
  %2052 = vst.msk [vmem:[#allocation2 + $0xd4] sm:$0xf] %vm1998, %v1913
  %2053 = vst.msk [vmem:[#allocation2 + $0xd8] sm:$0xf] %vm1998, %v1915
  %2054 = vst.msk [vmem:[#allocation2 + $0xdc] sm:$0xf] %vm1998, %v1917
  %2055 = vst.msk [vmem:[#allocation2 + $0xe0] sm:$0xf] %vm1998, %v1919
  %2056 = vst.msk [vmem:[#allocation2 + $0xe4] sm:$0xf] %vm1998, %v1921
  %2057 = vst.msk [vmem:[#allocation2 + $0xe8] sm:$0xf] %vm1998, %v1923
  %2058 = vst.msk [vmem:[#allocation2 + $0xec] sm:$0xf] %vm1998, %v1925
  %2059 = vst.msk [vmem:[#allocation2 + $0xf0] sm:$0xf] %vm1998, %v1927
  %2060 = vst.msk [vmem:[#allocation2 + $0xf4] sm:$0xf] %vm1998, %v1929
  %2061 = vst.msk [vmem:[#allocation2 + $0xf8] sm:$0xf] %vm1998, %v1931
  %2062 = vst.msk [vmem:[#allocation2 + $0xfc] sm:$0xf] %vm1998, %v1933
  %v2064 = vshrl.u32 %v69, 16
  %v2066 = vrot.slane %v2064, 4
  %v2067 = vshll.u32 %v69, 16
  %v2069 = vrot.slane %v2067, 5
  %v2070 = vor.u32 %v2066, %v2069
  %v2071 = vrot.slane %v2070, 4
  %v2073 = vshll.u32 %v70, 16
  %v2075 = vrot.slane %v2073, 5
  %v2076 = vsel %vm196, %v2071, %v2075
  %v2077 = vshrl.u32 %v70, 16
  %v2079 = vrot.slane %v2077, 4
  %v2080 = vor.u32 %v2079, %v2075
  %v2081 = vrot.slane %v2080, 4
  %v2083 = vshll.u32 %v71, 16
  %v2085 = vrot.slane %v2083, 5
  %v2086 = vsel %vm196, %v2081, %v2085
  %v2088 = vshrl.u32 %v123, 16
  %v2090 = vrot.slane %v2088, 4
  %v2091 = vshll.u32 %v123, 16
  %v2093 = vrot.slane %v2091, 5
  %v2094 = vor.u32 %v2090, %v2093
  %v2095 = vrot.slane %v2094, 4
  %v2097 = vshll.u32 %v124, 16
  %v2099 = vrot.slane %v2097, 5
  %v2100 = vsel %vm196, %v2095, %v2099
  %v2101 = vshrl.u32 %v124, 16
  %v2103 = vrot.slane %v2101, 4
  %v2104 = vor.u32 %v2103, %v2099
  %v2105 = vrot.slane %v2104, 4
  %v2107 = vshll.u32 %v125, 16
  %v2109 = vrot.slane %v2107, 5
  %v2110 = vsel %vm196, %v2105, %v2109
  %2111 = vrot.lane.b32.xlu0 %v234, 16
  %v2112 = vpop.permute.xlu0 %2111
  %2113 = vrot.lane.b32.xlu0 %v244, 16
  %v2114 = vpop.permute.xlu0 %2113
  %2115 = vrot.lane.b32.xlu0 %v258, 16
  %v2116 = vpop.permute.xlu0 %2115
  %2117 = vrot.lane.b32.xlu0 %v268, 16
  %v2118 = vpop.permute.xlu0 %2117
  %2119 = vrot.lane.b32.xlu0 %v282, 16
  %v2120 = vpop.permute.xlu0 %2119
  %2121 = vrot.lane.b32.xlu0 %v292, 16
  %v2122 = vpop.permute.xlu0 %2121
  %2123 = vrot.lane.b32.xlu0 %v306, 16
  %v2124 = vpop.permute.xlu0 %2123
  %2125 = vrot.lane.b32.xlu0 %v316, 16
  %v2126 = vpop.permute.xlu0 %2125
  %2127 = vrot.lane.b32.xlu0 %v330, 16
  %v2128 = vpop.permute.xlu0 %2127
  %2129 = vrot.lane.b32.xlu0 %v340, 16
  %v2130 = vpop.permute.xlu0 %2129
  %2131 = vrot.lane.b32.xlu0 %v354, 16
  %v2132 = vpop.permute.xlu0 %2131
  %2133 = vrot.lane.b32.xlu0 %v364, 16
  %v2134 = vpop.permute.xlu0 %2133
  %2135 = vrot.lane.b32.xlu0 %v378, 16
  %v2136 = vpop.permute.xlu0 %2135
  %2137 = vrot.lane.b32.xlu0 %v388, 16
  %v2138 = vpop.permute.xlu0 %2137
  %2139 = vrot.lane.b32.xlu0 %v402, 16
  %v2140 = vpop.permute.xlu0 %2139
  %2141 = vrot.lane.b32.xlu0 %v412, 16
  %v2142 = vpop.permute.xlu0 %2141
  %2143 = vrot.lane.b32.xlu0 %v426, 16
  %v2144 = vpop.permute.xlu0 %2143
  %2145 = vrot.lane.b32.xlu0 %v436, 16
  %v2146 = vpop.permute.xlu0 %2145
  %2147 = vrot.lane.b32.xlu0 %v450, 16
  %v2148 = vpop.permute.xlu0 %2147
  %2149 = vrot.lane.b32.xlu0 %v460, 16
  %v2150 = vpop.permute.xlu0 %2149
  %2151 = vrot.lane.b32.xlu0 %v474, 16
  %v2152 = vpop.permute.xlu0 %2151
  %2153 = vrot.lane.b32.xlu0 %v484, 16
  %v2154 = vpop.permute.xlu0 %2153
  %2155 = vrot.lane.b32.xlu0 %v498, 16
  %v2156 = vpop.permute.xlu0 %2155
  %2157 = vrot.lane.b32.xlu0 %v508, 16
  %v2158 = vpop.permute.xlu0 %2157
  %2159 = vrot.lane.b32.xlu0 %v522, 16
  %v2160 = vpop.permute.xlu0 %2159
  %2161 = vrot.lane.b32.xlu0 %v532, 16
  %v2162 = vpop.permute.xlu0 %2161
  %2163 = vrot.lane.b32.xlu0 %v546, 16
  %v2164 = vpop.permute.xlu0 %2163
  %2165 = vrot.lane.b32.xlu0 %v556, 16
  %v2166 = vpop.permute.xlu0 %2165
  %2167 = vrot.lane.b32.xlu0 %v570, 16
  %v2168 = vpop.permute.xlu0 %2167
  %2169 = vrot.lane.b32.xlu0 %v580, 16
  %v2170 = vpop.permute.xlu0 %2169
  %2171 = vrot.lane.b32.xlu0 %v2076, 16
  %v2172 = vpop.permute.xlu0 %2171
  %2173 = vrot.lane.b32.xlu0 %v2086, 16
  %v2174 = vpop.permute.xlu0 %2173
  %2175 = vrot.lane.b32.xlu0 %v618, 16
  %v2176 = vpop.permute.xlu0 %2175
  %2177 = vrot.lane.b32.xlu0 %v628, 16
  %v2178 = vpop.permute.xlu0 %2177
  %2179 = vrot.lane.b32.xlu0 %v642, 16
  %v2180 = vpop.permute.xlu0 %2179
  %2181 = vrot.lane.b32.xlu0 %v652, 16
  %v2182 = vpop.permute.xlu0 %2181
  %2183 = vrot.lane.b32.xlu0 %v666, 16
  %v2184 = vpop.permute.xlu0 %2183
  %2185 = vrot.lane.b32.xlu0 %v676, 16
  %v2186 = vpop.permute.xlu0 %2185
  %2187 = vrot.lane.b32.xlu0 %v690, 16
  %v2188 = vpop.permute.xlu0 %2187
  %2189 = vrot.lane.b32.xlu0 %v700, 16
  %v2190 = vpop.permute.xlu0 %2189
  %2191 = vrot.lane.b32.xlu0 %v714, 16
  %v2192 = vpop.permute.xlu0 %2191
  %2193 = vrot.lane.b32.xlu0 %v724, 16
  %v2194 = vpop.permute.xlu0 %2193
  %2195 = vrot.lane.b32.xlu0 %v738, 16
  %v2196 = vpop.permute.xlu0 %2195
  %2197 = vrot.lane.b32.xlu0 %v748, 16
  %v2198 = vpop.permute.xlu0 %2197
  %2199 = vrot.lane.b32.xlu0 %v762, 16
  %v2200 = vpop.permute.xlu0 %2199
  %2201 = vrot.lane.b32.xlu0 %v772, 16
  %v2202 = vpop.permute.xlu0 %2201
  %2203 = vrot.lane.b32.xlu0 %v786, 16
  %v2204 = vpop.permute.xlu0 %2203
  %2205 = vrot.lane.b32.xlu0 %v796, 16
  %v2206 = vpop.permute.xlu0 %2205
  %2207 = vrot.lane.b32.xlu0 %v810, 16
  %v2208 = vpop.permute.xlu0 %2207
  %2209 = vrot.lane.b32.xlu0 %v820, 16
  %v2210 = vpop.permute.xlu0 %2209
  %2211 = vrot.lane.b32.xlu0 %v834, 16
  %v2212 = vpop.permute.xlu0 %2211
  %2213 = vrot.lane.b32.xlu0 %v844, 16
  %v2214 = vpop.permute.xlu0 %2213
  %2215 = vrot.lane.b32.xlu0 %v858, 16
  %v2216 = vpop.permute.xlu0 %2215
  %2217 = vrot.lane.b32.xlu0 %v868, 16
  %v2218 = vpop.permute.xlu0 %2217
  %2219 = vrot.lane.b32.xlu0 %v882, 16
  %v2220 = vpop.permute.xlu0 %2219
  %2221 = vrot.lane.b32.xlu0 %v892, 16
  %v2222 = vpop.permute.xlu0 %2221
  %2223 = vrot.lane.b32.xlu0 %v906, 16
  %v2224 = vpop.permute.xlu0 %2223
  %2225 = vrot.lane.b32.xlu0 %v916, 16
  %v2226 = vpop.permute.xlu0 %2225
  %2227 = vrot.lane.b32.xlu0 %v930, 16
  %v2228 = vpop.permute.xlu0 %2227
  %2229 = vrot.lane.b32.xlu0 %v940, 16
  %v2230 = vpop.permute.xlu0 %2229
  %2231 = vrot.lane.b32.xlu0 %v954, 16
  %v2232 = vpop.permute.xlu0 %2231
  %2233 = vrot.lane.b32.xlu0 %v964, 16
  %v2234 = vpop.permute.xlu0 %2233
  %2235 = vrot.lane.b32.xlu0 %v2100, 16
  %v2236 = vpop.permute.xlu0 %2235
  %2237 = vrot.lane.b32.xlu0 %v2110, 16
  %v2238 = vpop.permute.xlu0 %2237
  %vm2303 = vcmask 158848
  %2304 = vst.msk [vmem:[#allocation2] sm:$0xf] %vm2303, %v2112
  %2305 = vst.msk [vmem:[#allocation2 + $0x4] sm:$0xf] %vm2303, %v2114
  %2306 = vst.msk [vmem:[#allocation2 + $0x8] sm:$0xf] %vm2303, %v2116
  %2307 = vst.msk [vmem:[#allocation2 + $0xc] sm:$0xf] %vm2303, %v2118
  %2308 = vst.msk [vmem:[#allocation2 + $0x10] sm:$0xf] %vm2303, %v2120
  %2309 = vst.msk [vmem:[#allocation2 + $0x14] sm:$0xf] %vm2303, %v2122
  %2310 = vst.msk [vmem:[#allocation2 + $0x18] sm:$0xf] %vm2303, %v2124
  %2311 = vst.msk [vmem:[#allocation2 + $0x1c] sm:$0xf] %vm2303, %v2126
  %2312 = vst.msk [vmem:[#allocation2 + $0x20] sm:$0xf] %vm2303, %v2128
  %2313 = vst.msk [vmem:[#allocation2 + $0x24] sm:$0xf] %vm2303, %v2130
  %2314 = vst.msk [vmem:[#allocation2 + $0x28] sm:$0xf] %vm2303, %v2132
  %2315 = vst.msk [vmem:[#allocation2 + $0x2c] sm:$0xf] %vm2303, %v2134
  %2316 = vst.msk [vmem:[#allocation2 + $0x30] sm:$0xf] %vm2303, %v2136
  %2317 = vst.msk [vmem:[#allocation2 + $0x34] sm:$0xf] %vm2303, %v2138
  %2318 = vst.msk [vmem:[#allocation2 + $0x38] sm:$0xf] %vm2303, %v2140
  %2319 = vst.msk [vmem:[#allocation2 + $0x3c] sm:$0xf] %vm2303, %v2142
  %2320 = vst.msk [vmem:[#allocation2 + $0x40] sm:$0xf] %vm2303, %v2144
  %2321 = vst.msk [vmem:[#allocation2 + $0x44] sm:$0xf] %vm2303, %v2146
  %2322 = vst.msk [vmem:[#allocation2 + $0x48] sm:$0xf] %vm2303, %v2148
  %2323 = vst.msk [vmem:[#allocation2 + $0x4c] sm:$0xf] %vm2303, %v2150
  %2324 = vst.msk [vmem:[#allocation2 + $0x50] sm:$0xf] %vm2303, %v2152
  %2325 = vst.msk [vmem:[#allocation2 + $0x54] sm:$0xf] %vm2303, %v2154
  %2326 = vst.msk [vmem:[#allocation2 + $0x58] sm:$0xf] %vm2303, %v2156
  %2327 = vst.msk [vmem:[#allocation2 + $0x5c] sm:$0xf] %vm2303, %v2158
  %2328 = vst.msk [vmem:[#allocation2 + $0x60] sm:$0xf] %vm2303, %v2160
  %2329 = vst.msk [vmem:[#allocation2 + $0x64] sm:$0xf] %vm2303, %v2162
  %2330 = vst.msk [vmem:[#allocation2 + $0x68] sm:$0xf] %vm2303, %v2164
  %2331 = vst.msk [vmem:[#allocation2 + $0x6c] sm:$0xf] %vm2303, %v2166
  %2332 = vst.msk [vmem:[#allocation2 + $0x70] sm:$0xf] %vm2303, %v2168
  %2333 = vst.msk [vmem:[#allocation2 + $0x74] sm:$0xf] %vm2303, %v2170
  %2334 = vst.msk [vmem:[#allocation2 + $0x78] sm:$0xf] %vm2303, %v2172
  %2335 = vst.msk [vmem:[#allocation2 + $0x7c] sm:$0xf] %vm2303, %v2174
  %2336 = vst.msk [vmem:[#allocation2 + $0x80] sm:$0xf] %vm2303, %v2176
  %2337 = vst.msk [vmem:[#allocation2 + $0x84] sm:$0xf] %vm2303, %v2178
  %2338 = vst.msk [vmem:[#allocation2 + $0x88] sm:$0xf] %vm2303, %v2180
  %2339 = vst.msk [vmem:[#allocation2 + $0x8c] sm:$0xf] %vm2303, %v2182
  %2340 = vst.msk [vmem:[#allocation2 + $0x90] sm:$0xf] %vm2303, %v2184
  %2341 = vst.msk [vmem:[#allocation2 + $0x94] sm:$0xf] %vm2303, %v2186
  %2342 = vst.msk [vmem:[#allocation2 + $0x98] sm:$0xf] %vm2303, %v2188
  %2343 = vst.msk [vmem:[#allocation2 + $0x9c] sm:$0xf] %vm2303, %v2190
  %2344 = vst.msk [vmem:[#allocation2 + $0xa0] sm:$0xf] %vm2303, %v2192
  %2345 = vst.msk [vmem:[#allocation2 + $0xa4] sm:$0xf] %vm2303, %v2194
  %2346 = vst.msk [vmem:[#allocation2 + $0xa8] sm:$0xf] %vm2303, %v2196
  %2347 = vst.msk [vmem:[#allocation2 + $0xac] sm:$0xf] %vm2303, %v2198
  %2348 = vst.msk [vmem:[#allocation2 + $0xb0] sm:$0xf] %vm2303, %v2200
  %2349 = vst.msk [vmem:[#allocation2 + $0xb4] sm:$0xf] %vm2303, %v2202
  %2350 = vst.msk [vmem:[#allocation2 + $0xb8] sm:$0xf] %vm2303, %v2204
  %2351 = vst.msk [vmem:[#allocation2 + $0xbc] sm:$0xf] %vm2303, %v2206
  %2352 = vst.msk [vmem:[#allocation2 + $0xc0] sm:$0xf] %vm2303, %v2208
  %2353 = vst.msk [vmem:[#allocation2 + $0xc4] sm:$0xf] %vm2303, %v2210
  %2354 = vst.msk [vmem:[#allocation2 + $0xc8] sm:$0xf] %vm2303, %v2212
  %2355 = vst.msk [vmem:[#allocation2 + $0xcc] sm:$0xf] %vm2303, %v2214
  %2356 = vst.msk [vmem:[#allocation2 + $0xd0] sm:$0xf] %vm2303, %v2216
  %2357 = vst.msk [vmem:[#allocation2 + $0xd4] sm:$0xf] %vm2303, %v2218
  %2358 = vst.msk [vmem:[#allocation2 + $0xd8] sm:$0xf] %vm2303, %v2220
  %2359 = vst.msk [vmem:[#allocation2 + $0xdc] sm:$0xf] %vm2303, %v2222
  %2360 = vst.msk [vmem:[#allocation2 + $0xe0] sm:$0xf] %vm2303, %v2224
  %2361 = vst.msk [vmem:[#allocation2 + $0xe4] sm:$0xf] %vm2303, %v2226
  %2362 = vst.msk [vmem:[#allocation2 + $0xe8] sm:$0xf] %vm2303, %v2228
  %2363 = vst.msk [vmem:[#allocation2 + $0xec] sm:$0xf] %vm2303, %v2230
  %2364 = vst.msk [vmem:[#allocation2 + $0xf0] sm:$0xf] %vm2303, %v2232
  %2365 = vst.msk [vmem:[#allocation2 + $0xf4] sm:$0xf] %vm2303, %v2234
  %2366 = vst.msk [vmem:[#allocation2 + $0xf8] sm:$0xf] %vm2303, %v2236
  %2367 = vst.msk [vmem:[#allocation2 + $0xfc] sm:$0xf] %vm2303, %v2238
  %v2370 = vrot.slane %v69, 5
  %v2371 = vrot.slane %v2370, 4
  %v2372 = vrot.slane %v70, 5
  %v2373 = vsel %vm1320, %v2371, %v2372
  %v2374 = vrot.slane %v2372, 4
  %v2375 = vrot.slane %v71, 5
  %v2376 = vsel %vm1320, %v2374, %v2375
  %v2377 = vrot.slane %v123, 5
  %v2378 = vrot.slane %v2377, 4
  %v2379 = vrot.slane %v124, 5
  %v2380 = vsel %vm1320, %v2378, %v2379
  %v2381 = vrot.slane %v2379, 4
  %v2382 = vrot.slane %v125, 5
  %v2383 = vsel %vm1320, %v2381, %v2382
  %2384 = vrot.lane.b32.xlu0 %v1331, 20
  %v2385 = vpop.permute.xlu0 %2384
  %2386 = vrot.lane.b32.xlu0 %v1334, 20
  %v2387 = vpop.permute.xlu0 %2386
  %2388 = vrot.lane.b32.xlu0 %v1338, 20
  %v2389 = vpop.permute.xlu0 %2388
  %2390 = vrot.lane.b32.xlu0 %v1341, 20
  %v2391 = vpop.permute.xlu0 %2390
  %2392 = vrot.lane.b32.xlu0 %v1345, 20
  %v2393 = vpop.permute.xlu0 %2392
  %2394 = vrot.lane.b32.xlu0 %v1348, 20
  %v2395 = vpop.permute.xlu0 %2394
  %2396 = vrot.lane.b32.xlu0 %v1352, 20
  %v2397 = vpop.permute.xlu0 %2396
  %2398 = vrot.lane.b32.xlu0 %v1355, 20
  %v2399 = vpop.permute.xlu0 %2398
  %2400 = vrot.lane.b32.xlu0 %v1359, 20
  %v2401 = vpop.permute.xlu0 %2400
  %2402 = vrot.lane.b32.xlu0 %v1362, 20
  %v2403 = vpop.permute.xlu0 %2402
  %2404 = vrot.lane.b32.xlu0 %v1366, 20
  %v2405 = vpop.permute.xlu0 %2404
  %2406 = vrot.lane.b32.xlu0 %v1369, 20
  %v2407 = vpop.permute.xlu0 %2406
  %2408 = vrot.lane.b32.xlu0 %v1373, 20
  %v2409 = vpop.permute.xlu0 %2408
  %2410 = vrot.lane.b32.xlu0 %v1376, 20
  %v2411 = vpop.permute.xlu0 %2410
  %2412 = vrot.lane.b32.xlu0 %v1380, 20
  %v2413 = vpop.permute.xlu0 %2412
  %2414 = vrot.lane.b32.xlu0 %v1383, 20
  %v2415 = vpop.permute.xlu0 %2414
  %2416 = vrot.lane.b32.xlu0 %v1387, 20
  %v2417 = vpop.permute.xlu0 %2416
  %2418 = vrot.lane.b32.xlu0 %v1390, 20
  %v2419 = vpop.permute.xlu0 %2418
  %2420 = vrot.lane.b32.xlu0 %v1394, 20
  %v2421 = vpop.permute.xlu0 %2420
  %2422 = vrot.lane.b32.xlu0 %v1397, 20
  %v2423 = vpop.permute.xlu0 %2422
  %2424 = vrot.lane.b32.xlu0 %v1401, 20
  %v2425 = vpop.permute.xlu0 %2424
  %2426 = vrot.lane.b32.xlu0 %v1404, 20
  %v2427 = vpop.permute.xlu0 %2426
  %2428 = vrot.lane.b32.xlu0 %v1408, 20
  %v2429 = vpop.permute.xlu0 %2428
  %2430 = vrot.lane.b32.xlu0 %v1411, 20
  %v2431 = vpop.permute.xlu0 %2430
  %2432 = vrot.lane.b32.xlu0 %v1415, 20
  %v2433 = vpop.permute.xlu0 %2432
  %2434 = vrot.lane.b32.xlu0 %v1418, 20
  %v2435 = vpop.permute.xlu0 %2434
  %2436 = vrot.lane.b32.xlu0 %v1422, 20
  %v2437 = vpop.permute.xlu0 %2436
  %2438 = vrot.lane.b32.xlu0 %v1425, 20
  %v2439 = vpop.permute.xlu0 %2438
  %2440 = vrot.lane.b32.xlu0 %v1429, 20
  %v2441 = vpop.permute.xlu0 %2440
  %2442 = vrot.lane.b32.xlu0 %v1432, 20
  %v2443 = vpop.permute.xlu0 %2442
  %2444 = vrot.lane.b32.xlu0 %v2373, 20
  %v2445 = vpop.permute.xlu0 %2444
  %2446 = vrot.lane.b32.xlu0 %v2376, 20
  %v2447 = vpop.permute.xlu0 %2446
  %2448 = vrot.lane.b32.xlu0 %v1443, 20
  %v2449 = vpop.permute.xlu0 %2448
  %2450 = vrot.lane.b32.xlu0 %v1446, 20
  %v2451 = vpop.permute.xlu0 %2450
  %2452 = vrot.lane.b32.xlu0 %v1450, 20
  %v2453 = vpop.permute.xlu0 %2452
  %2454 = vrot.lane.b32.xlu0 %v1453, 20
  %v2455 = vpop.permute.xlu0 %2454
  %2456 = vrot.lane.b32.xlu0 %v1457, 20
  %v2457 = vpop.permute.xlu0 %2456
  %2458 = vrot.lane.b32.xlu0 %v1460, 20
  %v2459 = vpop.permute.xlu0 %2458
  %2460 = vrot.lane.b32.xlu0 %v1464, 20
  %v2461 = vpop.permute.xlu0 %2460
  %2462 = vrot.lane.b32.xlu0 %v1467, 20
  %v2463 = vpop.permute.xlu0 %2462
  %2464 = vrot.lane.b32.xlu0 %v1471, 20
  %v2465 = vpop.permute.xlu0 %2464
  %2466 = vrot.lane.b32.xlu0 %v1474, 20
  %v2467 = vpop.permute.xlu0 %2466
  %2468 = vrot.lane.b32.xlu0 %v1478, 20
  %v2469 = vpop.permute.xlu0 %2468
  %2470 = vrot.lane.b32.xlu0 %v1481, 20
  %v2471 = vpop.permute.xlu0 %2470
  %2472 = vrot.lane.b32.xlu0 %v1485, 20
  %v2473 = vpop.permute.xlu0 %2472
  %2474 = vrot.lane.b32.xlu0 %v1488, 20
  %v2475 = vpop.permute.xlu0 %2474
  %2476 = vrot.lane.b32.xlu0 %v1492, 20
  %v2477 = vpop.permute.xlu0 %2476
  %2478 = vrot.lane.b32.xlu0 %v1495, 20
  %v2479 = vpop.permute.xlu0 %2478
  %2480 = vrot.lane.b32.xlu0 %v1499, 20
  %v2481 = vpop.permute.xlu0 %2480
  %2482 = vrot.lane.b32.xlu0 %v1502, 20
  %v2483 = vpop.permute.xlu0 %2482
  %2484 = vrot.lane.b32.xlu0 %v1506, 20
  %v2485 = vpop.permute.xlu0 %2484
  %2486 = vrot.lane.b32.xlu0 %v1509, 20
  %v2487 = vpop.permute.xlu0 %2486
  %2488 = vrot.lane.b32.xlu0 %v1513, 20
  %v2489 = vpop.permute.xlu0 %2488
  %2490 = vrot.lane.b32.xlu0 %v1516, 20
  %v2491 = vpop.permute.xlu0 %2490
  %2492 = vrot.lane.b32.xlu0 %v1520, 20
  %v2493 = vpop.permute.xlu0 %2492
  %2494 = vrot.lane.b32.xlu0 %v1523, 20
  %v2495 = vpop.permute.xlu0 %2494
  %2496 = vrot.lane.b32.xlu0 %v1527, 20
  %v2497 = vpop.permute.xlu0 %2496
  %2498 = vrot.lane.b32.xlu0 %v1530, 20
  %v2499 = vpop.permute.xlu0 %2498
  %2500 = vrot.lane.b32.xlu0 %v1534, 20
  %v2501 = vpop.permute.xlu0 %2500
  %2502 = vrot.lane.b32.xlu0 %v1537, 20
  %v2503 = vpop.permute.xlu0 %2502
  %2504 = vrot.lane.b32.xlu0 %v1541, 20
  %v2505 = vpop.permute.xlu0 %2504
  %2506 = vrot.lane.b32.xlu0 %v1544, 20
  %v2507 = vpop.permute.xlu0 %2506
  %2508 = vrot.lane.b32.xlu0 %v2380, 20
  %v2509 = vpop.permute.xlu0 %2508
  %2510 = vrot.lane.b32.xlu0 %v2383, 20
  %v2511 = vpop.permute.xlu0 %2510
  %vm2576 = vcmask 191648
  %2577 = vst.msk [vmem:[#allocation2] sm:$0xf] %vm2576, %v2385
  %2578 = vst.msk [vmem:[#allocation2 + $0x4] sm:$0xf] %vm2576, %v2387
  %2579 = vst.msk [vmem:[#allocation2 + $0x8] sm:$0xf] %vm2576, %v2389
  %2580 = vst.msk [vmem:[#allocation2 + $0xc] sm:$0xf] %vm2576, %v2391
  %2581 = vst.msk [vmem:[#allocation2 + $0x10] sm:$0xf] %vm2576, %v2393
  %2582 = vst.msk [vmem:[#allocation2 + $0x14] sm:$0xf] %vm2576, %v2395
  %2583 = vst.msk [vmem:[#allocation2 + $0x18] sm:$0xf] %vm2576, %v2397
  %2584 = vst.msk [vmem:[#allocation2 + $0x1c] sm:$0xf] %vm2576, %v2399
  %2585 = vst.msk [vmem:[#allocation2 + $0x20] sm:$0xf] %vm2576, %v2401
  %2586 = vst.msk [vmem:[#allocation2 + $0x24] sm:$0xf] %vm2576, %v2403
  %2587 = vst.msk [vmem:[#allocation2 + $0x28] sm:$0xf] %vm2576, %v2405
  %2588 = vst.msk [vmem:[#allocation2 + $0x2c] sm:$0xf] %vm2576, %v2407
  %2589 = vst.msk [vmem:[#allocation2 + $0x30] sm:$0xf] %vm2576, %v2409
  %2590 = vst.msk [vmem:[#allocation2 + $0x34] sm:$0xf] %vm2576, %v2411
  %2591 = vst.msk [vmem:[#allocation2 + $0x38] sm:$0xf] %vm2576, %v2413
  %2592 = vst.msk [vmem:[#allocation2 + $0x3c] sm:$0xf] %vm2576, %v2415
  %2593 = vst.msk [vmem:[#allocation2 + $0x40] sm:$0xf] %vm2576, %v2417
  %2594 = vst.msk [vmem:[#allocation2 + $0x44] sm:$0xf] %vm2576, %v2419
  %2595 = vst.msk [vmem:[#allocation2 + $0x48] sm:$0xf] %vm2576, %v2421
  %2596 = vst.msk [vmem:[#allocation2 + $0x4c] sm:$0xf] %vm2576, %v2423
  %2597 = vst.msk [vmem:[#allocation2 + $0x50] sm:$0xf] %vm2576, %v2425
  %2598 = vst.msk [vmem:[#allocation2 + $0x54] sm:$0xf] %vm2576, %v2427
  %2599 = vst.msk [vmem:[#allocation2 + $0x58] sm:$0xf] %vm2576, %v2429
  %2600 = vst.msk [vmem:[#allocation2 + $0x5c] sm:$0xf] %vm2576, %v2431
  %2601 = vst.msk [vmem:[#allocation2 + $0x60] sm:$0xf] %vm2576, %v2433
  %2602 = vst.msk [vmem:[#allocation2 + $0x64] sm:$0xf] %vm2576, %v2435
  %2603 = vst.msk [vmem:[#allocation2 + $0x68] sm:$0xf] %vm2576, %v2437
  %2604 = vst.msk [vmem:[#allocation2 + $0x6c] sm:$0xf] %vm2576, %v2439
  %2605 = vst.msk [vmem:[#allocation2 + $0x70] sm:$0xf] %vm2576, %v2441
  %2606 = vst.msk [vmem:[#allocation2 + $0x74] sm:$0xf] %vm2576, %v2443
  %2607 = vst.msk [vmem:[#allocation2 + $0x78] sm:$0xf] %vm2576, %v2445
  %2608 = vst.msk [vmem:[#allocation2 + $0x7c] sm:$0xf] %vm2576, %v2447
  %2609 = vst.msk [vmem:[#allocation2 + $0x80] sm:$0xf] %vm2576, %v2449
  %2610 = vst.msk [vmem:[#allocation2 + $0x84] sm:$0xf] %vm2576, %v2451
  %2611 = vst.msk [vmem:[#allocation2 + $0x88] sm:$0xf] %vm2576, %v2453
  %2612 = vst.msk [vmem:[#allocation2 + $0x8c] sm:$0xf] %vm2576, %v2455
  %2613 = vst.msk [vmem:[#allocation2 + $0x90] sm:$0xf] %vm2576, %v2457
  %2614 = vst.msk [vmem:[#allocation2 + $0x94] sm:$0xf] %vm2576, %v2459
  %2615 = vst.msk [vmem:[#allocation2 + $0x98] sm:$0xf] %vm2576, %v2461
  %2616 = vst.msk [vmem:[#allocation2 + $0x9c] sm:$0xf] %vm2576, %v2463
  %2617 = vst.msk [vmem:[#allocation2 + $0xa0] sm:$0xf] %vm2576, %v2465
  %2618 = vst.msk [vmem:[#allocation2 + $0xa4] sm:$0xf] %vm2576, %v2467
  %2619 = vst.msk [vmem:[#allocation2 + $0xa8] sm:$0xf] %vm2576, %v2469
  %2620 = vst.msk [vmem:[#allocation2 + $0xac] sm:$0xf] %vm2576, %v2471
  %2621 = vst.msk [vmem:[#allocation2 + $0xb0] sm:$0xf] %vm2576, %v2473
  %2622 = vst.msk [vmem:[#allocation2 + $0xb4] sm:$0xf] %vm2576, %v2475
  %2623 = vst.msk [vmem:[#allocation2 + $0xb8] sm:$0xf] %vm2576, %v2477
  %2624 = vst.msk [vmem:[#allocation2 + $0xbc] sm:$0xf] %vm2576, %v2479
  %2625 = vst.msk [vmem:[#allocation2 + $0xc0] sm:$0xf] %vm2576, %v2481
  %2626 = vst.msk [vmem:[#allocation2 + $0xc4] sm:$0xf] %vm2576, %v2483
  %2627 = vst.msk [vmem:[#allocation2 + $0xc8] sm:$0xf] %vm2576, %v2485
  %2628 = vst.msk [vmem:[#allocation2 + $0xcc] sm:$0xf] %vm2576, %v2487
  %2629 = vst.msk [vmem:[#allocation2 + $0xd0] sm:$0xf] %vm2576, %v2489
  %2630 = vst.msk [vmem:[#allocation2 + $0xd4] sm:$0xf] %vm2576, %v2491
  %2631 = vst.msk [vmem:[#allocation2 + $0xd8] sm:$0xf] %vm2576, %v2493
  %2632 = vst.msk [vmem:[#allocation2 + $0xdc] sm:$0xf] %vm2576, %v2495
  %2633 = vst.msk [vmem:[#allocation2 + $0xe0] sm:$0xf] %vm2576, %v2497
  %2634 = vst.msk [vmem:[#allocation2 + $0xe4] sm:$0xf] %vm2576, %v2499
  %2635 = vst.msk [vmem:[#allocation2 + $0xe8] sm:$0xf] %vm2576, %v2501
  %2636 = vst.msk [vmem:[#allocation2 + $0xec] sm:$0xf] %vm2576, %v2503
  %2637 = vst.msk [vmem:[#allocation2 + $0xf0] sm:$0xf] %vm2576, %v2505
  %2638 = vst.msk [vmem:[#allocation2 + $0xf4] sm:$0xf] %vm2576, %v2507
  %2639 = vst.msk [vmem:[#allocation2 + $0xf8] sm:$0xf] %vm2576, %v2509
  %2640 = vst.msk [vmem:[#allocation2 + $0xfc] sm:$0xf] %vm2576, %v2511
  %2645 = vrot.lane.b32.xlu0 %v27, 24
  %v2646 = vpop.permute.xlu0 %2645
  %2647 = vrot.lane.b32.xlu0 %v28, 24
  %v2648 = vpop.permute.xlu0 %2647
  %2649 = vrot.lane.b32.xlu0 %v30, 24
  %v2650 = vpop.permute.xlu0 %2649
  %2651 = vrot.lane.b32.xlu0 %v31, 24
  %v2652 = vpop.permute.xlu0 %2651
  %2653 = vrot.lane.b32.xlu0 %v33, 24
  %v2654 = vpop.permute.xlu0 %2653
  %2655 = vrot.lane.b32.xlu0 %v34, 24
  %v2656 = vpop.permute.xlu0 %2655
  %2657 = vrot.lane.b32.xlu0 %v36, 24
  %v2658 = vpop.permute.xlu0 %2657
  %2659 = vrot.lane.b32.xlu0 %v37, 24
  %v2660 = vpop.permute.xlu0 %2659
  %2661 = vrot.lane.b32.xlu0 %v39, 24
  %v2662 = vpop.permute.xlu0 %2661
  %2663 = vrot.lane.b32.xlu0 %v40, 24
  %v2664 = vpop.permute.xlu0 %2663
  %2665 = vrot.lane.b32.xlu0 %v42, 24
  %v2666 = vpop.permute.xlu0 %2665
  %2667 = vrot.lane.b32.xlu0 %v43, 24
  %v2668 = vpop.permute.xlu0 %2667
  %2669 = vrot.lane.b32.xlu0 %v45, 24
  %v2670 = vpop.permute.xlu0 %2669
  %2671 = vrot.lane.b32.xlu0 %v46, 24
  %v2672 = vpop.permute.xlu0 %2671
  %2673 = vrot.lane.b32.xlu0 %v48, 24
  %v2674 = vpop.permute.xlu0 %2673
  %2675 = vrot.lane.b32.xlu0 %v49, 24
  %v2676 = vpop.permute.xlu0 %2675
  %2677 = vrot.lane.b32.xlu0 %v51, 24
  %v2678 = vpop.permute.xlu0 %2677
  %2679 = vrot.lane.b32.xlu0 %v52, 24
  %v2680 = vpop.permute.xlu0 %2679
  %2681 = vrot.lane.b32.xlu0 %v54, 24
  %v2682 = vpop.permute.xlu0 %2681
  %2683 = vrot.lane.b32.xlu0 %v55, 24
  %v2684 = vpop.permute.xlu0 %2683
  %2685 = vrot.lane.b32.xlu0 %v57, 24
  %v2686 = vpop.permute.xlu0 %2685
  %2687 = vrot.lane.b32.xlu0 %v58, 24
  %v2688 = vpop.permute.xlu0 %2687
  %2689 = vrot.lane.b32.xlu0 %v60, 24
  %v2690 = vpop.permute.xlu0 %2689
  %2691 = vrot.lane.b32.xlu0 %v61, 24
  %v2692 = vpop.permute.xlu0 %2691
  %2693 = vrot.lane.b32.xlu0 %v63, 24
  %v2694 = vpop.permute.xlu0 %2693
  %2695 = vrot.lane.b32.xlu0 %v64, 24
  %v2696 = vpop.permute.xlu0 %2695
  %2697 = vrot.lane.b32.xlu0 %v66, 24
  %v2698 = vpop.permute.xlu0 %2697
  %2699 = vrot.lane.b32.xlu0 %v67, 24
  %v2700 = vpop.permute.xlu0 %2699
  %2701 = vrot.lane.b32.xlu0 %v69, 24
  %v2702 = vpop.permute.xlu0 %2701
  %2703 = vrot.lane.b32.xlu0 %v70, 24
  %v2704 = vpop.permute.xlu0 %2703
  %2705 = vrot.lane.b32.xlu0 %v72, 24
  %v2706 = vpop.permute.xlu0 %2705
  %2707 = vrot.lane.b32.xlu0 %v73, 24
  %v2708 = vpop.permute.xlu0 %2707
  %2709 = vrot.lane.b32.xlu0 %v81, 24
  %v2710 = vpop.permute.xlu0 %2709
  %2711 = vrot.lane.b32.xlu0 %v82, 24
  %v2712 = vpop.permute.xlu0 %2711
  %2713 = vrot.lane.b32.xlu0 %v84, 24
  %v2714 = vpop.permute.xlu0 %2713
  %2715 = vrot.lane.b32.xlu0 %v85, 24
  %v2716 = vpop.permute.xlu0 %2715
  %2717 = vrot.lane.b32.xlu0 %v87, 24
  %v2718 = vpop.permute.xlu0 %2717
  %2719 = vrot.lane.b32.xlu0 %v88, 24
  %v2720 = vpop.permute.xlu0 %2719
  %2721 = vrot.lane.b32.xlu0 %v90, 24
  %v2722 = vpop.permute.xlu0 %2721
  %2723 = vrot.lane.b32.xlu0 %v91, 24
  %v2724 = vpop.permute.xlu0 %2723
  %2725 = vrot.lane.b32.xlu0 %v93, 24
  %v2726 = vpop.permute.xlu0 %2725
  %2727 = vrot.lane.b32.xlu0 %v94, 24
  %v2728 = vpop.permute.xlu0 %2727
  %2729 = vrot.lane.b32.xlu0 %v96, 24
  %v2730 = vpop.permute.xlu0 %2729
  %2731 = vrot.lane.b32.xlu0 %v97, 24
  %v2732 = vpop.permute.xlu0 %2731
  %2733 = vrot.lane.b32.xlu0 %v99, 24
  %v2734 = vpop.permute.xlu0 %2733
  %2735 = vrot.lane.b32.xlu0 %v100, 24
  %v2736 = vpop.permute.xlu0 %2735
  %2737 = vrot.lane.b32.xlu0 %v102, 24
  %v2738 = vpop.permute.xlu0 %2737
  %2739 = vrot.lane.b32.xlu0 %v103, 24
  %v2740 = vpop.permute.xlu0 %2739
  %2741 = vrot.lane.b32.xlu0 %v105, 24
  %v2742 = vpop.permute.xlu0 %2741
  %2743 = vrot.lane.b32.xlu0 %v106, 24
  %v2744 = vpop.permute.xlu0 %2743
  %2745 = vrot.lane.b32.xlu0 %v108, 24
  %v2746 = vpop.permute.xlu0 %2745
  %2747 = vrot.lane.b32.xlu0 %v109, 24
  %v2748 = vpop.permute.xlu0 %2747
  %2749 = vrot.lane.b32.xlu0 %v111, 24
  %v2750 = vpop.permute.xlu0 %2749
  %2751 = vrot.lane.b32.xlu0 %v112, 24
  %v2752 = vpop.permute.xlu0 %2751
  %2753 = vrot.lane.b32.xlu0 %v114, 24
  %v2754 = vpop.permute.xlu0 %2753
  %2755 = vrot.lane.b32.xlu0 %v115, 24
  %v2756 = vpop.permute.xlu0 %2755
  %2757 = vrot.lane.b32.xlu0 %v117, 24
  %v2758 = vpop.permute.xlu0 %2757
  %2759 = vrot.lane.b32.xlu0 %v118, 24
  %v2760 = vpop.permute.xlu0 %2759
  %2761 = vrot.lane.b32.xlu0 %v120, 24
  %v2762 = vpop.permute.xlu0 %2761
  %2763 = vrot.lane.b32.xlu0 %v121, 24
  %v2764 = vpop.permute.xlu0 %2763
  %2765 = vrot.lane.b32.xlu0 %v123, 24
  %v2766 = vpop.permute.xlu0 %2765
  %2767 = vrot.lane.b32.xlu0 %v124, 24
  %v2768 = vpop.permute.xlu0 %2767
  %2769 = vrot.lane.b32.xlu0 %v126, 24
  %v2770 = vpop.permute.xlu0 %2769
  %2771 = vrot.lane.b32.xlu0 %v127, 24
  %v2772 = vpop.permute.xlu0 %2771
  %vm2837 = vcmask 224448
  %2838 = vst.msk [vmem:[#allocation2] sm:$0xf] %vm2837, %v2646
  %2839 = vst.msk [vmem:[#allocation2 + $0x4] sm:$0xf] %vm2837, %v2648
  %2840 = vst.msk [vmem:[#allocation2 + $0x8] sm:$0xf] %vm2837, %v2650
  %2841 = vst.msk [vmem:[#allocation2 + $0xc] sm:$0xf] %vm2837, %v2652
  %2842 = vst.msk [vmem:[#allocation2 + $0x10] sm:$0xf] %vm2837, %v2654
  %2843 = vst.msk [vmem:[#allocation2 + $0x14] sm:$0xf] %vm2837, %v2656
  %2844 = vst.msk [vmem:[#allocation2 + $0x18] sm:$0xf] %vm2837, %v2658
  %2845 = vst.msk [vmem:[#allocation2 + $0x1c] sm:$0xf] %vm2837, %v2660
  %2846 = vst.msk [vmem:[#allocation2 + $0x20] sm:$0xf] %vm2837, %v2662
  %2847 = vst.msk [vmem:[#allocation2 + $0x24] sm:$0xf] %vm2837, %v2664
  %2848 = vst.msk [vmem:[#allocation2 + $0x28] sm:$0xf] %vm2837, %v2666
  %2849 = vst.msk [vmem:[#allocation2 + $0x2c] sm:$0xf] %vm2837, %v2668
  %2850 = vst.msk [vmem:[#allocation2 + $0x30] sm:$0xf] %vm2837, %v2670
  %2851 = vst.msk [vmem:[#allocation2 + $0x34] sm:$0xf] %vm2837, %v2672
  %2852 = vst.msk [vmem:[#allocation2 + $0x38] sm:$0xf] %vm2837, %v2674
  %2853 = vst.msk [vmem:[#allocation2 + $0x3c] sm:$0xf] %vm2837, %v2676
  %2854 = vst.msk [vmem:[#allocation2 + $0x40] sm:$0xf] %vm2837, %v2678
  %2855 = vst.msk [vmem:[#allocation2 + $0x44] sm:$0xf] %vm2837, %v2680
  %2856 = vst.msk [vmem:[#allocation2 + $0x48] sm:$0xf] %vm2837, %v2682
  %2857 = vst.msk [vmem:[#allocation2 + $0x4c] sm:$0xf] %vm2837, %v2684
  %2858 = vst.msk [vmem:[#allocation2 + $0x50] sm:$0xf] %vm2837, %v2686
  %2859 = vst.msk [vmem:[#allocation2 + $0x54] sm:$0xf] %vm2837, %v2688
  %2860 = vst.msk [vmem:[#allocation2 + $0x58] sm:$0xf] %vm2837, %v2690
  %2861 = vst.msk [vmem:[#allocation2 + $0x5c] sm:$0xf] %vm2837, %v2692
  %2862 = vst.msk [vmem:[#allocation2 + $0x60] sm:$0xf] %vm2837, %v2694
  %2863 = vst.msk [vmem:[#allocation2 + $0x64] sm:$0xf] %vm2837, %v2696
  %2864 = vst.msk [vmem:[#allocation2 + $0x68] sm:$0xf] %vm2837, %v2698
  %2865 = vst.msk [vmem:[#allocation2 + $0x6c] sm:$0xf] %vm2837, %v2700
  %2866 = vst.msk [vmem:[#allocation2 + $0x70] sm:$0xf] %vm2837, %v2702
  %2867 = vst.msk [vmem:[#allocation2 + $0x74] sm:$0xf] %vm2837, %v2704
  %2868 = vst.msk [vmem:[#allocation2 + $0x78] sm:$0xf] %vm2837, %v2706
  %2869 = vst.msk [vmem:[#allocation2 + $0x7c] sm:$0xf] %vm2837, %v2708
  %2870 = vst.msk [vmem:[#allocation2 + $0x80] sm:$0xf] %vm2837, %v2710
  %2871 = vst.msk [vmem:[#allocation2 + $0x84] sm:$0xf] %vm2837, %v2712
  %2872 = vst.msk [vmem:[#allocation2 + $0x88] sm:$0xf] %vm2837, %v2714
  %2873 = vst.msk [vmem:[#allocation2 + $0x8c] sm:$0xf] %vm2837, %v2716
  %2874 = vst.msk [vmem:[#allocation2 + $0x90] sm:$0xf] %vm2837, %v2718
  %2875 = vst.msk [vmem:[#allocation2 + $0x94] sm:$0xf] %vm2837, %v2720
  %2876 = vst.msk [vmem:[#allocation2 + $0x98] sm:$0xf] %vm2837, %v2722
  %2877 = vst.msk [vmem:[#allocation2 + $0x9c] sm:$0xf] %vm2837, %v2724
  %2878 = vst.msk [vmem:[#allocation2 + $0xa0] sm:$0xf] %vm2837, %v2726
  %2879 = vst.msk [vmem:[#allocation2 + $0xa4] sm:$0xf] %vm2837, %v2728
  %2880 = vst.msk [vmem:[#allocation2 + $0xa8] sm:$0xf] %vm2837, %v2730
  %2881 = vst.msk [vmem:[#allocation2 + $0xac] sm:$0xf] %vm2837, %v2732
  %2882 = vst.msk [vmem:[#allocation2 + $0xb0] sm:$0xf] %vm2837, %v2734
  %2883 = vst.msk [vmem:[#allocation2 + $0xb4] sm:$0xf] %vm2837, %v2736
  %2884 = vst.msk [vmem:[#allocation2 + $0xb8] sm:$0xf] %vm2837, %v2738
  %2885 = vst.msk [vmem:[#allocation2 + $0xbc] sm:$0xf] %vm2837, %v2740
  %2886 = vst.msk [vmem:[#allocation2 + $0xc0] sm:$0xf] %vm2837, %v2742
  %2887 = vst.msk [vmem:[#allocation2 + $0xc4] sm:$0xf] %vm2837, %v2744
  %2888 = vst.msk [vmem:[#allocation2 + $0xc8] sm:$0xf] %vm2837, %v2746
  %2889 = vst.msk [vmem:[#allocation2 + $0xcc] sm:$0xf] %vm2837, %v2748
  %2890 = vst.msk [vmem:[#allocation2 + $0xd0] sm:$0xf] %vm2837, %v2750
  %2891 = vst.msk [vmem:[#allocation2 + $0xd4] sm:$0xf] %vm2837, %v2752
  %2892 = vst.msk [vmem:[#allocation2 + $0xd8] sm:$0xf] %vm2837, %v2754
  %2893 = vst.msk [vmem:[#allocation2 + $0xdc] sm:$0xf] %vm2837, %v2756
  %2894 = vst.msk [vmem:[#allocation2 + $0xe0] sm:$0xf] %vm2837, %v2758
  %2895 = vst.msk [vmem:[#allocation2 + $0xe4] sm:$0xf] %vm2837, %v2760
  %2896 = vst.msk [vmem:[#allocation2 + $0xe8] sm:$0xf] %vm2837, %v2762
  %2897 = vst.msk [vmem:[#allocation2 + $0xec] sm:$0xf] %vm2837, %v2764
  %2898 = vst.msk [vmem:[#allocation2 + $0xf0] sm:$0xf] %vm2837, %v2766
  %2899 = vst.msk [vmem:[#allocation2 + $0xf4] sm:$0xf] %vm2837, %v2768
  %2900 = vst.msk [vmem:[#allocation2 + $0xf8] sm:$0xf] %vm2837, %v2770
  %2901 = vst.msk [vmem:[#allocation2 + $0xfc] sm:$0xf] %vm2837, %v2772
  %v2903 = vshrl.u32 %v72, 16
  %v2905 = vrot.slane %v2903, 4
  %v2906 = vshll.u32 %v72, 16
  %v2908 = vrot.slane %v2906, 5
  %v2909 = vor.u32 %v2905, %v2908
  %v2910 = vrot.slane %v2909, 4
  %v2912 = vshll.u32 %v73, 16
  %v2914 = vrot.slane %v2912, 5
  %v2915 = vsel %vm196, %v2910, %v2914
  %v2916 = vshrl.u32 %v73, 16
  %v2918 = vrot.slane %v2916, 4
  %v2919 = vor.u32 %v2918, %v2914
  %v2920 = vrot.slane %v2919, 4
  %v2922 = vshll.u32 %v74, 16
  %v2924 = vrot.slane %v2922, 5
  %v2925 = vsel %vm196, %v2920, %v2924
  %v2927 = vshrl.u32 %v126, 16
  %v2929 = vrot.slane %v2927, 4
  %v2930 = vshll.u32 %v126, 16
  %v2932 = vrot.slane %v2930, 5
  %v2933 = vor.u32 %v2929, %v2932
  %v2934 = vrot.slane %v2933, 4
  %v2936 = vshll.u32 %v127, 16
  %v2938 = vrot.slane %v2936, 5
  %v2939 = vsel %vm196, %v2934, %v2938
  %v2940 = vshrl.u32 %v127, 16
  %v2942 = vrot.slane %v2940, 4
  %v2943 = vor.u32 %v2942, %v2938
  %v2944 = vrot.slane %v2943, 4
  %v2946 = vshll.u32 %v128, 16
  %v2948 = vrot.slane %v2946, 5
  %v2949 = vsel %vm196, %v2944, %v2948
  %2950 = vrot.lane.b32.xlu0 %v258, 28
  %v2951 = vpop.permute.xlu0 %2950
  %2952 = vrot.lane.b32.xlu0 %v268, 28
  %v2953 = vpop.permute.xlu0 %2952
  %2954 = vrot.lane.b32.xlu0 %v282, 28
  %v2955 = vpop.permute.xlu0 %2954
  %2956 = vrot.lane.b32.xlu0 %v292, 28
  %v2957 = vpop.permute.xlu0 %2956
  %2958 = vrot.lane.b32.xlu0 %v306, 28
  %v2959 = vpop.permute.xlu0 %2958
  %2960 = vrot.lane.b32.xlu0 %v316, 28
  %v2961 = vpop.permute.xlu0 %2960
  %2962 = vrot.lane.b32.xlu0 %v330, 28
  %v2963 = vpop.permute.xlu0 %2962
  %2964 = vrot.lane.b32.xlu0 %v340, 28
  %v2965 = vpop.permute.xlu0 %2964
  %2966 = vrot.lane.b32.xlu0 %v354, 28
  %v2967 = vpop.permute.xlu0 %2966
  %2968 = vrot.lane.b32.xlu0 %v364, 28
  %v2969 = vpop.permute.xlu0 %2968
  %2970 = vrot.lane.b32.xlu0 %v378, 28
  %v2971 = vpop.permute.xlu0 %2970
  %2972 = vrot.lane.b32.xlu0 %v388, 28
  %v2973 = vpop.permute.xlu0 %2972
  %2974 = vrot.lane.b32.xlu0 %v402, 28
  %v2975 = vpop.permute.xlu0 %2974
  %2976 = vrot.lane.b32.xlu0 %v412, 28
  %v2977 = vpop.permute.xlu0 %2976
  %2978 = vrot.lane.b32.xlu0 %v426, 28
  %v2979 = vpop.permute.xlu0 %2978
  %2980 = vrot.lane.b32.xlu0 %v436, 28
  %v2981 = vpop.permute.xlu0 %2980
  %2982 = vrot.lane.b32.xlu0 %v450, 28
  %v2983 = vpop.permute.xlu0 %2982
  %2984 = vrot.lane.b32.xlu0 %v460, 28
  %v2985 = vpop.permute.xlu0 %2984
  %2986 = vrot.lane.b32.xlu0 %v474, 28
  %v2987 = vpop.permute.xlu0 %2986
  %2988 = vrot.lane.b32.xlu0 %v484, 28
  %v2989 = vpop.permute.xlu0 %2988
  %2990 = vrot.lane.b32.xlu0 %v498, 28
  %v2991 = vpop.permute.xlu0 %2990
  %2992 = vrot.lane.b32.xlu0 %v508, 28
  %v2993 = vpop.permute.xlu0 %2992
  %2994 = vrot.lane.b32.xlu0 %v522, 28
  %v2995 = vpop.permute.xlu0 %2994
  %2996 = vrot.lane.b32.xlu0 %v532, 28
  %v2997 = vpop.permute.xlu0 %2996
  %2998 = vrot.lane.b32.xlu0 %v546, 28
  %v2999 = vpop.permute.xlu0 %2998
  %3000 = vrot.lane.b32.xlu0 %v556, 28
  %v3001 = vpop.permute.xlu0 %3000
  %3002 = vrot.lane.b32.xlu0 %v570, 28
  %v3003 = vpop.permute.xlu0 %3002
  %3004 = vrot.lane.b32.xlu0 %v580, 28
  %v3005 = vpop.permute.xlu0 %3004
  %3006 = vrot.lane.b32.xlu0 %v2076, 28
  %v3007 = vpop.permute.xlu0 %3006
  %3008 = vrot.lane.b32.xlu0 %v2086, 28
  %v3009 = vpop.permute.xlu0 %3008
  %3010 = vrot.lane.b32.xlu0 %v2915, 28
  %v3011 = vpop.permute.xlu0 %3010
  %3012 = vrot.lane.b32.xlu0 %v2925, 28
  %v3013 = vpop.permute.xlu0 %3012
  %3014 = vrot.lane.b32.xlu0 %v642, 28
  %v3015 = vpop.permute.xlu0 %3014
  %3016 = vrot.lane.b32.xlu0 %v652, 28
  %v3017 = vpop.permute.xlu0 %3016
  %3018 = vrot.lane.b32.xlu0 %v666, 28
  %v3019 = vpop.permute.xlu0 %3018
  %3020 = vrot.lane.b32.xlu0 %v676, 28
  %v3021 = vpop.permute.xlu0 %3020
  %3022 = vrot.lane.b32.xlu0 %v690, 28
  %v3023 = vpop.permute.xlu0 %3022
  %3024 = vrot.lane.b32.xlu0 %v700, 28
  %v3025 = vpop.permute.xlu0 %3024
  %3026 = vrot.lane.b32.xlu0 %v714, 28
  %v3027 = vpop.permute.xlu0 %3026
  %3028 = vrot.lane.b32.xlu0 %v724, 28
  %v3029 = vpop.permute.xlu0 %3028
  %3030 = vrot.lane.b32.xlu0 %v738, 28
  %v3031 = vpop.permute.xlu0 %3030
  %3032 = vrot.lane.b32.xlu0 %v748, 28
  %v3033 = vpop.permute.xlu0 %3032
  %3034 = vrot.lane.b32.xlu0 %v762, 28
  %v3035 = vpop.permute.xlu0 %3034
  %3036 = vrot.lane.b32.xlu0 %v772, 28
  %v3037 = vpop.permute.xlu0 %3036
  %3038 = vrot.lane.b32.xlu0 %v786, 28
  %v3039 = vpop.permute.xlu0 %3038
  %3040 = vrot.lane.b32.xlu0 %v796, 28
  %v3041 = vpop.permute.xlu0 %3040
  %3042 = vrot.lane.b32.xlu0 %v810, 28
  %v3043 = vpop.permute.xlu0 %3042
  %3044 = vrot.lane.b32.xlu0 %v820, 28
  %v3045 = vpop.permute.xlu0 %3044
  %3046 = vrot.lane.b32.xlu0 %v834, 28
  %v3047 = vpop.permute.xlu0 %3046
  %3048 = vrot.lane.b32.xlu0 %v844, 28
  %v3049 = vpop.permute.xlu0 %3048
  %3050 = vrot.lane.b32.xlu0 %v858, 28
  %v3051 = vpop.permute.xlu0 %3050
  %3052 = vrot.lane.b32.xlu0 %v868, 28
  %v3053 = vpop.permute.xlu0 %3052
  %3054 = vrot.lane.b32.xlu0 %v882, 28
  %v3055 = vpop.permute.xlu0 %3054
  %3056 = vrot.lane.b32.xlu0 %v892, 28
  %v3057 = vpop.permute.xlu0 %3056
  %3058 = vrot.lane.b32.xlu0 %v906, 28
  %v3059 = vpop.permute.xlu0 %3058
  %3060 = vrot.lane.b32.xlu0 %v916, 28
  %v3061 = vpop.permute.xlu0 %3060
  %3062 = vrot.lane.b32.xlu0 %v930, 28
  %v3063 = vpop.permute.xlu0 %3062
  %3064 = vrot.lane.b32.xlu0 %v940, 28
  %v3065 = vpop.permute.xlu0 %3064
  %3066 = vrot.lane.b32.xlu0 %v954, 28
  %v3067 = vpop.permute.xlu0 %3066
  %3068 = vrot.lane.b32.xlu0 %v964, 28
  %v3069 = vpop.permute.xlu0 %3068
  %3070 = vrot.lane.b32.xlu0 %v2100, 28
  %v3071 = vpop.permute.xlu0 %3070
  %3072 = vrot.lane.b32.xlu0 %v2110, 28
  %v3073 = vpop.permute.xlu0 %3072
  %3074 = vrot.lane.b32.xlu0 %v2939, 28
  %v3075 = vpop.permute.xlu0 %3074
  %3076 = vrot.lane.b32.xlu0 %v2949, 28
  %v3077 = vpop.permute.xlu0 %3076
  %vm3142 = vcmask 257248
  %3143 = vst.msk [vmem:[#allocation2] sm:$0xf] %vm3142, %v2951
  %3144 = vst.msk [vmem:[#allocation2 + $0x4] sm:$0xf] %vm3142, %v2953
  %3145 = vst.msk [vmem:[#allocation2 + $0x8] sm:$0xf] %vm3142, %v2955
  %3146 = vst.msk [vmem:[#allocation2 + $0xc] sm:$0xf] %vm3142, %v2957
  %3147 = vst.msk [vmem:[#allocation2 + $0x10] sm:$0xf] %vm3142, %v2959
  %3148 = vst.msk [vmem:[#allocation2 + $0x14] sm:$0xf] %vm3142, %v2961
  %3149 = vst.msk [vmem:[#allocation2 + $0x18] sm:$0xf] %vm3142, %v2963
  %3150 = vst.msk [vmem:[#allocation2 + $0x1c] sm:$0xf] %vm3142, %v2965
  %3151 = vst.msk [vmem:[#allocation2 + $0x20] sm:$0xf] %vm3142, %v2967
  %3152 = vst.msk [vmem:[#allocation2 + $0x24] sm:$0xf] %vm3142, %v2969
  %3153 = vst.msk [vmem:[#allocation2 + $0x28] sm:$0xf] %vm3142, %v2971
  %3154 = vst.msk [vmem:[#allocation2 + $0x2c] sm:$0xf] %vm3142, %v2973
  %3155 = vst.msk [vmem:[#allocation2 + $0x30] sm:$0xf] %vm3142, %v2975
  %3156 = vst.msk [vmem:[#allocation2 + $0x34] sm:$0xf] %vm3142, %v2977
  %3157 = vst.msk [vmem:[#allocation2 + $0x38] sm:$0xf] %vm3142, %v2979
  %3158 = vst.msk [vmem:[#allocation2 + $0x3c] sm:$0xf] %vm3142, %v2981
  %3159 = vst.msk [vmem:[#allocation2 + $0x40] sm:$0xf] %vm3142, %v2983
  %3160 = vst.msk [vmem:[#allocation2 + $0x44] sm:$0xf] %vm3142, %v2985
  %3161 = vst.msk [vmem:[#allocation2 + $0x48] sm:$0xf] %vm3142, %v2987
  %3162 = vst.msk [vmem:[#allocation2 + $0x4c] sm:$0xf] %vm3142, %v2989
  %3163 = vst.msk [vmem:[#allocation2 + $0x50] sm:$0xf] %vm3142, %v2991
  %3164 = vst.msk [vmem:[#allocation2 + $0x54] sm:$0xf] %vm3142, %v2993
  %3165 = vst.msk [vmem:[#allocation2 + $0x58] sm:$0xf] %vm3142, %v2995
  %3166 = vst.msk [vmem:[#allocation2 + $0x5c] sm:$0xf] %vm3142, %v2997
  %3167 = vst.msk [vmem:[#allocation2 + $0x60] sm:$0xf] %vm3142, %v2999
  %3168 = vst.msk [vmem:[#allocation2 + $0x64] sm:$0xf] %vm3142, %v3001
  %3169 = vst.msk [vmem:[#allocation2 + $0x68] sm:$0xf] %vm3142, %v3003
  %3170 = vst.msk [vmem:[#allocation2 + $0x6c] sm:$0xf] %vm3142, %v3005
  %3171 = vst.msk [vmem:[#allocation2 + $0x70] sm:$0xf] %vm3142, %v3007
  %3172 = vst.msk [vmem:[#allocation2 + $0x74] sm:$0xf] %vm3142, %v3009
  %3173 = vst.msk [vmem:[#allocation2 + $0x78] sm:$0xf] %vm3142, %v3011
  %3174 = vst.msk [vmem:[#allocation2 + $0x7c] sm:$0xf] %vm3142, %v3013
  %3175 = vst.msk [vmem:[#allocation2 + $0x80] sm:$0xf] %vm3142, %v3015
  %3176 = vst.msk [vmem:[#allocation2 + $0x84] sm:$0xf] %vm3142, %v3017
  %3177 = vst.msk [vmem:[#allocation2 + $0x88] sm:$0xf] %vm3142, %v3019
  %3178 = vst.msk [vmem:[#allocation2 + $0x8c] sm:$0xf] %vm3142, %v3021
  %3179 = vst.msk [vmem:[#allocation2 + $0x90] sm:$0xf] %vm3142, %v3023
  %3180 = vst.msk [vmem:[#allocation2 + $0x94] sm:$0xf] %vm3142, %v3025
  %3181 = vst.msk [vmem:[#allocation2 + $0x98] sm:$0xf] %vm3142, %v3027
  %3182 = vst.msk [vmem:[#allocation2 + $0x9c] sm:$0xf] %vm3142, %v3029
  %3183 = vst.msk [vmem:[#allocation2 + $0xa0] sm:$0xf] %vm3142, %v3031
  %3184 = vst.msk [vmem:[#allocation2 + $0xa4] sm:$0xf] %vm3142, %v3033
  %3185 = vst.msk [vmem:[#allocation2 + $0xa8] sm:$0xf] %vm3142, %v3035
  %3186 = vst.msk [vmem:[#allocation2 + $0xac] sm:$0xf] %vm3142, %v3037
  %3187 = vst.msk [vmem:[#allocation2 + $0xb0] sm:$0xf] %vm3142, %v3039
  %3188 = vst.msk [vmem:[#allocation2 + $0xb4] sm:$0xf] %vm3142, %v3041
  %3189 = vst.msk [vmem:[#allocation2 + $0xb8] sm:$0xf] %vm3142, %v3043
  %3190 = vst.msk [vmem:[#allocation2 + $0xbc] sm:$0xf] %vm3142, %v3045
  %3191 = vst.msk [vmem:[#allocation2 + $0xc0] sm:$0xf] %vm3142, %v3047
  %3192 = vst.msk [vmem:[#allocation2 + $0xc4] sm:$0xf] %vm3142, %v3049
  %3193 = vst.msk [vmem:[#allocation2 + $0xc8] sm:$0xf] %vm3142, %v3051
  %3194 = vst.msk [vmem:[#allocation2 + $0xcc] sm:$0xf] %vm3142, %v3053
  %3195 = vst.msk [vmem:[#allocation2 + $0xd0] sm:$0xf] %vm3142, %v3055
  %3196 = vst.msk [vmem:[#allocation2 + $0xd4] sm:$0xf] %vm3142, %v3057
  %3197 = vst.msk [vmem:[#allocation2 + $0xd8] sm:$0xf] %vm3142, %v3059
  %3198 = vst.msk [vmem:[#allocation2 + $0xdc] sm:$0xf] %vm3142, %v3061
  %3199 = vst.msk [vmem:[#allocation2 + $0xe0] sm:$0xf] %vm3142, %v3063
  %3200 = vst.msk [vmem:[#allocation2 + $0xe4] sm:$0xf] %vm3142, %v3065
  %3201 = vst.msk [vmem:[#allocation2 + $0xe8] sm:$0xf] %vm3142, %v3067
  %3202 = vst.msk [vmem:[#allocation2 + $0xec] sm:$0xf] %vm3142, %v3069
  %3203 = vst.msk [vmem:[#allocation2 + $0xf0] sm:$0xf] %vm3142, %v3071
  %3204 = vst.msk [vmem:[#allocation2 + $0xf4] sm:$0xf] %vm3142, %v3073
  %3205 = vst.msk [vmem:[#allocation2 + $0xf8] sm:$0xf] %vm3142, %v3075
  %3206 = vst.msk [vmem:[#allocation2 + $0xfc] sm:$0xf] %vm3142, %v3077
  %v3209 = vrot.slane %v72, 5
  %v3210 = vrot.slane %v3209, 4
  %v3211 = vrot.slane %v73, 5
  %v3212 = vsel %vm1320, %v3210, %v3211
  %v3213 = vrot.slane %v3211, 4
  %v3214 = vrot.slane %v74, 5
  %v3215 = vsel %vm1320, %v3213, %v3214
  %v3216 = vrot.slane %v126, 5
  %v3217 = vrot.slane %v3216, 4
  %v3218 = vrot.slane %v127, 5
  %v3219 = vsel %vm1320, %v3217, %v3218
  %v3220 = vrot.slane %v3218, 4
  %v3221 = vrot.slane %v128, 5
  %v3222 = vsel %vm1320, %v3220, %v3221
  %3223 = vrot.lane.b32.xlu0 %v1338, 32
  %v3224 = vpop.permute.xlu0 %3223
  %3225 = vrot.lane.b32.xlu0 %v1341, 32
  %v3226 = vpop.permute.xlu0 %3225
  %3227 = vrot.lane.b32.xlu0 %v1345, 32
  %v3228 = vpop.permute.xlu0 %3227
  %3229 = vrot.lane.b32.xlu0 %v1348, 32
  %v3230 = vpop.permute.xlu0 %3229
  %3231 = vrot.lane.b32.xlu0 %v1352, 32
  %v3232 = vpop.permute.xlu0 %3231
  %3233 = vrot.lane.b32.xlu0 %v1355, 32
  %v3234 = vpop.permute.xlu0 %3233
  %3235 = vrot.lane.b32.xlu0 %v1359, 32
  %v3236 = vpop.permute.xlu0 %3235
  %3237 = vrot.lane.b32.xlu0 %v1362, 32
  %v3238 = vpop.permute.xlu0 %3237
  %3239 = vrot.lane.b32.xlu0 %v1366, 32
  %v3240 = vpop.permute.xlu0 %3239
  %3241 = vrot.lane.b32.xlu0 %v1369, 32
  %v3242 = vpop.permute.xlu0 %3241
  %3243 = vrot.lane.b32.xlu0 %v1373, 32
  %v3244 = vpop.permute.xlu0 %3243
  %3245 = vrot.lane.b32.xlu0 %v1376, 32
  %v3246 = vpop.permute.xlu0 %3245
  %3247 = vrot.lane.b32.xlu0 %v1380, 32
  %v3248 = vpop.permute.xlu0 %3247
  %3249 = vrot.lane.b32.xlu0 %v1383, 32
  %v3250 = vpop.permute.xlu0 %3249
  %3251 = vrot.lane.b32.xlu0 %v1387, 32
  %v3252 = vpop.permute.xlu0 %3251
  %3253 = vrot.lane.b32.xlu0 %v1390, 32
  %v3254 = vpop.permute.xlu0 %3253
  %3255 = vrot.lane.b32.xlu0 %v1394, 32
  %v3256 = vpop.permute.xlu0 %3255
  %3257 = vrot.lane.b32.xlu0 %v1397, 32
  %v3258 = vpop.permute.xlu0 %3257
  %3259 = vrot.lane.b32.xlu0 %v1401, 32
  %v3260 = vpop.permute.xlu0 %3259
  %3261 = vrot.lane.b32.xlu0 %v1404, 32
  %v3262 = vpop.permute.xlu0 %3261
  %3263 = vrot.lane.b32.xlu0 %v1408, 32
  %v3264 = vpop.permute.xlu0 %3263
  %3265 = vrot.lane.b32.xlu0 %v1411, 32
  %v3266 = vpop.permute.xlu0 %3265
  %3267 = vrot.lane.b32.xlu0 %v1415, 32
  %v3268 = vpop.permute.xlu0 %3267
  %3269 = vrot.lane.b32.xlu0 %v1418, 32
  %v3270 = vpop.permute.xlu0 %3269
  %3271 = vrot.lane.b32.xlu0 %v1422, 32
  %v3272 = vpop.permute.xlu0 %3271
  %3273 = vrot.lane.b32.xlu0 %v1425, 32
  %v3274 = vpop.permute.xlu0 %3273
  %3275 = vrot.lane.b32.xlu0 %v1429, 32
  %v3276 = vpop.permute.xlu0 %3275
  %3277 = vrot.lane.b32.xlu0 %v1432, 32
  %v3278 = vpop.permute.xlu0 %3277
  %3279 = vrot.lane.b32.xlu0 %v2373, 32
  %v3280 = vpop.permute.xlu0 %3279
  %3281 = vrot.lane.b32.xlu0 %v2376, 32
  %v3282 = vpop.permute.xlu0 %3281
  %3283 = vrot.lane.b32.xlu0 %v3212, 32
  %v3284 = vpop.permute.xlu0 %3283
  %3285 = vrot.lane.b32.xlu0 %v3215, 32
  %v3286 = vpop.permute.xlu0 %3285
  %3287 = vrot.lane.b32.xlu0 %v1450, 32
  %v3288 = vpop.permute.xlu0 %3287
  %3289 = vrot.lane.b32.xlu0 %v1453, 32
  %v3290 = vpop.permute.xlu0 %3289
  %3291 = vrot.lane.b32.xlu0 %v1457, 32
  %v3292 = vpop.permute.xlu0 %3291
  %3293 = vrot.lane.b32.xlu0 %v1460, 32
  %v3294 = vpop.permute.xlu0 %3293
  %3295 = vrot.lane.b32.xlu0 %v1464, 32
  %v3296 = vpop.permute.xlu0 %3295
  %3297 = vrot.lane.b32.xlu0 %v1467, 32
  %v3298 = vpop.permute.xlu0 %3297
  %3299 = vrot.lane.b32.xlu0 %v1471, 32
  %v3300 = vpop.permute.xlu0 %3299
  %3301 = vrot.lane.b32.xlu0 %v1474, 32
  %v3302 = vpop.permute.xlu0 %3301
  %3303 = vrot.lane.b32.xlu0 %v1478, 32
  %v3304 = vpop.permute.xlu0 %3303
  %3305 = vrot.lane.b32.xlu0 %v1481, 32
  %v3306 = vpop.permute.xlu0 %3305
  %3307 = vrot.lane.b32.xlu0 %v1485, 32
  %v3308 = vpop.permute.xlu0 %3307
  %3309 = vrot.lane.b32.xlu0 %v1488, 32
  %v3310 = vpop.permute.xlu0 %3309
  %3311 = vrot.lane.b32.xlu0 %v1492, 32
  %v3312 = vpop.permute.xlu0 %3311
  %3313 = vrot.lane.b32.xlu0 %v1495, 32
  %v3314 = vpop.permute.xlu0 %3313
  %3315 = vrot.lane.b32.xlu0 %v1499, 32
  %v3316 = vpop.permute.xlu0 %3315
  %3317 = vrot.lane.b32.xlu0 %v1502, 32
  %v3318 = vpop.permute.xlu0 %3317
  %3319 = vrot.lane.b32.xlu0 %v1506, 32
  %v3320 = vpop.permute.xlu0 %3319
  %3321 = vrot.lane.b32.xlu0 %v1509, 32
  %v3322 = vpop.permute.xlu0 %3321
  %3323 = vrot.lane.b32.xlu0 %v1513, 32
  %v3324 = vpop.permute.xlu0 %3323
  %3325 = vrot.lane.b32.xlu0 %v1516, 32
  %v3326 = vpop.permute.xlu0 %3325
  %3327 = vrot.lane.b32.xlu0 %v1520, 32
  %v3328 = vpop.permute.xlu0 %3327
  %3329 = vrot.lane.b32.xlu0 %v1523, 32
  %v3330 = vpop.permute.xlu0 %3329
  %3331 = vrot.lane.b32.xlu0 %v1527, 32
  %v3332 = vpop.permute.xlu0 %3331
  %3333 = vrot.lane.b32.xlu0 %v1530, 32
  %v3334 = vpop.permute.xlu0 %3333
  %3335 = vrot.lane.b32.xlu0 %v1534, 32
  %v3336 = vpop.permute.xlu0 %3335
  %3337 = vrot.lane.b32.xlu0 %v1537, 32
  %v3338 = vpop.permute.xlu0 %3337
  %3339 = vrot.lane.b32.xlu0 %v1541, 32
  %v3340 = vpop.permute.xlu0 %3339
  %3341 = vrot.lane.b32.xlu0 %v1544, 32
  %v3342 = vpop.permute.xlu0 %3341
  %3343 = vrot.lane.b32.xlu0 %v2380, 32
  %v3344 = vpop.permute.xlu0 %3343
  %3345 = vrot.lane.b32.xlu0 %v2383, 32
  %v3346 = vpop.permute.xlu0 %3345
  %3347 = vrot.lane.b32.xlu0 %v3219, 32
  %v3348 = vpop.permute.xlu0 %3347
  %3349 = vrot.lane.b32.xlu0 %v3222, 32
  %v3350 = vpop.permute.xlu0 %3349
  %vm3415 = vcmask 290048
  %3416 = vst.msk [vmem:[#allocation2] sm:$0xf] %vm3415, %v3224
  %3417 = vst.msk [vmem:[#allocation2 + $0x4] sm:$0xf] %vm3415, %v3226
  %3418 = vst.msk [vmem:[#allocation2 + $0x8] sm:$0xf] %vm3415, %v3228
  %3419 = vst.msk [vmem:[#allocation2 + $0xc] sm:$0xf] %vm3415, %v3230
  %3420 = vst.msk [vmem:[#allocation2 + $0x10] sm:$0xf] %vm3415, %v3232
  %3421 = vst.msk [vmem:[#allocation2 + $0x14] sm:$0xf] %vm3415, %v3234
  %3422 = vst.msk [vmem:[#allocation2 + $0x18] sm:$0xf] %vm3415, %v3236
  %3423 = vst.msk [vmem:[#allocation2 + $0x1c] sm:$0xf] %vm3415, %v3238
  %3424 = vst.msk [vmem:[#allocation2 + $0x20] sm:$0xf] %vm3415, %v3240
  %3425 = vst.msk [vmem:[#allocation2 + $0x24] sm:$0xf] %vm3415, %v3242
  %3426 = vst.msk [vmem:[#allocation2 + $0x28] sm:$0xf] %vm3415, %v3244
  %3427 = vst.msk [vmem:[#allocation2 + $0x2c] sm:$0xf] %vm3415, %v3246
  %3428 = vst.msk [vmem:[#allocation2 + $0x30] sm:$0xf] %vm3415, %v3248
  %3429 = vst.msk [vmem:[#allocation2 + $0x34] sm:$0xf] %vm3415, %v3250
  %3430 = vst.msk [vmem:[#allocation2 + $0x38] sm:$0xf] %vm3415, %v3252
  %3431 = vst.msk [vmem:[#allocation2 + $0x3c] sm:$0xf] %vm3415, %v3254
  %3432 = vst.msk [vmem:[#allocation2 + $0x40] sm:$0xf] %vm3415, %v3256
  %3433 = vst.msk [vmem:[#allocation2 + $0x44] sm:$0xf] %vm3415, %v3258
  %3434 = vst.msk [vmem:[#allocation2 + $0x48] sm:$0xf] %vm3415, %v3260
  %3435 = vst.msk [vmem:[#allocation2 + $0x4c] sm:$0xf] %vm3415, %v3262
  %3436 = vst.msk [vmem:[#allocation2 + $0x50] sm:$0xf] %vm3415, %v3264
  %3437 = vst.msk [vmem:[#allocation2 + $0x54] sm:$0xf] %vm3415, %v3266
  %3438 = vst.msk [vmem:[#allocation2 + $0x58] sm:$0xf] %vm3415, %v3268
  %3439 = vst.msk [vmem:[#allocation2 + $0x5c] sm:$0xf] %vm3415, %v3270
  %3440 = vst.msk [vmem:[#allocation2 + $0x60] sm:$0xf] %vm3415, %v3272
  %3441 = vst.msk [vmem:[#allocation2 + $0x64] sm:$0xf] %vm3415, %v3274
  %3442 = vst.msk [vmem:[#allocation2 + $0x68] sm:$0xf] %vm3415, %v3276
  %3443 = vst.msk [vmem:[#allocation2 + $0x6c] sm:$0xf] %vm3415, %v3278
  %3444 = vst.msk [vmem:[#allocation2 + $0x70] sm:$0xf] %vm3415, %v3280
  %3445 = vst.msk [vmem:[#allocation2 + $0x74] sm:$0xf] %vm3415, %v3282
  %3446 = vst.msk [vmem:[#allocation2 + $0x78] sm:$0xf] %vm3415, %v3284
  %3447 = vst.msk [vmem:[#allocation2 + $0x7c] sm:$0xf] %vm3415, %v3286
  %3448 = vst.msk [vmem:[#allocation2 + $0x80] sm:$0xf] %vm3415, %v3288
  %3449 = vst.msk [vmem:[#allocation2 + $0x84] sm:$0xf] %vm3415, %v3290
  %3450 = vst.msk [vmem:[#allocation2 + $0x88] sm:$0xf] %vm3415, %v3292
  %3451 = vst.msk [vmem:[#allocation2 + $0x8c] sm:$0xf] %vm3415, %v3294
  %3452 = vst.msk [vmem:[#allocation2 + $0x90] sm:$0xf] %vm3415, %v3296
  %3453 = vst.msk [vmem:[#allocation2 + $0x94] sm:$0xf] %vm3415, %v3298
  %3454 = vst.msk [vmem:[#allocation2 + $0x98] sm:$0xf] %vm3415, %v3300
  %3455 = vst.msk [vmem:[#allocation2 + $0x9c] sm:$0xf] %vm3415, %v3302
  %3456 = vst.msk [vmem:[#allocation2 + $0xa0] sm:$0xf] %vm3415, %v3304
  %3457 = vst.msk [vmem:[#allocation2 + $0xa4] sm:$0xf] %vm3415, %v3306
  %3458 = vst.msk [vmem:[#allocation2 + $0xa8] sm:$0xf] %vm3415, %v3308
  %3459 = vst.msk [vmem:[#allocation2 + $0xac] sm:$0xf] %vm3415, %v3310
  %3460 = vst.msk [vmem:[#allocation2 + $0xb0] sm:$0xf] %vm3415, %v3312
  %3461 = vst.msk [vmem:[#allocation2 + $0xb4] sm:$0xf] %vm3415, %v3314
  %3462 = vst.msk [vmem:[#allocation2 + $0xb8] sm:$0xf] %vm3415, %v3316
  %3463 = vst.msk [vmem:[#allocation2 + $0xbc] sm:$0xf] %vm3415, %v3318
  %3464 = vst.msk [vmem:[#allocation2 + $0xc0] sm:$0xf] %vm3415, %v3320
  %3465 = vst.msk [vmem:[#allocation2 + $0xc4] sm:$0xf] %vm3415, %v3322
  %3466 = vst.msk [vmem:[#allocation2 + $0xc8] sm:$0xf] %vm3415, %v3324
  %3467 = vst.msk [vmem:[#allocation2 + $0xcc] sm:$0xf] %vm3415, %v3326
  %3468 = vst.msk [vmem:[#allocation2 + $0xd0] sm:$0xf] %vm3415, %v3328
  %3469 = vst.msk [vmem:[#allocation2 + $0xd4] sm:$0xf] %vm3415, %v3330
  %3470 = vst.msk [vmem:[#allocation2 + $0xd8] sm:$0xf] %vm3415, %v3332
  %3471 = vst.msk [vmem:[#allocation2 + $0xdc] sm:$0xf] %vm3415, %v3334
  %3472 = vst.msk [vmem:[#allocation2 + $0xe0] sm:$0xf] %vm3415, %v3336
  %3473 = vst.msk [vmem:[#allocation2 + $0xe4] sm:$0xf] %vm3415, %v3338
  %3474 = vst.msk [vmem:[#allocation2 + $0xe8] sm:$0xf] %vm3415, %v3340
  %3475 = vst.msk [vmem:[#allocation2 + $0xec] sm:$0xf] %vm3415, %v3342
  %3476 = vst.msk [vmem:[#allocation2 + $0xf0] sm:$0xf] %vm3415, %v3344
  %3477 = vst.msk [vmem:[#allocation2 + $0xf4] sm:$0xf] %vm3415, %v3346
  %3478 = vst.msk [vmem:[#allocation2 + $0xf8] sm:$0xf] %vm3415, %v3348
  %3479 = vst.msk [vmem:[#allocation2 + $0xfc] sm:$0xf] %vm3415, %v3350
  %v3480 = vld [vmem:[#allocation2] sm:$0xf]
  %v3481 = vld [vmem:[#allocation2 + $0x4] sm:$0xf]
  %v3482 = vld [vmem:[#allocation2 + $0x8] sm:$0xf]
  %v3483 = vld [vmem:[#allocation2 + $0xc] sm:$0xf]
  %v3484 = vld [vmem:[#allocation2 + $0x10] sm:$0xf]
  %v3485 = vld [vmem:[#allocation2 + $0x14] sm:$0xf]
  %v3486 = vld [vmem:[#allocation2 + $0x18] sm:$0xf]
  %v3487 = vld [vmem:[#allocation2 + $0x1c] sm:$0xf]
  %v3488 = vld [vmem:[#allocation2 + $0x20] sm:$0xf]
  %v3489 = vld [vmem:[#allocation2 + $0x24] sm:$0xf]
  %v3490 = vld [vmem:[#allocation2 + $0x28] sm:$0xf]
  %v3491 = vld [vmem:[#allocation2 + $0x2c] sm:$0xf]
  %v3492 = vld [vmem:[#allocation2 + $0x30] sm:$0xf]
  %v3493 = vld [vmem:[#allocation2 + $0x34] sm:$0xf]
  %v3494 = vld [vmem:[#allocation2 + $0x38] sm:$0xf]
  %v3495 = vld [vmem:[#allocation2 + $0x3c] sm:$0xf]
  %v3496 = vld [vmem:[#allocation2 + $0x40] sm:$0xf]
  %v3497 = vld [vmem:[#allocation2 + $0x44] sm:$0xf]
  %v3498 = vld [vmem:[#allocation2 + $0x48] sm:$0xf]
  %v3499 = vld [vmem:[#allocation2 + $0x4c] sm:$0xf]
  %v3500 = vld [vmem:[#allocation2 + $0x50] sm:$0xf]
  %v3501 = vld [vmem:[#allocation2 + $0x54] sm:$0xf]
  %v3502 = vld [vmem:[#allocation2 + $0x58] sm:$0xf]
  %v3503 = vld [vmem:[#allocation2 + $0x5c] sm:$0xf]
  %v3504 = vld [vmem:[#allocation2 + $0x60] sm:$0xf]
  %v3505 = vld [vmem:[#allocation2 + $0x64] sm:$0xf]
  %v3506 = vld [vmem:[#allocation2 + $0x68] sm:$0xf]
  %v3507 = vld [vmem:[#allocation2 + $0x6c] sm:$0xf]
  %v3508 = vld [vmem:[#allocation2 + $0x70] sm:$0xf]
  %v3509 = vld [vmem:[#allocation2 + $0x74] sm:$0xf]
  %v3510 = vld [vmem:[#allocation2 + $0x78] sm:$0xf]
  %v3511 = vld [vmem:[#allocation2 + $0x7c] sm:$0xf]
  %v3512 = vld [vmem:[#allocation2 + $0x80] sm:$0xf]
  %v3513 = vld [vmem:[#allocation2 + $0x84] sm:$0xf]
  %v3514 = vld [vmem:[#allocation2 + $0x88] sm:$0xf]
  %v3515 = vld [vmem:[#allocation2 + $0x8c] sm:$0xf]
  %v3516 = vld [vmem:[#allocation2 + $0x90] sm:$0xf]
  %v3517 = vld [vmem:[#allocation2 + $0x94] sm:$0xf]
  %v3518 = vld [vmem:[#allocation2 + $0x98] sm:$0xf]
  %v3519 = vld [vmem:[#allocation2 + $0x9c] sm:$0xf]
  %v3520 = vld [vmem:[#allocation2 + $0xa0] sm:$0xf]
  %v3521 = vld [vmem:[#allocation2 + $0xa4] sm:$0xf]
  %v3522 = vld [vmem:[#allocation2 + $0xa8] sm:$0xf]
  %v3523 = vld [vmem:[#allocation2 + $0xac] sm:$0xf]
  %v3524 = vld [vmem:[#allocation2 + $0xb0] sm:$0xf]
  %v3525 = vld [vmem:[#allocation2 + $0xb4] sm:$0xf]
  %v3526 = vld [vmem:[#allocation2 + $0xb8] sm:$0xf]
  %v3527 = vld [vmem:[#allocation2 + $0xbc] sm:$0xf]
  %v3528 = vld [vmem:[#allocation2 + $0xc0] sm:$0xf]
  %v3529 = vld [vmem:[#allocation2 + $0xc4] sm:$0xf]
  %v3530 = vld [vmem:[#allocation2 + $0xc8] sm:$0xf]
  %v3531 = vld [vmem:[#allocation2 + $0xcc] sm:$0xf]
  %v3532 = vld [vmem:[#allocation2 + $0xd0] sm:$0xf]
  %v3533 = vld [vmem:[#allocation2 + $0xd4] sm:$0xf]
  %v3534 = vld [vmem:[#allocation2 + $0xd8] sm:$0xf]
  %v3535 = vld [vmem:[#allocation2 + $0xdc] sm:$0xf]
  %v3536 = vld [vmem:[#allocation2 + $0xe0] sm:$0xf]
  %v3537 = vld [vmem:[#allocation2 + $0xe4] sm:$0xf]
  %v3538 = vld [vmem:[#allocation2 + $0xe8] sm:$0xf]
  %v3539 = vld [vmem:[#allocation2 + $0xec] sm:$0xf]
  %v3540 = vld [vmem:[#allocation2 + $0xf0] sm:$0xf]
  %v3541 = vld [vmem:[#allocation2 + $0xf4] sm:$0xf]
  %v3542 = vld [vmem:[#allocation2 + $0xf8] sm:$0xf]
  %v3543 = vld [vmem:[#allocation2 + $0xfc] sm:$0xf]
  %v3544 = vld [vmem:[%s1] sm:$0xf]
  %v3545 = vld [vmem:[%s1 + $0x4] sm:$0xf]
  %v3546 = vld [vmem:[%s1 + $0x8] sm:$0xf]
  %v3547 = vld [vmem:[%s1 + $0xc] sm:$0xf]
  %v3548 = vld [vmem:[%s1 + $0x10] sm:$0x3]
  %v3549 = vld [vmem:[%s2] sm:$0x1]
  %v3551 = vlaneseq
  %v3552 = vshrl.u32 %v3551, 7
  %v3553 = vsub.s32 0, %v3552
  %v3554 = vrot.slane %v3549, %v3553
  %v3620 = vunpack.c.l.b16 %v3480
  %v3621 = vunpack.c.l.b16 %v3481
  %v3622 = vunpack.c.l.b16 %v3482
  %v3623 = vunpack.c.l.b16 %v3483
  %v3624 = vunpack.c.l.b16 %v3484
  %v3625 = vunpack.c.l.b16 %v3485
  %v3626 = vunpack.c.l.b16 %v3486
  %v3627 = vunpack.c.l.b16 %v3487
  %v3628 = vunpack.c.l.b16 %v3488
  %v3629 = vunpack.c.l.b16 %v3489
  %v3630 = vunpack.c.l.b16 %v3490
  %v3631 = vunpack.c.l.b16 %v3491
  %v3632 = vunpack.c.l.b16 %v3492
  %v3633 = vunpack.c.l.b16 %v3493
  %v3634 = vunpack.c.l.b16 %v3494
  %v3635 = vunpack.c.l.b16 %v3495
  %v3636 = vunpack.c.l.b16 %v3496
  %v3637 = vunpack.c.l.b16 %v3497
  %v3638 = vunpack.c.l.b16 %v3498
  %v3639 = vunpack.c.l.b16 %v3499
  %v3640 = vunpack.c.l.b16 %v3500
  %v3641 = vunpack.c.l.b16 %v3501
  %v3642 = vunpack.c.l.b16 %v3502
  %v3643 = vunpack.c.l.b16 %v3503
  %v3644 = vunpack.c.l.b16 %v3504
  %v3645 = vunpack.c.l.b16 %v3505
  %v3646 = vunpack.c.l.b16 %v3506
  %v3647 = vunpack.c.l.b16 %v3507
  %v3648 = vunpack.c.l.b16 %v3508
  %v3649 = vunpack.c.l.b16 %v3509
  %v3650 = vunpack.c.l.b16 %v3510
  %v3651 = vunpack.c.l.b16 %v3511
  %v3652 = vunpack.c.l.b16 %v3512
  %v3653 = vunpack.c.l.b16 %v3513
  %v3654 = vunpack.c.l.b16 %v3514
  %v3655 = vunpack.c.l.b16 %v3515
  %v3656 = vunpack.c.l.b16 %v3516
  %v3657 = vunpack.c.l.b16 %v3517
  %v3658 = vunpack.c.l.b16 %v3518
  %v3659 = vunpack.c.l.b16 %v3519
  %v3660 = vunpack.c.l.b16 %v3520
  %v3661 = vunpack.c.l.b16 %v3521
  %v3662 = vunpack.c.l.b16 %v3522
  %v3663 = vunpack.c.l.b16 %v3523
  %v3664 = vunpack.c.l.b16 %v3524
  %v3665 = vunpack.c.l.b16 %v3525
  %v3666 = vunpack.c.l.b16 %v3526
  %v3667 = vunpack.c.l.b16 %v3527
  %v3668 = vunpack.c.l.b16 %v3528
  %v3669 = vunpack.c.l.b16 %v3529
  %v3670 = vunpack.c.l.b16 %v3530
  %v3671 = vunpack.c.l.b16 %v3531
  %v3672 = vunpack.c.l.b16 %v3532
  %v3673 = vunpack.c.l.b16 %v3533
  %v3674 = vunpack.c.l.b16 %v3534
  %v3675 = vunpack.c.l.b16 %v3535
  %v3676 = vunpack.c.l.b16 %v3536
  %v3677 = vunpack.c.l.b16 %v3537
  %v3678 = vunpack.c.l.b16 %v3538
  %v3679 = vunpack.c.l.b16 %v3539
  %v3680 = vunpack.c.l.b16 %v3540
  %v3681 = vunpack.c.l.b16 %v3541
  %v3682 = vunpack.c.l.b16 %v3542
  %v3683 = vunpack.c.l.b16 %v3543
  %v3684 = vpack.c.b16 %v3621, %v3620
  %v3685 = vpack.c.b16 %v3623, %v3622
  %v3686 = vpack.c.b16 %v3625, %v3624
  %v3687 = vpack.c.b16 %v3627, %v3626
  %v3688 = vpack.c.b16 %v3629, %v3628
  %v3689 = vpack.c.b16 %v3631, %v3630
  %v3690 = vpack.c.b16 %v3633, %v3632
  %v3691 = vpack.c.b16 %v3635, %v3634
  %v3692 = vpack.c.b16 %v3637, %v3636
  %v3693 = vpack.c.b16 %v3639, %v3638
  %v3694 = vpack.c.b16 %v3641, %v3640
  %v3695 = vpack.c.b16 %v3643, %v3642
  %v3696 = vpack.c.b16 %v3645, %v3644
  %v3697 = vpack.c.b16 %v3647, %v3646
  %v3698 = vpack.c.b16 %v3649, %v3648
  %v3699 = vpack.c.b16 %v3651, %v3650
  %v3700 = vpack.c.b16 %v3653, %v3652
  %v3701 = vpack.c.b16 %v3655, %v3654
  %v3702 = vpack.c.b16 %v3657, %v3656
  %v3703 = vpack.c.b16 %v3659, %v3658
  %v3704 = vpack.c.b16 %v3661, %v3660
  %v3705 = vpack.c.b16 %v3663, %v3662
  %v3706 = vpack.c.b16 %v3665, %v3664
  %v3707 = vpack.c.b16 %v3667, %v3666
  %v3708 = vpack.c.b16 %v3669, %v3668
  %v3709 = vpack.c.b16 %v3671, %v3670
  %v3710 = vpack.c.b16 %v3673, %v3672
  %v3711 = vpack.c.b16 %v3675, %v3674
  %v3712 = vpack.c.b16 %v3677, %v3676
  %v3713 = vpack.c.b16 %v3679, %v3678
  %v3714 = vpack.c.b16 %v3681, %v3680
  %v3715 = vpack.c.b16 %v3683, %v3682
  %v3721 = vunpack.c.l.b16 %v3544
  %v3722 = vunpack.c.l.b16 %v3545
  %v3723 = vunpack.c.l.b16 %v3546
  %v3724 = vunpack.c.l.b16 %v3547
  %v3725 = vunpack.c.l.b16 %v3548
  %v3726 = vpack.c.b16 %v3722, %v3721
  %v3727 = vpack.c.b16 %v3724, %v3723
  %v3728 = vpack.c.b16 %v3725, %v3725
  %vm3731 = vcmask 293888
  %v3733 = vsel %vm3731, %v3684, 0
  %v3736 = vsel %vm3731, %v3685, 0
  %v3739 = vsel %vm3731, %v3686, 0
  %v3742 = vsel %vm3731, %v3687, 0
  %v3745 = vsel %vm3731, %v3688, 0
  %v3748 = vsel %vm3731, %v3689, 0
  %v3751 = vsel %vm3731, %v3690, 0
  %v3754 = vsel %vm3731, %v3691, 0
  %v3757 = vsel %vm3731, %v3692, 0
  %v3760 = vsel %vm3731, %v3693, 0
  %v3763 = vsel %vm3731, %v3694, 0
  %v3766 = vsel %vm3731, %v3695, 0
  %v3769 = vsel %vm3731, %v3696, 0
  %v3772 = vsel %vm3731, %v3697, 0
  %v3775 = vsel %vm3731, %v3698, 0
  %v3778 = vsel %vm3731, %v3699, 0
  %v3781 = vsel %vm3731, %v3700, 0
  %v3784 = vsel %vm3731, %v3701, 0
  %v3787 = vsel %vm3731, %v3702, 0
  %v3790 = vsel %vm3731, %v3703, 0
  %v3793 = vsel %vm3731, %v3704, 0
  %v3796 = vsel %vm3731, %v3705, 0
  %v3799 = vsel %vm3731, %v3706, 0
  %v3802 = vsel %vm3731, %v3707, 0
  %v3805 = vsel %vm3731, %v3708, 0
  %v3808 = vsel %vm3731, %v3709, 0
  %v3811 = vsel %vm3731, %v3710, 0
  %v3814 = vsel %vm3731, %v3711, 0
  %v3817 = vsel %vm3731, %v3712, 0
  %v3820 = vsel %vm3731, %v3713, 0
  %v3823 = vsel %vm3731, %v3714, 0
  %v3826 = vsel %vm3731, %v3715, 0
  %vm3828 = vcmask 1041408
  %v3830 = vsel %vm3828, %v3728, 0
  %3832 = vmatprep.subr.bf16.mxu0 0
  %3833 = vmatpush1.bf16.msra.mxu0 0
  %3834 = vmatprep.subr.bf16.mxu0 0
  %3835 = vmatpush1.bf16.msra.mxu0 0
  %3836 = vmatprep.subr.bf16.mxu0 0
  %3837 = vmatpush1.bf16.msra.mxu0 0
  %3838 = vmatprep.subr.bf16.mxu0 0
  %3839 = vmatpush1.bf16.msra.mxu0 0
  %3840 = vmatprep.subr.bf16.mxu0 0
  %3841 = vmatpush1.bf16.msra.mxu0 0
  %3842 = vmatprep.subr.bf16.mxu0 0
  %3843 = vmatpush1.bf16.msra.mxu0 %v3830
  %3844 = vmatprep.subr.bf16.mxu0 0
  %3845 = vmatpush1.bf16.msra.mxu0 %v3727
  %3846 = vmatprep.subr.bf16.mxu0 0
  %3847 = vmatpush1.bf16.msra.mxu0 %v3726
  %3848 = vmatprep.subr.bf16.mxu0 0
  %3849 = vmatpush2.bf16.msra.mxu0 0
  %3850 = vmatprep.subr.bf16.mxu0 0
  %3851 = vmatpush2.bf16.msra.mxu0 0
  %3852 = vmatprep.subr.bf16.mxu0 0
  %3853 = vmatpush2.bf16.msra.mxu0 0
  %3854 = vmatprep.subr.bf16.mxu0 0
  %3855 = vmatpush2.bf16.msra.mxu0 0
  %3856 = vmatprep.subr.bf16.mxu0 0
  %3857 = vmatpush2.bf16.msra.mxu0 0
  %3858 = vmatprep.subr.bf16.mxu0 0
  %3859 = vmatpush2.bf16.msra.mxu0 0
  %3860 = vmatprep.subr.bf16.mxu0 0
  %3861 = vmatpush2.bf16.msra.mxu0 0
  %3862 = vmatprep.subr.bf16.mxu0 0
  %3863 = vmatpush2.bf16.msra.mxu0 0
  %3864 = vmatprep.mubr.bf16.mxu0 0
  %3865 = vmatmul.mubr.bf16.gmra.mxu0 %v3733
  %v3866 = vpop.f32.mrf.mxu0
  %v3867 = vadd.f32 %v3554, %v3866
  %v3868 = vpop.f32.mrf.mxu0
  %v3869 = vpop.f32.mrf.mxu0
  %v3870 = vadd.f32 %v3554, %v3869
  %v3871 = vpop.f32.mrf.mxu0
  %3872 = vmatprep.mubr.bf16.mxu0 0
  %3873 = vmatmul.mubr.bf16.gmra.mxu0 %v3736
  %v3874 = vpop.f32.mrf.mxu0
  %v3875 = vadd.f32 %v3554, %v3874
  %v3876 = vpop.f32.mrf.mxu0
  %v3877 = vpop.f32.mrf.mxu0
  %v3878 = vadd.f32 %v3554, %v3877
  %v3879 = vpop.f32.mrf.mxu0
  %3880 = vmatprep.mubr.bf16.mxu0 0
  %3881 = vmatmul.mubr.bf16.gmra.mxu0 %v3739
  %v3882 = vpop.f32.mrf.mxu0
  %v3883 = vadd.f32 %v3554, %v3882
  %v3884 = vpop.f32.mrf.mxu0
  %v3885 = vpop.f32.mrf.mxu0
  %v3886 = vadd.f32 %v3554, %v3885
  %v3887 = vpop.f32.mrf.mxu0
  %3888 = vmatprep.mubr.bf16.mxu0 0
  %3889 = vmatmul.mubr.bf16.gmra.mxu0 %v3742
  %v3890 = vpop.f32.mrf.mxu0
  %v3891 = vadd.f32 %v3554, %v3890
  %v3892 = vpop.f32.mrf.mxu0
  %v3893 = vpop.f32.mrf.mxu0
  %v3894 = vadd.f32 %v3554, %v3893
  %v3895 = vpop.f32.mrf.mxu0
  %3896 = vmatprep.mubr.bf16.mxu0 0
  %3897 = vmatmul.mubr.bf16.gmra.mxu0 %v3745
  %v3898 = vpop.f32.mrf.mxu0
  %v3899 = vadd.f32 %v3554, %v3898
  %v3900 = vpop.f32.mrf.mxu0
  %v3901 = vpop.f32.mrf.mxu0
  %v3902 = vadd.f32 %v3554, %v3901
  %v3903 = vpop.f32.mrf.mxu0
  %3904 = vmatprep.mubr.bf16.mxu0 0
  %3905 = vmatmul.mubr.bf16.gmra.mxu0 %v3748
  %v3906 = vpop.f32.mrf.mxu0
  %v3907 = vadd.f32 %v3554, %v3906
  %v3908 = vpop.f32.mrf.mxu0
  %v3909 = vpop.f32.mrf.mxu0
  %v3910 = vadd.f32 %v3554, %v3909
  %v3911 = vpop.f32.mrf.mxu0
  %3912 = vmatprep.mubr.bf16.mxu0 0
  %3913 = vmatmul.mubr.bf16.gmra.mxu0 %v3751
  %v3914 = vpop.f32.mrf.mxu0
  %v3915 = vadd.f32 %v3554, %v3914
  %v3916 = vpop.f32.mrf.mxu0
  %v3917 = vpop.f32.mrf.mxu0
  %v3918 = vadd.f32 %v3554, %v3917
  %v3919 = vpop.f32.mrf.mxu0
  %3920 = vmatprep.mubr.bf16.mxu0 0
  %3921 = vmatmul.mubr.bf16.gmra.mxu0 %v3754
  %v3922 = vpop.f32.mrf.mxu0
  %v3923 = vadd.f32 %v3554, %v3922
  %v3924 = vpop.f32.mrf.mxu0
  %v3925 = vpop.f32.mrf.mxu0
  %v3926 = vadd.f32 %v3554, %v3925
  %v3927 = vpop.f32.mrf.mxu0
  %3928 = vmatprep.mubr.bf16.mxu0 0
  %3929 = vmatmul.mubr.bf16.gmra.mxu0 %v3757
  %v3930 = vpop.f32.mrf.mxu0
  %v3931 = vadd.f32 %v3554, %v3930
  %v3932 = vpop.f32.mrf.mxu0
  %v3933 = vpop.f32.mrf.mxu0
  %v3934 = vadd.f32 %v3554, %v3933
  %v3935 = vpop.f32.mrf.mxu0
  %3936 = vmatprep.mubr.bf16.mxu0 0
  %3937 = vmatmul.mubr.bf16.gmra.mxu0 %v3760
  %v3938 = vpop.f32.mrf.mxu0
  %v3939 = vadd.f32 %v3554, %v3938
  %v3940 = vpop.f32.mrf.mxu0
  %v3941 = vpop.f32.mrf.mxu0
  %v3942 = vadd.f32 %v3554, %v3941
  %v3943 = vpop.f32.mrf.mxu0
  %3944 = vmatprep.mubr.bf16.mxu0 0
  %3945 = vmatmul.mubr.bf16.gmra.mxu0 %v3763
  %v3946 = vpop.f32.mrf.mxu0
  %v3947 = vadd.f32 %v3554, %v3946
  %v3948 = vpop.f32.mrf.mxu0
  %v3949 = vpop.f32.mrf.mxu0
  %v3950 = vadd.f32 %v3554, %v3949
  %v3951 = vpop.f32.mrf.mxu0
  %3952 = vmatprep.mubr.bf16.mxu0 0
  %3953 = vmatmul.mubr.bf16.gmra.mxu0 %v3766
  %v3954 = vpop.f32.mrf.mxu0
  %v3955 = vadd.f32 %v3554, %v3954
  %v3956 = vpop.f32.mrf.mxu0
  %v3957 = vpop.f32.mrf.mxu0
  %v3958 = vadd.f32 %v3554, %v3957
  %v3959 = vpop.f32.mrf.mxu0
  %3960 = vmatprep.mubr.bf16.mxu0 0
  %3961 = vmatmul.mubr.bf16.gmra.mxu0 %v3769
  %v3962 = vpop.f32.mrf.mxu0
  %v3963 = vadd.f32 %v3554, %v3962
  %v3964 = vpop.f32.mrf.mxu0
  %v3965 = vpop.f32.mrf.mxu0
  %v3966 = vadd.f32 %v3554, %v3965
  %v3967 = vpop.f32.mrf.mxu0
  %3968 = vmatprep.mubr.bf16.mxu0 0
  %3969 = vmatmul.mubr.bf16.gmra.mxu0 %v3772
  %v3970 = vpop.f32.mrf.mxu0
  %v3971 = vadd.f32 %v3554, %v3970
  %v3972 = vpop.f32.mrf.mxu0
  %v3973 = vpop.f32.mrf.mxu0
  %v3974 = vadd.f32 %v3554, %v3973
  %v3975 = vpop.f32.mrf.mxu0
  %3976 = vmatprep.mubr.bf16.mxu0 0
  %3977 = vmatmul.mubr.bf16.gmra.mxu0 %v3775
  %v3978 = vpop.f32.mrf.mxu0
  %v3979 = vadd.f32 %v3554, %v3978
  %v3980 = vpop.f32.mrf.mxu0
  %v3981 = vpop.f32.mrf.mxu0
  %v3982 = vadd.f32 %v3554, %v3981
  %v3983 = vpop.f32.mrf.mxu0
  %3984 = vmatprep.mubr.bf16.mxu0 0
  %3985 = vmatmul.mubr.bf16.gmra.mxu0 %v3778
  %v3986 = vpop.f32.mrf.mxu0
  %v3987 = vadd.f32 %v3554, %v3986
  %v3988 = vpop.f32.mrf.mxu0
  %v3989 = vpop.f32.mrf.mxu0
  %v3990 = vadd.f32 %v3554, %v3989
  %v3991 = vpop.f32.mrf.mxu0
  %3992 = vmatprep.mubr.bf16.mxu0 0
  %3993 = vmatmul.mubr.bf16.gmra.mxu0 %v3781
  %v3994 = vpop.f32.mrf.mxu0
  %v3995 = vadd.f32 %v3554, %v3994
  %v3996 = vpop.f32.mrf.mxu0
  %v3997 = vpop.f32.mrf.mxu0
  %v3998 = vadd.f32 %v3554, %v3997
  %v3999 = vpop.f32.mrf.mxu0
  %4000 = vmatprep.mubr.bf16.mxu0 0
  %4001 = vmatmul.mubr.bf16.gmra.mxu0 %v3784
  %v4002 = vpop.f32.mrf.mxu0
  %v4003 = vadd.f32 %v3554, %v4002
  %v4004 = vpop.f32.mrf.mxu0
  %v4005 = vpop.f32.mrf.mxu0
  %v4006 = vadd.f32 %v3554, %v4005
  %v4007 = vpop.f32.mrf.mxu0
  %4008 = vmatprep.mubr.bf16.mxu0 0
  %4009 = vmatmul.mubr.bf16.gmra.mxu0 %v3787
  %v4010 = vpop.f32.mrf.mxu0
  %v4011 = vadd.f32 %v3554, %v4010
  %v4012 = vpop.f32.mrf.mxu0
  %v4013 = vpop.f32.mrf.mxu0
  %v4014 = vadd.f32 %v3554, %v4013
  %v4015 = vpop.f32.mrf.mxu0
  %4016 = vmatprep.mubr.bf16.mxu0 0
  %4017 = vmatmul.mubr.bf16.gmra.mxu0 %v3790
  %v4018 = vpop.f32.mrf.mxu0
  %v4019 = vadd.f32 %v3554, %v4018
  %v4020 = vpop.f32.mrf.mxu0
  %v4021 = vpop.f32.mrf.mxu0
  %v4022 = vadd.f32 %v3554, %v4021
  %v4023 = vpop.f32.mrf.mxu0
  %4024 = vmatprep.mubr.bf16.mxu0 0
  %4025 = vmatmul.mubr.bf16.gmra.mxu0 %v3793
  %v4026 = vpop.f32.mrf.mxu0
  %v4027 = vadd.f32 %v3554, %v4026
  %v4028 = vpop.f32.mrf.mxu0
  %v4029 = vpop.f32.mrf.mxu0
  %v4030 = vadd.f32 %v3554, %v4029
  %v4031 = vpop.f32.mrf.mxu0
  %4032 = vmatprep.mubr.bf16.mxu0 0
  %4033 = vmatmul.mubr.bf16.gmra.mxu0 %v3796
  %v4034 = vpop.f32.mrf.mxu0
  %v4035 = vadd.f32 %v3554, %v4034
  %v4036 = vpop.f32.mrf.mxu0
  %v4037 = vpop.f32.mrf.mxu0
  %v4038 = vadd.f32 %v3554, %v4037
  %v4039 = vpop.f32.mrf.mxu0
  %4040 = vmatprep.mubr.bf16.mxu0 0
  %4041 = vmatmul.mubr.bf16.gmra.mxu0 %v3799
  %v4042 = vpop.f32.mrf.mxu0
  %v4043 = vadd.f32 %v3554, %v4042
  %v4044 = vpop.f32.mrf.mxu0
  %v4045 = vpop.f32.mrf.mxu0
  %v4046 = vadd.f32 %v3554, %v4045
  %v4047 = vpop.f32.mrf.mxu0
  %4048 = vmatprep.mubr.bf16.mxu0 0
  %4049 = vmatmul.mubr.bf16.gmra.mxu0 %v3802
  %v4050 = vpop.f32.mrf.mxu0
  %v4051 = vadd.f32 %v3554, %v4050
  %v4052 = vpop.f32.mrf.mxu0
  %v4053 = vpop.f32.mrf.mxu0
  %v4054 = vadd.f32 %v3554, %v4053
  %v4055 = vpop.f32.mrf.mxu0
  %4056 = vmatprep.mubr.bf16.mxu0 0
  %4057 = vmatmul.mubr.bf16.gmra.mxu0 %v3805
  %v4058 = vpop.f32.mrf.mxu0
  %v4059 = vadd.f32 %v3554, %v4058
  %v4060 = vpop.f32.mrf.mxu0
  %v4061 = vpop.f32.mrf.mxu0
  %v4062 = vadd.f32 %v3554, %v4061
  %v4063 = vpop.f32.mrf.mxu0
  %4064 = vmatprep.mubr.bf16.mxu0 0
  %4065 = vmatmul.mubr.bf16.gmra.mxu0 %v3808
  %v4066 = vpop.f32.mrf.mxu0
  %v4067 = vadd.f32 %v3554, %v4066
  %v4068 = vpop.f32.mrf.mxu0
  %v4069 = vpop.f32.mrf.mxu0
  %v4070 = vadd.f32 %v3554, %v4069
  %v4071 = vpop.f32.mrf.mxu0
  %4072 = vmatprep.mubr.bf16.mxu0 0
  %4073 = vmatmul.mubr.bf16.gmra.mxu0 %v3811
  %v4074 = vpop.f32.mrf.mxu0
  %v4075 = vadd.f32 %v3554, %v4074
  %v4076 = vpop.f32.mrf.mxu0
  %v4077 = vpop.f32.mrf.mxu0
  %v4078 = vadd.f32 %v3554, %v4077
  %v4079 = vpop.f32.mrf.mxu0
  %4080 = vmatprep.mubr.bf16.mxu0 0
  %4081 = vmatmul.mubr.bf16.gmra.mxu0 %v3814
  %v4082 = vpop.f32.mrf.mxu0
  %v4083 = vadd.f32 %v3554, %v4082
  %v4084 = vpop.f32.mrf.mxu0
  %v4085 = vpop.f32.mrf.mxu0
  %v4086 = vadd.f32 %v3554, %v4085
  %v4087 = vpop.f32.mrf.mxu0
  %4088 = vmatprep.mubr.bf16.mxu0 0
  %4089 = vmatmul.mubr.bf16.gmra.mxu0 %v3817
  %v4090 = vpop.f32.mrf.mxu0
  %v4091 = vadd.f32 %v3554, %v4090
  %v4092 = vpop.f32.mrf.mxu0
  %v4093 = vpop.f32.mrf.mxu0
  %v4094 = vadd.f32 %v3554, %v4093
  %v4095 = vpop.f32.mrf.mxu0
  %4096 = vmatprep.mubr.bf16.mxu0 0
  %4097 = vmatmul.mubr.bf16.gmra.mxu0 %v3820
  %v4098 = vpop.f32.mrf.mxu0
  %v4099 = vadd.f32 %v3554, %v4098
  %v4100 = vpop.f32.mrf.mxu0
  %v4101 = vpop.f32.mrf.mxu0
  %v4102 = vadd.f32 %v3554, %v4101
  %v4103 = vpop.f32.mrf.mxu0
  %4104 = vmatprep.mubr.bf16.mxu0 0
  %4105 = vmatmul.mubr.bf16.gmra.mxu0 %v3823
  %v4106 = vpop.f32.mrf.mxu0
  %v4107 = vadd.f32 %v3554, %v4106
  %v4108 = vpop.f32.mrf.mxu0
  %v4109 = vpop.f32.mrf.mxu0
  %v4110 = vadd.f32 %v3554, %v4109
  %v4111 = vpop.f32.mrf.mxu0
  %4112 = vmatprep.mubr.bf16.mxu0 0
  %4113 = vmatmul.mubr.bf16.gmra.mxu0 %v3826
  %v4114 = vpop.f32.mrf.mxu0
  %v4115 = vadd.f32 %v3554, %v4114
  %v4116 = vpop.f32.mrf.mxu0
  %v4117 = vpop.f32.mrf.mxu0
  %v4118 = vadd.f32 %v3554, %v4117
  %v4119 = vpop.f32.mrf.mxu0
  %4120 = vdwg.mxu0
  %v4121 = vmax.f32 %v3867, 0.0
  %v4122 = vmax.f32 %v3870, 0.0
  %v4123 = vmax.f32 %v3875, 0.0
  %v4124 = vmax.f32 %v3878, 0.0
  %v4125 = vmax.f32 %v3883, 0.0
  %v4126 = vmax.f32 %v3886, 0.0
  %v4127 = vmax.f32 %v3891, 0.0
  %v4128 = vmax.f32 %v3894, 0.0
  %v4129 = vmax.f32 %v3899, 0.0
  %v4130 = vmax.f32 %v3902, 0.0
  %v4131 = vmax.f32 %v3907, 0.0
  %v4132 = vmax.f32 %v3910, 0.0
  %v4133 = vmax.f32 %v3915, 0.0
  %v4134 = vmax.f32 %v3918, 0.0
  %v4135 = vmax.f32 %v3923, 0.0
  %v4136 = vmax.f32 %v3926, 0.0
  %v4137 = vmax.f32 %v3931, 0.0
  %v4138 = vmax.f32 %v3934, 0.0
  %v4139 = vmax.f32 %v3939, 0.0
  %v4140 = vmax.f32 %v3942, 0.0
  %v4141 = vmax.f32 %v3947, 0.0
  %v4142 = vmax.f32 %v3950, 0.0
  %v4143 = vmax.f32 %v3955, 0.0
  %v4144 = vmax.f32 %v3958, 0.0
  %v4145 = vmax.f32 %v3963, 0.0
  %v4146 = vmax.f32 %v3966, 0.0
  %v4147 = vmax.f32 %v3971, 0.0
  %v4148 = vmax.f32 %v3974, 0.0
  %v4149 = vmax.f32 %v3979, 0.0
  %v4150 = vmax.f32 %v3982, 0.0
  %v4151 = vmax.f32 %v3987, 0.0
  %v4152 = vmax.f32 %v3990, 0.0
  %v4153 = vmax.f32 %v3995, 0.0
  %v4154 = vmax.f32 %v3998, 0.0
  %v4155 = vmax.f32 %v4003, 0.0
  %v4156 = vmax.f32 %v4006, 0.0
  %v4157 = vmax.f32 %v4011, 0.0
  %v4158 = vmax.f32 %v4014, 0.0
  %v4159 = vmax.f32 %v4019, 0.0
  %v4160 = vmax.f32 %v4022, 0.0
  %v4161 = vmax.f32 %v4027, 0.0
  %v4162 = vmax.f32 %v4030, 0.0
  %v4163 = vmax.f32 %v4035, 0.0
  %v4164 = vmax.f32 %v4038, 0.0
  %v4165 = vmax.f32 %v4043, 0.0
  %v4166 = vmax.f32 %v4046, 0.0
  %v4167 = vmax.f32 %v4051, 0.0
  %v4168 = vmax.f32 %v4054, 0.0
  %v4169 = vmax.f32 %v4059, 0.0
  %v4170 = vmax.f32 %v4062, 0.0
  %v4171 = vmax.f32 %v4067, 0.0
  %v4172 = vmax.f32 %v4070, 0.0
  %v4173 = vmax.f32 %v4075, 0.0
  %v4174 = vmax.f32 %v4078, 0.0
  %v4175 = vmax.f32 %v4083, 0.0
  %v4176 = vmax.f32 %v4086, 0.0
  %v4177 = vmax.f32 %v4091, 0.0
  %v4178 = vmax.f32 %v4094, 0.0
  %v4179 = vmax.f32 %v4099, 0.0
  %v4180 = vmax.f32 %v4102, 0.0
  %v4181 = vmax.f32 %v4107, 0.0
  %v4182 = vmax.f32 %v4110, 0.0
  %v4183 = vmax.f32 %v4115, 0.0
  %v4184 = vmax.f32 %v4118, 0.0
  %v4185 = vpack.c.bf16 %v4122, %v4121
  %v4186 = vpack.c.bf16 %v4124, %v4123
  %v4187 = vpack.c.bf16 %v4126, %v4125
  %v4188 = vpack.c.bf16 %v4128, %v4127
  %v4189 = vpack.c.bf16 %v4130, %v4129
  %v4190 = vpack.c.bf16 %v4132, %v4131
  %v4191 = vpack.c.bf16 %v4134, %v4133
  %v4192 = vpack.c.bf16 %v4136, %v4135
  %v4193 = vpack.c.bf16 %v4138, %v4137
  %v4194 = vpack.c.bf16 %v4140, %v4139
  %v4195 = vpack.c.bf16 %v4142, %v4141
  %v4196 = vpack.c.bf16 %v4144, %v4143
  %v4197 = vpack.c.bf16 %v4146, %v4145
  %v4198 = vpack.c.bf16 %v4148, %v4147
  %v4199 = vpack.c.bf16 %v4150, %v4149
  %v4200 = vpack.c.bf16 %v4152, %v4151
  %v4201 = vpack.c.bf16 %v4154, %v4153
  %v4202 = vpack.c.bf16 %v4156, %v4155
  %v4203 = vpack.c.bf16 %v4158, %v4157
  %v4204 = vpack.c.bf16 %v4160, %v4159
  %v4205 = vpack.c.bf16 %v4162, %v4161
  %v4206 = vpack.c.bf16 %v4164, %v4163
  %v4207 = vpack.c.bf16 %v4166, %v4165
  %v4208 = vpack.c.bf16 %v4168, %v4167
  %v4209 = vpack.c.bf16 %v4170, %v4169
  %v4210 = vpack.c.bf16 %v4172, %v4171
  %v4211 = vpack.c.bf16 %v4174, %v4173
  %v4212 = vpack.c.bf16 %v4176, %v4175
  %v4213 = vpack.c.bf16 %v4178, %v4177
  %v4214 = vpack.c.bf16 %v4180, %v4179
  %v4215 = vpack.c.bf16 %v4182, %v4181
  %v4216 = vpack.c.bf16 %v4184, %v4183
  %v4217 = vld [vmem:[%s3] sm:$0xf]
  %v4218 = vld [vmem:[%s3 + $0x4] sm:$0xf]
  %v4219 = vld [vmem:[%s3 + $0x8] sm:$0xf]
  %v4220 = vld [vmem:[%s3 + $0xc] sm:$0xf]
  %v4221 = vld [vmem:[%s4] sm:$0x1]
  %v4223 = vlaneseq
  %v4224 = vshrl.u32 %v4223, 7
  %v4225 = vsub.s32 0, %v4224
  %v4226 = vrot.slane %v4221, %v4225
  %v4232 = vunpack.c.l.b16 %v4217
  %v4233 = vunpack.c.l.b16 %v4218
  %v4234 = vunpack.c.l.b16 %v4219
  %v4235 = vunpack.c.l.b16 %v4220
  %v4236 = vpack.c.b16 %v4233, %v4232
  %v4237 = vpack.c.b16 %v4235, %v4234
  %vm4240 = vcmask 261120
  %v4242 = vsel %vm4240, %v4185, 0
  %v4245 = vsel %vm4240, %v4186, 0
  %v4248 = vsel %vm4240, %v4187, 0
  %v4251 = vsel %vm4240, %v4188, 0
  %v4254 = vsel %vm4240, %v4189, 0
  %v4257 = vsel %vm4240, %v4190, 0
  %v4260 = vsel %vm4240, %v4191, 0
  %v4263 = vsel %vm4240, %v4192, 0
  %v4266 = vsel %vm4240, %v4193, 0
  %v4269 = vsel %vm4240, %v4194, 0
  %v4272 = vsel %vm4240, %v4195, 0
  %v4275 = vsel %vm4240, %v4196, 0
  %v4278 = vsel %vm4240, %v4197, 0
  %v4281 = vsel %vm4240, %v4198, 0
  %v4284 = vsel %vm4240, %v4199, 0
  %v4287 = vsel %vm4240, %v4200, 0
  %v4290 = vsel %vm4240, %v4201, 0
  %v4293 = vsel %vm4240, %v4202, 0
  %v4296 = vsel %vm4240, %v4203, 0
  %v4299 = vsel %vm4240, %v4204, 0
  %v4302 = vsel %vm4240, %v4205, 0
  %v4305 = vsel %vm4240, %v4206, 0
  %v4308 = vsel %vm4240, %v4207, 0
  %v4311 = vsel %vm4240, %v4208, 0
  %v4314 = vsel %vm4240, %v4209, 0
  %v4317 = vsel %vm4240, %v4210, 0
  %v4320 = vsel %vm4240, %v4211, 0
  %v4323 = vsel %vm4240, %v4212, 0
  %v4326 = vsel %vm4240, %v4213, 0
  %v4329 = vsel %vm4240, %v4214, 0
  %v4332 = vsel %vm4240, %v4215, 0
  %v4335 = vsel %vm4240, %v4216, 0
  %4337 = vmatprep.subr.bf16.mxu0 0
  %4338 = vmatpush1.bf16.msra.mxu0 0
  %4339 = vmatprep.subr.bf16.mxu0 0
  %4340 = vmatpush1.bf16.msra.mxu0 0
  %4341 = vmatprep.subr.bf16.mxu0 0
  %4342 = vmatpush1.bf16.msra.mxu0 0
  %4343 = vmatprep.subr.bf16.mxu0 0
  %4344 = vmatpush1.bf16.msra.mxu0 0
  %4345 = vmatprep.subr.bf16.mxu0 0
  %4346 = vmatpush1.bf16.msra.mxu0 0
  %4347 = vmatprep.subr.bf16.mxu0 0
  %4348 = vmatpush1.bf16.msra.mxu0 0
  %4349 = vmatprep.subr.bf16.mxu0 0
  %4350 = vmatpush1.bf16.msra.mxu0 %v4237
  %4351 = vmatprep.subr.bf16.mxu0 0
  %4352 = vmatpush1.bf16.msra.mxu0 %v4236
  %4353 = vmatprep.subr.bf16.mxu0 0
  %4354 = vmatpush2.bf16.msra.mxu0 0
  %4355 = vmatprep.subr.bf16.mxu0 0
  %4356 = vmatpush2.bf16.msra.mxu0 0
  %4357 = vmatprep.subr.bf16.mxu0 0
  %4358 = vmatpush2.bf16.msra.mxu0 0
  %4359 = vmatprep.subr.bf16.mxu0 0
  %4360 = vmatpush2.bf16.msra.mxu0 0
  %4361 = vmatprep.subr.bf16.mxu0 0
  %4362 = vmatpush2.bf16.msra.mxu0 0
  %4363 = vmatprep.subr.bf16.mxu0 0
  %4364 = vmatpush2.bf16.msra.mxu0 0
  %4365 = vmatprep.subr.bf16.mxu0 0
  %4366 = vmatpush2.bf16.msra.mxu0 0
  %4367 = vmatprep.subr.bf16.mxu0 0
  %4368 = vmatpush2.bf16.msra.mxu0 0
  %4369 = vmatprep.mubr.bf16.mxu0 0
  %4370 = vmatmul.mubr.bf16.gmra.mxu0 %v4242
  %v4371 = vpop.f32.mrf.mxu0
  %v4372 = vadd.f32 %v4226, %v4371
  %v4373 = vpop.f32.mrf.mxu0
  %v4374 = vpop.f32.mrf.mxu0
  %v4375 = vadd.f32 %v4226, %v4374
  %v4376 = vpop.f32.mrf.mxu0
  %4377 = vmatprep.mubr.bf16.mxu0 0
  %4378 = vmatmul.mubr.bf16.gmra.mxu0 %v4245
  %v4379 = vpop.f32.mrf.mxu0
  %v4380 = vadd.f32 %v4226, %v4379
  %v4381 = vpop.f32.mrf.mxu0
  %v4382 = vpop.f32.mrf.mxu0
  %v4383 = vadd.f32 %v4226, %v4382
  %v4384 = vpop.f32.mrf.mxu0
  %4385 = vmatprep.mubr.bf16.mxu0 0
  %4386 = vmatmul.mubr.bf16.gmra.mxu0 %v4248
  %v4387 = vpop.f32.mrf.mxu0
  %v4388 = vadd.f32 %v4226, %v4387
  %v4389 = vpop.f32.mrf.mxu0
  %v4390 = vpop.f32.mrf.mxu0
  %v4391 = vadd.f32 %v4226, %v4390
  %v4392 = vpop.f32.mrf.mxu0
  %4393 = vmatprep.mubr.bf16.mxu0 0
  %4394 = vmatmul.mubr.bf16.gmra.mxu0 %v4251
  %v4395 = vpop.f32.mrf.mxu0
  %v4396 = vadd.f32 %v4226, %v4395
  %v4397 = vpop.f32.mrf.mxu0
  %v4398 = vpop.f32.mrf.mxu0
  %v4399 = vadd.f32 %v4226, %v4398
  %v4400 = vpop.f32.mrf.mxu0
  %4401 = vmatprep.mubr.bf16.mxu0 0
  %4402 = vmatmul.mubr.bf16.gmra.mxu0 %v4254
  %v4403 = vpop.f32.mrf.mxu0
  %v4404 = vadd.f32 %v4226, %v4403
  %v4405 = vpop.f32.mrf.mxu0
  %v4406 = vpop.f32.mrf.mxu0
  %v4407 = vadd.f32 %v4226, %v4406
  %v4408 = vpop.f32.mrf.mxu0
  %4409 = vmatprep.mubr.bf16.mxu0 0
  %4410 = vmatmul.mubr.bf16.gmra.mxu0 %v4257
  %v4411 = vpop.f32.mrf.mxu0
  %v4412 = vadd.f32 %v4226, %v4411
  %v4413 = vpop.f32.mrf.mxu0
  %v4414 = vpop.f32.mrf.mxu0
  %v4415 = vadd.f32 %v4226, %v4414
  %v4416 = vpop.f32.mrf.mxu0
  %4417 = vmatprep.mubr.bf16.mxu0 0
  %4418 = vmatmul.mubr.bf16.gmra.mxu0 %v4260
  %v4419 = vpop.f32.mrf.mxu0
  %v4420 = vadd.f32 %v4226, %v4419
  %v4421 = vpop.f32.mrf.mxu0
  %v4422 = vpop.f32.mrf.mxu0
  %v4423 = vadd.f32 %v4226, %v4422
  %v4424 = vpop.f32.mrf.mxu0
  %4425 = vmatprep.mubr.bf16.mxu0 0
  %4426 = vmatmul.mubr.bf16.gmra.mxu0 %v4263
  %v4427 = vpop.f32.mrf.mxu0
  %v4428 = vadd.f32 %v4226, %v4427
  %v4429 = vpop.f32.mrf.mxu0
  %v4430 = vpop.f32.mrf.mxu0
  %v4431 = vadd.f32 %v4226, %v4430
  %v4432 = vpop.f32.mrf.mxu0
  %4433 = vmatprep.mubr.bf16.mxu0 0
  %4434 = vmatmul.mubr.bf16.gmra.mxu0 %v4266
  %v4435 = vpop.f32.mrf.mxu0
  %v4436 = vadd.f32 %v4226, %v4435
  %v4437 = vpop.f32.mrf.mxu0
  %v4438 = vpop.f32.mrf.mxu0
  %v4439 = vadd.f32 %v4226, %v4438
  %v4440 = vpop.f32.mrf.mxu0
  %4441 = vmatprep.mubr.bf16.mxu0 0
  %4442 = vmatmul.mubr.bf16.gmra.mxu0 %v4269
  %v4443 = vpop.f32.mrf.mxu0
  %v4444 = vadd.f32 %v4226, %v4443
  %v4445 = vpop.f32.mrf.mxu0
  %v4446 = vpop.f32.mrf.mxu0
  %v4447 = vadd.f32 %v4226, %v4446
  %v4448 = vpop.f32.mrf.mxu0
  %4449 = vmatprep.mubr.bf16.mxu0 0
  %4450 = vmatmul.mubr.bf16.gmra.mxu0 %v4272
  %v4451 = vpop.f32.mrf.mxu0
  %v4452 = vadd.f32 %v4226, %v4451
  %v4453 = vpop.f32.mrf.mxu0
  %v4454 = vpop.f32.mrf.mxu0
  %v4455 = vadd.f32 %v4226, %v4454
  %v4456 = vpop.f32.mrf.mxu0
  %4457 = vmatprep.mubr.bf16.mxu0 0
  %4458 = vmatmul.mubr.bf16.gmra.mxu0 %v4275
  %v4459 = vpop.f32.mrf.mxu0
  %v4460 = vadd.f32 %v4226, %v4459
  %v4461 = vpop.f32.mrf.mxu0
  %v4462 = vpop.f32.mrf.mxu0
  %v4463 = vadd.f32 %v4226, %v4462
  %v4464 = vpop.f32.mrf.mxu0
  %4465 = vmatprep.mubr.bf16.mxu0 0
  %4466 = vmatmul.mubr.bf16.gmra.mxu0 %v4278
  %v4467 = vpop.f32.mrf.mxu0
  %v4468 = vadd.f32 %v4226, %v4467
  %v4469 = vpop.f32.mrf.mxu0
  %v4470 = vpop.f32.mrf.mxu0
  %v4471 = vadd.f32 %v4226, %v4470
  %v4472 = vpop.f32.mrf.mxu0
  %4473 = vmatprep.mubr.bf16.mxu0 0
  %4474 = vmatmul.mubr.bf16.gmra.mxu0 %v4281
  %v4475 = vpop.f32.mrf.mxu0
  %v4476 = vadd.f32 %v4226, %v4475
  %v4477 = vpop.f32.mrf.mxu0
  %v4478 = vpop.f32.mrf.mxu0
  %v4479 = vadd.f32 %v4226, %v4478
  %v4480 = vpop.f32.mrf.mxu0
  %4481 = vmatprep.mubr.bf16.mxu0 0
  %4482 = vmatmul.mubr.bf16.gmra.mxu0 %v4284
  %v4483 = vpop.f32.mrf.mxu0
  %v4484 = vadd.f32 %v4226, %v4483
  %v4485 = vpop.f32.mrf.mxu0
  %v4486 = vpop.f32.mrf.mxu0
  %v4487 = vadd.f32 %v4226, %v4486
  %v4488 = vpop.f32.mrf.mxu0
  %4489 = vmatprep.mubr.bf16.mxu0 0
  %4490 = vmatmul.mubr.bf16.gmra.mxu0 %v4287
  %v4491 = vpop.f32.mrf.mxu0
  %v4492 = vadd.f32 %v4226, %v4491
  %v4493 = vpop.f32.mrf.mxu0
  %v4494 = vpop.f32.mrf.mxu0
  %v4495 = vadd.f32 %v4226, %v4494
  %v4496 = vpop.f32.mrf.mxu0
  %4497 = vmatprep.mubr.bf16.mxu0 0
  %4498 = vmatmul.mubr.bf16.gmra.mxu0 %v4290
  %v4499 = vpop.f32.mrf.mxu0
  %v4500 = vadd.f32 %v4226, %v4499
  %v4501 = vpop.f32.mrf.mxu0
  %v4502 = vpop.f32.mrf.mxu0
  %v4503 = vadd.f32 %v4226, %v4502
  %v4504 = vpop.f32.mrf.mxu0
  %4505 = vmatprep.mubr.bf16.mxu0 0
  %4506 = vmatmul.mubr.bf16.gmra.mxu0 %v4293
  %v4507 = vpop.f32.mrf.mxu0
  %v4508 = vadd.f32 %v4226, %v4507
  %v4509 = vpop.f32.mrf.mxu0
  %v4510 = vpop.f32.mrf.mxu0
  %v4511 = vadd.f32 %v4226, %v4510
  %v4512 = vpop.f32.mrf.mxu0
  %4513 = vmatprep.mubr.bf16.mxu0 0
  %4514 = vmatmul.mubr.bf16.gmra.mxu0 %v4296
  %v4515 = vpop.f32.mrf.mxu0
  %v4516 = vadd.f32 %v4226, %v4515
  %v4517 = vpop.f32.mrf.mxu0
  %v4518 = vpop.f32.mrf.mxu0
  %v4519 = vadd.f32 %v4226, %v4518
  %v4520 = vpop.f32.mrf.mxu0
  %4521 = vmatprep.mubr.bf16.mxu0 0
  %4522 = vmatmul.mubr.bf16.gmra.mxu0 %v4299
  %v4523 = vpop.f32.mrf.mxu0
  %v4524 = vadd.f32 %v4226, %v4523
  %v4525 = vpop.f32.mrf.mxu0
  %v4526 = vpop.f32.mrf.mxu0
  %v4527 = vadd.f32 %v4226, %v4526
  %v4528 = vpop.f32.mrf.mxu0
  %4529 = vmatprep.mubr.bf16.mxu0 0
  %4530 = vmatmul.mubr.bf16.gmra.mxu0 %v4302
  %v4531 = vpop.f32.mrf.mxu0
  %v4532 = vadd.f32 %v4226, %v4531
  %v4533 = vpop.f32.mrf.mxu0
  %v4534 = vpop.f32.mrf.mxu0
  %v4535 = vadd.f32 %v4226, %v4534
  %v4536 = vpop.f32.mrf.mxu0
  %4537 = vmatprep.mubr.bf16.mxu0 0
  %4538 = vmatmul.mubr.bf16.gmra.mxu0 %v4305
  %v4539 = vpop.f32.mrf.mxu0
  %v4540 = vadd.f32 %v4226, %v4539
  %v4541 = vpop.f32.mrf.mxu0
  %v4542 = vpop.f32.mrf.mxu0
  %v4543 = vadd.f32 %v4226, %v4542
  %v4544 = vpop.f32.mrf.mxu0
  %4545 = vmatprep.mubr.bf16.mxu0 0
  %4546 = vmatmul.mubr.bf16.gmra.mxu0 %v4308
  %v4547 = vpop.f32.mrf.mxu0
  %v4548 = vadd.f32 %v4226, %v4547
  %v4549 = vpop.f32.mrf.mxu0
  %v4550 = vpop.f32.mrf.mxu0
  %v4551 = vadd.f32 %v4226, %v4550
  %v4552 = vpop.f32.mrf.mxu0
  %4553 = vmatprep.mubr.bf16.mxu0 0
  %4554 = vmatmul.mubr.bf16.gmra.mxu0 %v4311
  %v4555 = vpop.f32.mrf.mxu0
  %v4556 = vadd.f32 %v4226, %v4555
  %v4557 = vpop.f32.mrf.mxu0
  %v4558 = vpop.f32.mrf.mxu0
  %v4559 = vadd.f32 %v4226, %v4558
  %v4560 = vpop.f32.mrf.mxu0
  %4561 = vmatprep.mubr.bf16.mxu0 0
  %4562 = vmatmul.mubr.bf16.gmra.mxu0 %v4314
  %v4563 = vpop.f32.mrf.mxu0
  %v4564 = vadd.f32 %v4226, %v4563
  %v4565 = vpop.f32.mrf.mxu0
  %v4566 = vpop.f32.mrf.mxu0
  %v4567 = vadd.f32 %v4226, %v4566
  %v4568 = vpop.f32.mrf.mxu0
  %4569 = vmatprep.mubr.bf16.mxu0 0
  %4570 = vmatmul.mubr.bf16.gmra.mxu0 %v4317
  %v4571 = vpop.f32.mrf.mxu0
  %v4572 = vadd.f32 %v4226, %v4571
  %v4573 = vpop.f32.mrf.mxu0
  %v4574 = vpop.f32.mrf.mxu0
  %v4575 = vadd.f32 %v4226, %v4574
  %v4576 = vpop.f32.mrf.mxu0
  %4577 = vmatprep.mubr.bf16.mxu0 0
  %4578 = vmatmul.mubr.bf16.gmra.mxu0 %v4320
  %v4579 = vpop.f32.mrf.mxu0
  %v4580 = vadd.f32 %v4226, %v4579
  %v4581 = vpop.f32.mrf.mxu0
  %v4582 = vpop.f32.mrf.mxu0
  %v4583 = vadd.f32 %v4226, %v4582
  %v4584 = vpop.f32.mrf.mxu0
  %4585 = vmatprep.mubr.bf16.mxu0 0
  %4586 = vmatmul.mubr.bf16.gmra.mxu0 %v4323
  %v4587 = vpop.f32.mrf.mxu0
  %v4588 = vadd.f32 %v4226, %v4587
  %v4589 = vpop.f32.mrf.mxu0
  %v4590 = vpop.f32.mrf.mxu0
  %v4591 = vadd.f32 %v4226, %v4590
  %v4592 = vpop.f32.mrf.mxu0
  %4593 = vmatprep.mubr.bf16.mxu0 0
  %4594 = vmatmul.mubr.bf16.gmra.mxu0 %v4326
  %v4595 = vpop.f32.mrf.mxu0
  %v4596 = vadd.f32 %v4226, %v4595
  %v4597 = vpop.f32.mrf.mxu0
  %v4598 = vpop.f32.mrf.mxu0
  %v4599 = vadd.f32 %v4226, %v4598
  %v4600 = vpop.f32.mrf.mxu0
  %4601 = vmatprep.mubr.bf16.mxu0 0
  %4602 = vmatmul.mubr.bf16.gmra.mxu0 %v4329
  %v4603 = vpop.f32.mrf.mxu0
  %v4604 = vadd.f32 %v4226, %v4603
  %v4605 = vpop.f32.mrf.mxu0
  %v4606 = vpop.f32.mrf.mxu0
  %v4607 = vadd.f32 %v4226, %v4606
  %v4608 = vpop.f32.mrf.mxu0
  %4609 = vmatprep.mubr.bf16.mxu0 0
  %4610 = vmatmul.mubr.bf16.gmra.mxu0 %v4332
  %v4611 = vpop.f32.mrf.mxu0
  %v4612 = vadd.f32 %v4226, %v4611
  %v4613 = vpop.f32.mrf.mxu0
  %v4614 = vpop.f32.mrf.mxu0
  %v4615 = vadd.f32 %v4226, %v4614
  %v4616 = vpop.f32.mrf.mxu0
  %4617 = vmatprep.mubr.bf16.mxu0 0
  %4618 = vmatmul.mubr.bf16.gmra.mxu0 %v4335
  %v4619 = vpop.f32.mrf.mxu0
  %v4620 = vadd.f32 %v4226, %v4619
  %v4621 = vpop.f32.mrf.mxu0
  %v4622 = vpop.f32.mrf.mxu0
  %v4623 = vadd.f32 %v4226, %v4622
  %v4624 = vpop.f32.mrf.mxu0
  %4625 = vdwg.mxu0
  %4626 = vst [vmem:[%s5] sm:$0xff] %v4372
  %4627 = vst [vmem:[%s5 + $0x8] sm:$0xff] %v4375
  %4628 = vst [vmem:[%s5 + $0x10] sm:$0xff] %v4380
  %4629 = vst [vmem:[%s5 + $0x18] sm:$0xff] %v4383
  %4630 = vst [vmem:[%s5 + $0x20] sm:$0xff] %v4388
  %4631 = vst [vmem:[%s5 + $0x28] sm:$0xff] %v4391
  %4632 = vst [vmem:[%s5 + $0x30] sm:$0xff] %v4396
  %4633 = vst [vmem:[%s5 + $0x38] sm:$0xff] %v4399
  %4634 = vst [vmem:[%s5 + $0x40] sm:$0xff] %v4404
  %4635 = vst [vmem:[%s5 + $0x48] sm:$0xff] %v4407
  %4636 = vst [vmem:[%s5 + $0x50] sm:$0xff] %v4412
  %4637 = vst [vmem:[%s5 + $0x58] sm:$0xff] %v4415
  %4638 = vst [vmem:[%s5 + $0x60] sm:$0xff] %v4420
  %4639 = vst [vmem:[%s5 + $0x68] sm:$0xff] %v4423
  %4640 = vst [vmem:[%s5 + $0x70] sm:$0xff] %v4428
  %4641 = vst [vmem:[%s5 + $0x78] sm:$0xff] %v4431
  %4642 = vst [vmem:[%s5 + $0x80] sm:$0xff] %v4436
  %4643 = vst [vmem:[%s5 + $0x88] sm:$0xff] %v4439
  %4644 = vst [vmem:[%s5 + $0x90] sm:$0xff] %v4444
  %4645 = vst [vmem:[%s5 + $0x98] sm:$0xff] %v4447
  %4646 = vst [vmem:[%s5 + $0xa0] sm:$0xff] %v4452
  %4647 = vst [vmem:[%s5 + $0xa8] sm:$0xff] %v4455
  %4648 = vst [vmem:[%s5 + $0xb0] sm:$0xff] %v4460
  %4649 = vst [vmem:[%s5 + $0xb8] sm:$0xff] %v4463
  %4650 = vst [vmem:[%s5 + $0xc0] sm:$0xff] %v4468
  %4651 = vst [vmem:[%s5 + $0xc8] sm:$0xff] %v4471
  %4652 = vst [vmem:[%s5 + $0xd0] sm:$0xff] %v4476
  %4653 = vst [vmem:[%s5 + $0xd8] sm:$0xff] %v4479
  %4654 = vst [vmem:[%s5 + $0xe0] sm:$0xff] %v4484
  %4655 = vst [vmem:[%s5 + $0xe8] sm:$0xff] %v4487
  %4656 = vst [vmem:[%s5 + $0xf0] sm:$0xff] %v4492
  %4657 = vst [vmem:[%s5 + $0xf8] sm:$0xff] %v4495
  %4658 = vst [vmem:[%s5 + $0x100] sm:$0xff] %v4500
  %4659 = vst [vmem:[%s5 + $0x108] sm:$0xff] %v4503
  %4660 = vst [vmem:[%s5 + $0x110] sm:$0xff] %v4508
  %4661 = vst [vmem:[%s5 + $0x118] sm:$0xff] %v4511
  %4662 = vst [vmem:[%s5 + $0x120] sm:$0xff] %v4516
  %4663 = vst [vmem:[%s5 + $0x128] sm:$0xff] %v4519
  %4664 = vst [vmem:[%s5 + $0x130] sm:$0xff] %v4524
  %4665 = vst [vmem:[%s5 + $0x138] sm:$0xff] %v4527
  %4666 = vst [vmem:[%s5 + $0x140] sm:$0xff] %v4532
  %4667 = vst [vmem:[%s5 + $0x148] sm:$0xff] %v4535
  %4668 = vst [vmem:[%s5 + $0x150] sm:$0xff] %v4540
  %4669 = vst [vmem:[%s5 + $0x158] sm:$0xff] %v4543
  %4670 = vst [vmem:[%s5 + $0x160] sm:$0xff] %v4548
  %4671 = vst [vmem:[%s5 + $0x168] sm:$0xff] %v4551
  %4672 = vst [vmem:[%s5 + $0x170] sm:$0xff] %v4556
  %4673 = vst [vmem:[%s5 + $0x178] sm:$0xff] %v4559
  %4674 = vst [vmem:[%s5 + $0x180] sm:$0xff] %v4564
  %4675 = vst [vmem:[%s5 + $0x188] sm:$0xff] %v4567
  %4676 = vst [vmem:[%s5 + $0x190] sm:$0xff] %v4572
  %4677 = vst [vmem:[%s5 + $0x198] sm:$0xff] %v4575
  %4678 = vst [vmem:[%s5 + $0x1a0] sm:$0xff] %v4580
  %4679 = vst [vmem:[%s5 + $0x1a8] sm:$0xff] %v4583
  %4680 = vst [vmem:[%s5 + $0x1b0] sm:$0xff] %v4588
  %4681 = vst [vmem:[%s5 + $0x1b8] sm:$0xff] %v4591
  %4682 = vst [vmem:[%s5 + $0x1c0] sm:$0xff] %v4596
  %4683 = vst [vmem:[%s5 + $0x1c8] sm:$0xff] %v4599
  %4684 = vst [vmem:[%s5 + $0x1d0] sm:$0xff] %v4604
  %4685 = vst [vmem:[%s5 + $0x1d8] sm:$0xff] %v4607
  %4686 = vst [vmem:[%s5 + $0x1e0] sm:$0xff] %v4612
  %4687 = vst [vmem:[%s5 + $0x1e8] sm:$0xff] %v4615
  %4688 = vst [vmem:[%s5 + $0x1f0] sm:$0xff] %v4620
  %4689 = vst [vmem:[%s5 + $0x1f8] sm:$0xff] %v4623
  // Predicated region
  $region22: #{shell_forward.1} parent=0 // pred_check
    _
  $region23: #{shell_forward.1} parent=0 // pred_check_branch
    %4691 = sbr.rel (0) target = $region25
  $region24: #{shell_forward.1} parent=0 // pred_region
    _
  $region25: #{shell_forward.1} parent=0 // pred_fallthru
    _
  // Predicated region
  $region26: #{shell_forward.1} parent=0 // pred_check
    _
  $region27: #{shell_forward.1} parent=0 // pred_check_branch
    %4693 = sbr.rel (0) target = $region29
  $region28: #{shell_forward.1} parent=0 // pred_region
    _
  $region29: #{shell_forward.1} parent=0 // pred_fallthru
    _

</llo_original>
